<compile_context>
chip_gen: v7x
topology: tpu7x:2x2x1
jax: 0.10.0
libtpu: 0.0.40
codegen_flags: <defaults>
</compile_context>

<pallas_src>
import jax
import jax.numpy as jnp
from jax import lax
from jax.experimental import pallas as pl
from jax.experimental.pallas import tpu as pltpu

LENS = 4.0  # multispike clamp bound / norm (T in the reference code)


def _spike(x):
    # multispike forward: floor(clamp(x, 0, 4) + 0.5) / 4
    return jnp.floor(jnp.clip(x, 0.0, LENS) + 0.5) / LENS


# --------------------------------------------------------------------------- #
# Pallas kernel
# --------------------------------------------------------------------------- #
def _attn_kernel(x_ref, wqkv_ref, bqkv_ref, wp_ref, bp_ref, mask_ref, o_ref):
    tb, C, N = x_ref.shape

    # Resident (constant index_map) operands: loaded once, reused every slab.
    wqkv = wqkv_ref[...]          # (3C, C) bf16  (stacked q/k/v folded convs)
    bqkv = bqkv_ref[...]          # (3C, 1) f32
    wp = wp_ref[...]              # (C, C)  bf16  (folded proj conv)
    bp = bp_ref[...]              # (C, 1)  f32
    mask = mask_ref[...]          # (C, C)  f32: 0.125 on head-diagonal blocks

    # Small static unroll over the (t,b) slabs of this grid step; every iteration
    # ends in a store to o_ref[t], so live values stay bounded per slab.
    for t in range(tb):
        # head_lif; spike values are exact multiples of 1/4 -> bf16 is lossless.
        h = _spike(x_ref[t]).astype(jnp.bfloat16)                        # (C, N)

        # One stacked qkv 1x1-conv matmul (bf16 operands, f32 accumulation).
        s = _spike(jnp.dot(wqkv, h, preferred_element_type=jnp.float32) + bqkv)
        q = s[:C].astype(jnp.bfloat16)        # sublane-aligned row slices (free)
        k = s[C:2 * C].astype(jnp.bfloat16)
        v = s[2 * C:].astype(jnp.bfloat16)

        # All heads at once: vk[e,d] = sum_n v[e,n] * k[d,n]  (contraction on the
        # last dim of k -> MXU-native "trans_b"), then mask to head-diagonal
        # blocks with the 0.125 scale folded in.  Exact in f32 accumulation.
        vk = lax.dot_general(v, k, (((1,), (1,)), ((), ())),
                             preferred_element_type=jnp.float32) * mask

        # Exact bf16 hi/lo split of vk (multiples of 1/128, <= 11 mantissa bits):
        # two bf16 MXU passes with f32 accumulation reproduce the f32 dot exactly.
        vk_hi = vk.astype(jnp.bfloat16)
        vk_lo = (vk - vk_hi.astype(jnp.float32)).astype(jnp.bfloat16)
        a = (jnp.dot(vk_hi, q, preferred_element_type=jnp.float32)
             + jnp.dot(vk_lo, q, preferred_element_type=jnp.float32))

        a = _spike(a).astype(jnp.bfloat16)                               # attn_lif

        # Folded proj conv; store this slab's result directly (no concat/scratch).
        o_ref[t] = jnp.dot(wp, a, preferred_element_type=jnp.float32) + bp


# --------------------------------------------------------------------------- #
# Wrapper
# --------------------------------------------------------------------------- #
def _tensorcores_per_chip():
    """2 for megacore/dual-TC chips (v7x, v4, v5p), else 1.  Safe fallback: 1."""
    try:
        kind = jax.devices()[0].device_kind.lower()
    except Exception:
        return 1
    if any(tag in kind for tag in ("v7", "7x", "v4", "v5p")):
        return 2
    return 1


def _pick_tb_tile(TB, C, N, cores):
    """Largest divisor of TB that fits a conservative VMEM budget and, on
    multi-TensorCore chips, leaves a grid step count divisible by `cores`."""
    # Double-buffered f32 in+out blocks must stay well under the default scoped
    # VMEM limit (32 MiB on v6e/v7x); resident weights/mask are ~0.1 MiB.
    budget = 16 * 1024 * 1024
    cap = max(1, budget // (4 * C * N * 4))   # 2 bufs x (in + out) per slab
    cap = min(cap, 8, TB)                     # keep the unrolled slab loop short
    best = 1
    for tile in range(1, cap + 1):
        if TB % tile:
            continue
        steps = TB // tile
        if cores > 1 and steps % cores:
            continue
        best = tile
    return best


def ms_attention_pallas(x, params, num_heads=8, tb_tile=None):
    T_, B, C, N = x.shape
    TB = T_ * B
    H = num_heads
    dh = C // H
    wq, bq, wk, bk, wv, bv, wp, bp = params

    cores = _tensorcores_per_chip()
    if tb_tile is None:
        tb_tile = _pick_tb_tile(TB, C, N, cores)
    assert TB % tb_tile == 0, (TB, tb_tile)

    # Stacked q/k/v folded-conv weights -> one (3C, C) bf16 matmul; packed biases.
    wqkv = jnp.concatenate([wq, wk, wv], axis=0).astype(jnp.bfloat16)   # (3C, C)
    bqkv = jnp.concatenate([bq, bk, bv], axis=0).astype(jnp.float32)    # (3C, 1)
    wpj = wp.astype(jnp.bfloat16)
    bpj = bp.astype(jnp.float32)

    # Block-diagonal head mask with the 0.125 scale folded in (resident input).
    mask = jnp.kron(jnp.eye(H, dtype=jnp.float32),
                    jnp.ones((dh, dh), jnp.float32)) * jnp.float32(0.125)

    # Natural layout: (T*B, C, N) is a free reshape (no HBM transpose round trip).
    x3 = x.astype(jnp.float32).reshape(TB, C, N)

    slab_spec = pl.BlockSpec((tb_tile, C, N), lambda i: (i, 0, 0))
    const2 = lambda i: (0, 0)

    out = pl.pallas_call(
        _attn_kernel,
        out_shape=jax.ShapeDtypeStruct((TB, C, N), jnp.float32),
        grid_spec=pltpu.PrefetchScalarGridSpec(
            num_scalar_prefetch=0,
            grid=(TB // tb_tile,),
            in_specs=[slab_spec,
                      pl.BlockSpec((3 * C, C), const2),   # stacked qkv weight
                      pl.BlockSpec((3 * C, 1), const2),   # stacked qkv bias
                      pl.BlockSpec((C, C), const2),       # proj weight
                      pl.BlockSpec((C, 1), const2),       # proj bias
                      pl.BlockSpec((C, C), const2)],      # head mask * scale
            out_specs=slab_spec,
        ),
        compiler_params=pltpu.CompilerParams(
            dimension_semantics=("parallel",)),
    )(x3, wqkv, bqkv, wpj, bpj, mask)

    return out.reshape(T_, B, C, N)


# --------------------------------------------------------------------------- #
# Deterministic parameter construction (fold 1x1 convs + eval-mode BNs)
# --------------------------------------------------------------------------- #
def _bn_fold(key, c):
    kg, kb, km, kvar = jax.random.split(key, 4)
    gamma = 1.0 + 0.1 * jax.random.normal(kg, (c,), jnp.float32)
    beta = 0.2 * jax.random.normal(kb, (c,), jnp.float32)
    mean = 0.1 * jax.random.normal(km, (c,), jnp.float32)
    var = 1.0 + 0.1 * jnp.abs(jax.random.normal(kvar, (c,), jnp.float32))
    s = gamma / jnp.sqrt(var + 1e-5)
    return s, beta - s * mean           # y = s * x + shift


def make_branch_params(key, c_in, c_out):
    """Fold Sequential(RepConv(c_in, c_out), BatchNorm1d(c_out)) into (W, b)."""
    mid = int(c_in * 1.5)
    k1, k2, k3, k4, k5 = jax.random.split(key, 5)
    w1 = 0.25 * jax.random.normal(k1, (mid, c_in), jnp.float32)   # conv1 (1x1)
    w2 = 0.25 * jax.random.normal(k2, (c_out, mid), jnp.float32)  # conv2 (1x1)
    s1, t1 = _bn_fold(k3, mid)
    s2, t2 = _bn_fold(k4, c_out)
    s3, t3 = _bn_fold(k5, c_out)
    W = s1[:, None] * w1
    b = t1
    W = (s2[:, None] * w2) @ W
    b = (s2[:, None] * w2) @ b + t2
    W = s3[:, None] * W
    b = s3 * b + t3
    return W, b[:, None]                # (c_out, c_in), (c_out, 1)


# --------------------------------------------------------------------------- #
# Pure-JAX reference mirroring the PyTorch forward (same bf16-quantized weights)
# --------------------------------------------------------------------------- #
def ms_attention_ref(x, params, num_heads=8):
    T_, B, C, N = x.shape
    wq, bq, wk, bk, wv, bv, wp, bp = params
    # Use the same bf16-quantized weight values the kernel consumes.
    wq, wk, wv, wp = (w.astype(jnp.bfloat16).astype(jnp.float32)
                      for w in (wq, wk, wv, wp))
    dh = C // num_heads
    h = _spike(x)                                           # head_lif
    hf = h.reshape(T_ * B, C, N)

    def conv(w, b, z):
        return jnp.einsum('oc,tcn->ton', w, z,
                          precision=lax.Precision.HIGHEST) + b[None]

    q = _spike(conv(wq, bq, hf)).reshape(T_, B, C, N)
    k = _spike(conv(wk, bk, hf)).reshape(T_, B, C, N)
    v = _spike(conv(wv, bv, hf)).reshape(T_, B, C, N)

    def to_heads(z):
        return (z.transpose(0, 1, 3, 2)
                 .reshape(T_, B, N, num_heads, dh)
                 .transpose(0, 1, 3, 2, 4))                 # (T,B,H,N,dh)

    qh, kh, vh = to_heads(q), to_heads(k), to_heads(v)
    kv = jnp.einsum('tbhnd,tbhne->tbhde', kh, vh,
                    precision=lax.Precision.HIGHEST)        # k^T @ v
    a = jnp.einsum('tbhnd,tbhde->tbhne', qh, kv,
                   precision=lax.Precision.HIGHEST) * 0.125 # q @ (k^T v) * scale
    a = a.transpose(0, 1, 2, 4, 3).reshape(T_, B, C, N)
    a = _spike(a)                                           # attn_lif
    out = conv(wp, bp, a.reshape(T_ * B, C, N)).reshape(T_, B, C, N)
    return out


# --------------------------------------------------------------------------- #
if __name__ == "__main__":
    T_, B, C, N, H = 2, 2, 64, 128, 8    # dim=64, num_heads=8, sr_ratio=1
    key = jax.random.PRNGKey(0)
    kx, kq, kk, kv_, kp = jax.random.split(key, 5)

    x = jax.random.normal(kx, (T_, B, C, N), jnp.float32) * 1.5 + 0.5
    wq, bq = make_branch_params(kq, C, C)
    wk, bk = make_branch_params(kk, C, C)
    wv, bv = make_branch_params(kv_, C, C)   # sr_ratio=1 -> dim*sr_ratio == dim
    wp, bp = make_branch_params(kp, C, C)    # proj: sr_ratio*dim -> dim
    params = (wq, bq, wk, bk, wv, bv, wp, bp)

    out = jax.block_until_ready(ms_attention_pallas(x, params, num_heads=H))
    ref = jax.block_until_ready(ms_attention_ref(x, params, num_heads=H))

    assert out.shape == (T_, B, C, N)
    diff = jnp.abs(out - ref)
    max_diff = float(jnp.max(diff))
    ref_scale = max(float(jnp.max(jnp.abs(ref))), 1.0)
    # Accumulation-order differences (~1e-6) can flip a rare floor() boundary in
    # a spike nonlinearity; allow either a tight max error or a tiny fraction of
    # flipped elements.  A semantic bug blows far past both.
    mismatch_frac = float(jnp.mean(diff > 1e-3 * ref_scale))
    ok = (max_diff <= 1e-3 + 0.02 * ref_scale) or (mismatch_frac < 0.02)
    assert ok, (max_diff, mismatch_frac, ref_scale)
    print("KERNEL_OK")
</pallas_src>

<mosaic_0001>
module attributes {stable_mosaic.version = 11 : i64} {
  func.func @_attn_kernel(%arg0: i32, %arg1: memref<4x64x128xf32, #tpu.memory_space<vmem>>, %arg2: memref<192x64xbf16, #tpu.memory_space<vmem>>, %arg3: memref<192x1xf32, #tpu.memory_space<vmem>>, %arg4: memref<64x64xbf16, #tpu.memory_space<vmem>>, %arg5: memref<64x1xf32, #tpu.memory_space<vmem>>, %arg6: memref<64x64xf32, #tpu.memory_space<vmem>>, %arg7: memref<4x64x128xf32, #tpu.memory_space<vmem>>) attributes {dimension_semantics = [#tpu.dimension_semantics<parallel>], iteration_bounds = array<i64: 1>, scalar_prefetch = 0 : i64, scratch_operands = 0 : i64, tpu.core_type = #tpu.core_type<tc>, window_params = [{transform_indices = @transform_0, window_bounds = array<i64: 4, 64, 128>}, {pipeline_mode = #tpu.pipeline_mode<synchronous>, transform_indices = @transform_1, window_bounds = array<i64: 192, 64>}, {pipeline_mode = #tpu.pipeline_mode<synchronous>, transform_indices = @transform_2, window_bounds = array<i64: 192, 1>}, {pipeline_mode = #tpu.pipeline_mode<synchronous>, transform_indices = @transform_3, window_bounds = array<i64: 64, 64>}, {pipeline_mode = #tpu.pipeline_mode<synchronous>, transform_indices = @transform_4, window_bounds = array<i64: 64, 1>}, {pipeline_mode = #tpu.pipeline_mode<synchronous>, transform_indices = @transform_5, window_bounds = array<i64: 64, 64>}, {transform_indices = @transform_6, window_bounds = array<i64: 4, 64, 128>}]} {
    %c0 = arith.constant 0 : index
    %c0_0 = arith.constant 0 : index
    %0 = vector.load %arg2[%c0, %c0_0] : memref<192x64xbf16, #tpu.memory_space<vmem>>, vector<192x64xbf16>
    %c0_1 = arith.constant 0 : index
    %c0_2 = arith.constant 0 : index
    %1 = vector.load %arg3[%c0_1, %c0_2] : memref<192x1xf32, #tpu.memory_space<vmem>>, vector<192x1xf32>
    %c0_3 = arith.constant 0 : index
    %c0_4 = arith.constant 0 : index
    %2 = vector.load %arg4[%c0_3, %c0_4] : memref<64x64xbf16, #tpu.memory_space<vmem>>, vector<64x64xbf16>
    %c0_5 = arith.constant 0 : index
    %c0_6 = arith.constant 0 : index
    %3 = vector.load %arg5[%c0_5, %c0_6] : memref<64x1xf32, #tpu.memory_space<vmem>>, vector<64x1xf32>
    %c0_7 = arith.constant 0 : index
    %c0_8 = arith.constant 0 : index
    %4 = vector.load %arg6[%c0_7, %c0_8] : memref<64x64xf32, #tpu.memory_space<vmem>>, vector<64x64xf32>
    %c0_9 = arith.constant 0 : index
    %c0_10 = arith.constant 0 : index
    %c0_11 = arith.constant 0 : index
    %5 = vector.load %arg1[%c0_9, %c0_10, %c0_11] : memref<4x64x128xf32, #tpu.memory_space<vmem>>, vector<1x64x128xf32>
    %6 = vector.shape_cast %5 : vector<1x64x128xf32> to vector<64x128xf32>
    %cst = arith.constant 0.000000e+00 : f32
    %cst_12 = arith.constant 4.000000e+00 : f32
    %7 = vector.broadcast %cst : f32 to vector<64x128xf32>
    %8 = arith.maximumf %7, %6 : vector<64x128xf32>
    %9 = vector.broadcast %cst_12 : f32 to vector<64x128xf32>
    %10 = arith.minimumf %9, %8 : vector<64x128xf32>
    %cst_13 = arith.constant 5.000000e-01 : f32
    %11 = vector.broadcast %cst_13 : f32 to vector<64x128xf32>
    %12 = arith.addf %10, %11 : vector<64x128xf32>
    %13 = math.floor %12 : vector<64x128xf32>
    %cst_14 = arith.constant 4.000000e+00 : f32
    %14 = vector.broadcast %cst_14 : f32 to vector<64x128xf32>
    %15 = arith.divf %13, %14 : vector<64x128xf32>
    %16 = arith.truncf %15 : vector<64x128xf32> to vector<64x128xbf16>
    %cst_15 = arith.constant dense<0.000000e+00> : vector<192x128xf32>
    %17 = tpu.matmul %0, %16, %cst_15 {dimension_numbers = #tpu.dot_dimension_numbers<[1], [0], [0], [1], [0, 0, 1, 1], [], []>} : vector<192x64xbf16>, vector<64x128xbf16>, vector<192x128xf32> -> vector<192x128xf32>
    %18 = vector.broadcast %1 : vector<192x1xf32> to vector<192x128xf32>
    %19 = arith.addf %17, %18 : vector<192x128xf32>
    %cst_16 = arith.constant 0.000000e+00 : f32
    %cst_17 = arith.constant 4.000000e+00 : f32
    %20 = vector.broadcast %cst_16 : f32 to vector<192x128xf32>
    %21 = arith.maximumf %20, %19 : vector<192x128xf32>
    %22 = vector.broadcast %cst_17 : f32 to vector<192x128xf32>
    %23 = arith.minimumf %22, %21 : vector<192x128xf32>
    %cst_18 = arith.constant 5.000000e-01 : f32
    %24 = vector.broadcast %cst_18 : f32 to vector<192x128xf32>
    %25 = arith.addf %23, %24 : vector<192x128xf32>
    %26 = math.floor %25 : vector<192x128xf32>
    %cst_19 = arith.constant 4.000000e+00 : f32
    %27 = vector.broadcast %cst_19 : f32 to vector<192x128xf32>
    %28 = arith.divf %26, %27 : vector<192x128xf32>
    %29 = vector.extract_strided_slice %28 {offsets = [0, 0], sizes = [64, 128], strides = [1, 1]} : vector<192x128xf32> to vector<64x128xf32>
    %30 = arith.truncf %29 : vector<64x128xf32> to vector<64x128xbf16>
    %31 = vector.extract_strided_slice %28 {offsets = [64, 0], sizes = [64, 128], strides = [1, 1]} : vector<192x128xf32> to vector<64x128xf32>
    %32 = arith.truncf %31 : vector<64x128xf32> to vector<64x128xbf16>
    %33 = vector.extract_strided_slice %28 {offsets = [128, 0], sizes = [64, 128], strides = [1, 1]} : vector<192x128xf32> to vector<64x128xf32>
    %34 = arith.truncf %33 : vector<64x128xf32> to vector<64x128xbf16>
    %cst_20 = arith.constant dense<0.000000e+00> : vector<64x64xf32>
    %35 = tpu.matmul %34, %32, %cst_20 {dimension_numbers = #tpu.dot_dimension_numbers<[1], [1], [0], [0], [0, 0, 1, 0], [], []>} : vector<64x128xbf16>, vector<64x128xbf16>, vector<64x64xf32> -> vector<64x64xf32>
    %36 = arith.mulf %35, %4 : vector<64x64xf32>
    %37 = arith.truncf %36 : vector<64x64xf32> to vector<64x64xbf16>
    %38 = arith.extf %37 : vector<64x64xbf16> to vector<64x64xf32>
    %39 = arith.subf %36, %38 : vector<64x64xf32>
    %40 = arith.truncf %39 : vector<64x64xf32> to vector<64x64xbf16>
    %cst_21 = arith.constant dense<0.000000e+00> : vector<64x128xf32>
    %41 = tpu.matmul %37, %30, %cst_21 {dimension_numbers = #tpu.dot_dimension_numbers<[1], [0], [0], [1], [0, 0, 1, 1], [], []>} : vector<64x64xbf16>, vector<64x128xbf16>, vector<64x128xf32> -> vector<64x128xf32>
    %cst_22 = arith.constant dense<0.000000e+00> : vector<64x128xf32>
    %42 = tpu.matmul %40, %30, %cst_22 {dimension_numbers = #tpu.dot_dimension_numbers<[1], [0], [0], [1], [0, 0, 1, 1], [], []>} : vector<64x64xbf16>, vector<64x128xbf16>, vector<64x128xf32> -> vector<64x128xf32>
    %43 = arith.addf %41, %42 : vector<64x128xf32>
    %cst_23 = arith.constant 0.000000e+00 : f32
    %cst_24 = arith.constant 4.000000e+00 : f32
    %44 = vector.broadcast %cst_23 : f32 to vector<64x128xf32>
    %45 = arith.maximumf %44, %43 : vector<64x128xf32>
    %46 = vector.broadcast %cst_24 : f32 to vector<64x128xf32>
    %47 = arith.minimumf %46, %45 : vector<64x128xf32>
    %cst_25 = arith.constant 5.000000e-01 : f32
    %48 = vector.broadcast %cst_25 : f32 to vector<64x128xf32>
    %49 = arith.addf %47, %48 : vector<64x128xf32>
    %50 = math.floor %49 : vector<64x128xf32>
    %cst_26 = arith.constant 4.000000e+00 : f32
    %51 = vector.broadcast %cst_26 : f32 to vector<64x128xf32>
    %52 = arith.divf %50, %51 : vector<64x128xf32>
    %53 = arith.truncf %52 : vector<64x128xf32> to vector<64x128xbf16>
    %cst_27 = arith.constant dense<0.000000e+00> : vector<64x128xf32>
    %54 = tpu.matmul %2, %53, %cst_27 {dimension_numbers = #tpu.dot_dimension_numbers<[1], [0], [0], [1], [0, 0, 1, 1], [], []>} : vector<64x64xbf16>, vector<64x128xbf16>, vector<64x128xf32> -> vector<64x128xf32>
    %55 = vector.broadcast %3 : vector<64x1xf32> to vector<64x128xf32>
    %56 = arith.addf %54, %55 : vector<64x128xf32>
    %c0_28 = arith.constant 0 : index
    %c0_29 = arith.constant 0 : index
    %c0_30 = arith.constant 0 : index
    %57 = vector.load %arg7[%c0_28, %c0_29, %c0_30] : memref<4x64x128xf32, #tpu.memory_space<vmem>>, vector<1x64x128xf32>
    %58 = vector.shape_cast %57 : vector<1x64x128xf32> to vector<64x128xf32>
    %59 = vector.shape_cast %56 : vector<64x128xf32> to vector<1x64x128xf32>
    tpu.vector_store %arg7[%c0_28, %c0_29, %c0_30], %59 {strides = array<i32>} : memref<4x64x128xf32, #tpu.memory_space<vmem>>, vector<1x64x128xf32>,
    %c1 = arith.constant 1 : index
    %c0_31 = arith.constant 0 : index
    %c0_32 = arith.constant 0 : index
    %60 = vector.load %arg1[%c1, %c0_31, %c0_32] : memref<4x64x128xf32, #tpu.memory_space<vmem>>, vector<1x64x128xf32>
    %61 = vector.shape_cast %60 : vector<1x64x128xf32> to vector<64x128xf32>
    %cst_33 = arith.constant 0.000000e+00 : f32
    %cst_34 = arith.constant 4.000000e+00 : f32
    %62 = vector.broadcast %cst_33 : f32 to vector<64x128xf32>
    %63 = arith.maximumf %62, %61 : vector<64x128xf32>
    %64 = vector.broadcast %cst_34 : f32 to vector<64x128xf32>
    %65 = arith.minimumf %64, %63 : vector<64x128xf32>
    %cst_35 = arith.constant 5.000000e-01 : f32
    %66 = vector.broadcast %cst_35 : f32 to vector<64x128xf32>
    %67 = arith.addf %65, %66 : vector<64x128xf32>
    %68 = math.floor %67 : vector<64x128xf32>
    %cst_36 = arith.constant 4.000000e+00 : f32
    %69 = vector.broadcast %cst_36 : f32 to vector<64x128xf32>
    %70 = arith.divf %68, %69 : vector<64x128xf32>
    %71 = arith.truncf %70 : vector<64x128xf32> to vector<64x128xbf16>
    %cst_37 = arith.constant dense<0.000000e+00> : vector<192x128xf32>
    %72 = tpu.matmul %0, %71, %cst_37 {dimension_numbers = #tpu.dot_dimension_numbers<[1], [0], [0], [1], [0, 0, 1, 1], [], []>} : vector<192x64xbf16>, vector<64x128xbf16>, vector<192x128xf32> -> vector<192x128xf32>
    %73 = vector.broadcast %1 : vector<192x1xf32> to vector<192x128xf32>
    %74 = arith.addf %72, %73 : vector<192x128xf32>
    %cst_38 = arith.constant 0.000000e+00 : f32
    %cst_39 = arith.constant 4.000000e+00 : f32
    %75 = vector.broadcast %cst_38 : f32 to vector<192x128xf32>
    %76 = arith.maximumf %75, %74 : vector<192x128xf32>
    %77 = vector.broadcast %cst_39 : f32 to vector<192x128xf32>
    %78 = arith.minimumf %77, %76 : vector<192x128xf32>
    %cst_40 = arith.constant 5.000000e-01 : f32
    %79 = vector.broadcast %cst_40 : f32 to vector<192x128xf32>
    %80 = arith.addf %78, %79 : vector<192x128xf32>
    %81 = math.floor %80 : vector<192x128xf32>
    %cst_41 = arith.constant 4.000000e+00 : f32
    %82 = vector.broadcast %cst_41 : f32 to vector<192x128xf32>
    %83 = arith.divf %81, %82 : vector<192x128xf32>
    %84 = vector.extract_strided_slice %83 {offsets = [0, 0], sizes = [64, 128], strides = [1, 1]} : vector<192x128xf32> to vector<64x128xf32>
    %85 = arith.truncf %84 : vector<64x128xf32> to vector<64x128xbf16>
    %86 = vector.extract_strided_slice %83 {offsets = [64, 0], sizes = [64, 128], strides = [1, 1]} : vector<192x128xf32> to vector<64x128xf32>
    %87 = arith.truncf %86 : vector<64x128xf32> to vector<64x128xbf16>
    %88 = vector.extract_strided_slice %83 {offsets = [128, 0], sizes = [64, 128], strides = [1, 1]} : vector<192x128xf32> to vector<64x128xf32>
    %89 = arith.truncf %88 : vector<64x128xf32> to vector<64x128xbf16>
    %cst_42 = arith.constant dense<0.000000e+00> : vector<64x64xf32>
    %90 = tpu.matmul %89, %87, %cst_42 {dimension_numbers = #tpu.dot_dimension_numbers<[1], [1], [0], [0], [0, 0, 1, 0], [], []>} : vector<64x128xbf16>, vector<64x128xbf16>, vector<64x64xf32> -> vector<64x64xf32>
    %91 = arith.mulf %90, %4 : vector<64x64xf32>
    %92 = arith.truncf %91 : vector<64x64xf32> to vector<64x64xbf16>
    %93 = arith.extf %92 : vector<64x64xbf16> to vector<64x64xf32>
    %94 = arith.subf %91, %93 : vector<64x64xf32>
    %95 = arith.truncf %94 : vector<64x64xf32> to vector<64x64xbf16>
    %cst_43 = arith.constant dense<0.000000e+00> : vector<64x128xf32>
    %96 = tpu.matmul %92, %85, %cst_43 {dimension_numbers = #tpu.dot_dimension_numbers<[1], [0], [0], [1], [0, 0, 1, 1], [], []>} : vector<64x64xbf16>, vector<64x128xbf16>, vector<64x128xf32> -> vector<64x128xf32>
    %cst_44 = arith.constant dense<0.000000e+00> : vector<64x128xf32>
    %97 = tpu.matmul %95, %85, %cst_44 {dimension_numbers = #tpu.dot_dimension_numbers<[1], [0], [0], [1], [0, 0, 1, 1], [], []>} : vector<64x64xbf16>, vector<64x128xbf16>, vector<64x128xf32> -> vector<64x128xf32>
    %98 = arith.addf %96, %97 : vector<64x128xf32>
    %cst_45 = arith.constant 0.000000e+00 : f32
    %cst_46 = arith.constant 4.000000e+00 : f32
    %99 = vector.broadcast %cst_45 : f32 to vector<64x128xf32>
    %100 = arith.maximumf %99, %98 : vector<64x128xf32>
    %101 = vector.broadcast %cst_46 : f32 to vector<64x128xf32>
    %102 = arith.minimumf %101, %100 : vector<64x128xf32>
    %cst_47 = arith.constant 5.000000e-01 : f32
    %103 = vector.broadcast %cst_47 : f32 to vector<64x128xf32>
    %104 = arith.addf %102, %103 : vector<64x128xf32>
    %105 = math.floor %104 : vector<64x128xf32>
    %cst_48 = arith.constant 4.000000e+00 : f32
    %106 = vector.broadcast %cst_48 : f32 to vector<64x128xf32>
    %107 = arith.divf %105, %106 : vector<64x128xf32>
    %108 = arith.truncf %107 : vector<64x128xf32> to vector<64x128xbf16>
    %cst_49 = arith.constant dense<0.000000e+00> : vector<64x128xf32>
    %109 = tpu.matmul %2, %108, %cst_49 {dimension_numbers = #tpu.dot_dimension_numbers<[1], [0], [0], [1], [0, 0, 1, 1], [], []>} : vector<64x64xbf16>, vector<64x128xbf16>, vector<64x128xf32> -> vector<64x128xf32>
    %110 = vector.broadcast %3 : vector<64x1xf32> to vector<64x128xf32>
    %111 = arith.addf %109, %110 : vector<64x128xf32>
    %c1_50 = arith.constant 1 : index
    %c0_51 = arith.constant 0 : index
    %c0_52 = arith.constant 0 : index
    %112 = vector.load %arg7[%c1_50, %c0_51, %c0_52] : memref<4x64x128xf32, #tpu.memory_space<vmem>>, vector<1x64x128xf32>
    %113 = vector.shape_cast %112 : vector<1x64x128xf32> to vector<64x128xf32>
    %114 = vector.shape_cast %111 : vector<64x128xf32> to vector<1x64x128xf32>
    tpu.vector_store %arg7[%c1_50, %c0_51, %c0_52], %114 {strides = array<i32>} : memref<4x64x128xf32, #tpu.memory_space<vmem>>, vector<1x64x128xf32>,
    %c2 = arith.constant 2 : index
    %c0_53 = arith.constant 0 : index
    %c0_54 = arith.constant 0 : index
    %115 = vector.load %arg1[%c2, %c0_53, %c0_54] : memref<4x64x128xf32, #tpu.memory_space<vmem>>, vector<1x64x128xf32>
    %116 = vector.shape_cast %115 : vector<1x64x128xf32> to vector<64x128xf32>
    %cst_55 = arith.constant 0.000000e+00 : f32
    %cst_56 = arith.constant 4.000000e+00 : f32
    %117 = vector.broadcast %cst_55 : f32 to vector<64x128xf32>
    %118 = arith.maximumf %117, %116 : vector<64x128xf32>
    %119 = vector.broadcast %cst_56 : f32 to vector<64x128xf32>
    %120 = arith.minimumf %119, %118 : vector<64x128xf32>
    %cst_57 = arith.constant 5.000000e-01 : f32
    %121 = vector.broadcast %cst_57 : f32 to vector<64x128xf32>
    %122 = arith.addf %120, %121 : vector<64x128xf32>
    %123 = math.floor %122 : vector<64x128xf32>
    %cst_58 = arith.constant 4.000000e+00 : f32
    %124 = vector.broadcast %cst_58 : f32 to vector<64x128xf32>
    %125 = arith.divf %123, %124 : vector<64x128xf32>
    %126 = arith.truncf %125 : vector<64x128xf32> to vector<64x128xbf16>
    %cst_59 = arith.constant dense<0.000000e+00> : vector<192x128xf32>
    %127 = tpu.matmul %0, %126, %cst_59 {dimension_numbers = #tpu.dot_dimension_numbers<[1], [0], [0], [1], [0, 0, 1, 1], [], []>} : vector<192x64xbf16>, vector<64x128xbf16>, vector<192x128xf32> -> vector<192x128xf32>
    %128 = vector.broadcast %1 : vector<192x1xf32> to vector<192x128xf32>
    %129 = arith.addf %127, %128 : vector<192x128xf32>
    %cst_60 = arith.constant 0.000000e+00 : f32
    %cst_61 = arith.constant 4.000000e+00 : f32
    %130 = vector.broadcast %cst_60 : f32 to vector<192x128xf32>
    %131 = arith.maximumf %130, %129 : vector<192x128xf32>
    %132 = vector.broadcast %cst_61 : f32 to vector<192x128xf32>
    %133 = arith.minimumf %132, %131 : vector<192x128xf32>
    %cst_62 = arith.constant 5.000000e-01 : f32
    %134 = vector.broadcast %cst_62 : f32 to vector<192x128xf32>
    %135 = arith.addf %133, %134 : vector<192x128xf32>
    %136 = math.floor %135 : vector<192x128xf32>
    %cst_63 = arith.constant 4.000000e+00 : f32
    %137 = vector.broadcast %cst_63 : f32 to vector<192x128xf32>
    %138 = arith.divf %136, %137 : vector<192x128xf32>
    %139 = vector.extract_strided_slice %138 {offsets = [0, 0], sizes = [64, 128], strides = [1, 1]} : vector<192x128xf32> to vector<64x128xf32>
    %140 = arith.truncf %139 : vector<64x128xf32> to vector<64x128xbf16>
    %141 = vector.extract_strided_slice %138 {offsets = [64, 0], sizes = [64, 128], strides = [1, 1]} : vector<192x128xf32> to vector<64x128xf32>
    %142 = arith.truncf %141 : vector<64x128xf32> to vector<64x128xbf16>
    %143 = vector.extract_strided_slice %138 {offsets = [128, 0], sizes = [64, 128], strides = [1, 1]} : vector<192x128xf32> to vector<64x128xf32>
    %144 = arith.truncf %143 : vector<64x128xf32> to vector<64x128xbf16>
    %cst_64 = arith.constant dense<0.000000e+00> : vector<64x64xf32>
    %145 = tpu.matmul %144, %142, %cst_64 {dimension_numbers = #tpu.dot_dimension_numbers<[1], [1], [0], [0], [0, 0, 1, 0], [], []>} : vector<64x128xbf16>, vector<64x128xbf16>, vector<64x64xf32> -> vector<64x64xf32>
    %146 = arith.mulf %145, %4 : vector<64x64xf32>
    %147 = arith.truncf %146 : vector<64x64xf32> to vector<64x64xbf16>
    %148 = arith.extf %147 : vector<64x64xbf16> to vector<64x64xf32>
    %149 = arith.subf %146, %148 : vector<64x64xf32>
    %150 = arith.truncf %149 : vector<64x64xf32> to vector<64x64xbf16>
    %cst_65 = arith.constant dense<0.000000e+00> : vector<64x128xf32>
    %151 = tpu.matmul %147, %140, %cst_65 {dimension_numbers = #tpu.dot_dimension_numbers<[1], [0], [0], [1], [0, 0, 1, 1], [], []>} : vector<64x64xbf16>, vector<64x128xbf16>, vector<64x128xf32> -> vector<64x128xf32>
    %cst_66 = arith.constant dense<0.000000e+00> : vector<64x128xf32>
    %152 = tpu.matmul %150, %140, %cst_66 {dimension_numbers = #tpu.dot_dimension_numbers<[1], [0], [0], [1], [0, 0, 1, 1], [], []>} : vector<64x64xbf16>, vector<64x128xbf16>, vector<64x128xf32> -> vector<64x128xf32>
    %153 = arith.addf %151, %152 : vector<64x128xf32>
    %cst_67 = arith.constant 0.000000e+00 : f32
    %cst_68 = arith.constant 4.000000e+00 : f32
    %154 = vector.broadcast %cst_67 : f32 to vector<64x128xf32>
    %155 = arith.maximumf %154, %153 : vector<64x128xf32>
    %156 = vector.broadcast %cst_68 : f32 to vector<64x128xf32>
    %157 = arith.minimumf %156, %155 : vector<64x128xf32>
    %cst_69 = arith.constant 5.000000e-01 : f32
    %158 = vector.broadcast %cst_69 : f32 to vector<64x128xf32>
    %159 = arith.addf %157, %158 : vector<64x128xf32>
    %160 = math.floor %159 : vector<64x128xf32>
    %cst_70 = arith.constant 4.000000e+00 : f32
    %161 = vector.broadcast %cst_70 : f32 to vector<64x128xf32>
    %162 = arith.divf %160, %161 : vector<64x128xf32>
    %163 = arith.truncf %162 : vector<64x128xf32> to vector<64x128xbf16>
    %cst_71 = arith.constant dense<0.000000e+00> : vector<64x128xf32>
    %164 = tpu.matmul %2, %163, %cst_71 {dimension_numbers = #tpu.dot_dimension_numbers<[1], [0], [0], [1], [0, 0, 1, 1], [], []>} : vector<64x64xbf16>, vector<64x128xbf16>, vector<64x128xf32> -> vector<64x128xf32>
    %165 = vector.broadcast %3 : vector<64x1xf32> to vector<64x128xf32>
    %166 = arith.addf %164, %165 : vector<64x128xf32>
    %c2_72 = arith.constant 2 : index
    %c0_73 = arith.constant 0 : index
    %c0_74 = arith.constant 0 : index
    %167 = vector.load %arg7[%c2_72, %c0_73, %c0_74] : memref<4x64x128xf32, #tpu.memory_space<vmem>>, vector<1x64x128xf32>
    %168 = vector.shape_cast %167 : vector<1x64x128xf32> to vector<64x128xf32>
    %169 = vector.shape_cast %166 : vector<64x128xf32> to vector<1x64x128xf32>
    tpu.vector_store %arg7[%c2_72, %c0_73, %c0_74], %169 {strides = array<i32>} : memref<4x64x128xf32, #tpu.memory_space<vmem>>, vector<1x64x128xf32>,
    %c3 = arith.constant 3 : index
    %c0_75 = arith.constant 0 : index
    %c0_76 = arith.constant 0 : index
    %170 = vector.load %arg1[%c3, %c0_75, %c0_76] : memref<4x64x128xf32, #tpu.memory_space<vmem>>, vector<1x64x128xf32>
    %171 = vector.shape_cast %170 : vector<1x64x128xf32> to vector<64x128xf32>
    %cst_77 = arith.constant 0.000000e+00 : f32
    %cst_78 = arith.constant 4.000000e+00 : f32
    %172 = vector.broadcast %cst_77 : f32 to vector<64x128xf32>
    %173 = arith.maximumf %172, %171 : vector<64x128xf32>
    %174 = vector.broadcast %cst_78 : f32 to vector<64x128xf32>
    %175 = arith.minimumf %174, %173 : vector<64x128xf32>
    %cst_79 = arith.constant 5.000000e-01 : f32
    %176 = vector.broadcast %cst_79 : f32 to vector<64x128xf32>
    %177 = arith.addf %175, %176 : vector<64x128xf32>
    %178 = math.floor %177 : vector<64x128xf32>
    %cst_80 = arith.constant 4.000000e+00 : f32
    %179 = vector.broadcast %cst_80 : f32 to vector<64x128xf32>
    %180 = arith.divf %178, %179 : vector<64x128xf32>
    %181 = arith.truncf %180 : vector<64x128xf32> to vector<64x128xbf16>
    %cst_81 = arith.constant dense<0.000000e+00> : vector<192x128xf32>
    %182 = tpu.matmul %0, %181, %cst_81 {dimension_numbers = #tpu.dot_dimension_numbers<[1], [0], [0], [1], [0, 0, 1, 1], [], []>} : vector<192x64xbf16>, vector<64x128xbf16>, vector<192x128xf32> -> vector<192x128xf32>
    %183 = vector.broadcast %1 : vector<192x1xf32> to vector<192x128xf32>
    %184 = arith.addf %182, %183 : vector<192x128xf32>
    %cst_82 = arith.constant 0.000000e+00 : f32
    %cst_83 = arith.constant 4.000000e+00 : f32
    %185 = vector.broadcast %cst_82 : f32 to vector<192x128xf32>
    %186 = arith.maximumf %185, %184 : vector<192x128xf32>
    %187 = vector.broadcast %cst_83 : f32 to vector<192x128xf32>
    %188 = arith.minimumf %187, %186 : vector<192x128xf32>
    %cst_84 = arith.constant 5.000000e-01 : f32
    %189 = vector.broadcast %cst_84 : f32 to vector<192x128xf32>
    %190 = arith.addf %188, %189 : vector<192x128xf32>
    %191 = math.floor %190 : vector<192x128xf32>
    %cst_85 = arith.constant 4.000000e+00 : f32
    %192 = vector.broadcast %cst_85 : f32 to vector<192x128xf32>
    %193 = arith.divf %191, %192 : vector<192x128xf32>
    %194 = vector.extract_strided_slice %193 {offsets = [0, 0], sizes = [64, 128], strides = [1, 1]} : vector<192x128xf32> to vector<64x128xf32>
    %195 = arith.truncf %194 : vector<64x128xf32> to vector<64x128xbf16>
    %196 = vector.extract_strided_slice %193 {offsets = [64, 0], sizes = [64, 128], strides = [1, 1]} : vector<192x128xf32> to vector<64x128xf32>
    %197 = arith.truncf %196 : vector<64x128xf32> to vector<64x128xbf16>
    %198 = vector.extract_strided_slice %193 {offsets = [128, 0], sizes = [64, 128], strides = [1, 1]} : vector<192x128xf32> to vector<64x128xf32>
    %199 = arith.truncf %198 : vector<64x128xf32> to vector<64x128xbf16>
    %cst_86 = arith.constant dense<0.000000e+00> : vector<64x64xf32>
    %200 = tpu.matmul %199, %197, %cst_86 {dimension_numbers = #tpu.dot_dimension_numbers<[1], [1], [0], [0], [0, 0, 1, 0], [], []>} : vector<64x128xbf16>, vector<64x128xbf16>, vector<64x64xf32> -> vector<64x64xf32>
    %201 = arith.mulf %200, %4 : vector<64x64xf32>
    %202 = arith.truncf %201 : vector<64x64xf32> to vector<64x64xbf16>
    %203 = arith.extf %202 : vector<64x64xbf16> to vector<64x64xf32>
    %204 = arith.subf %201, %203 : vector<64x64xf32>
    %205 = arith.truncf %204 : vector<64x64xf32> to vector<64x64xbf16>
    %cst_87 = arith.constant dense<0.000000e+00> : vector<64x128xf32>
    %206 = tpu.matmul %202, %195, %cst_87 {dimension_numbers = #tpu.dot_dimension_numbers<[1], [0], [0], [1], [0, 0, 1, 1], [], []>} : vector<64x64xbf16>, vector<64x128xbf16>, vector<64x128xf32> -> vector<64x128xf32>
    %cst_88 = arith.constant dense<0.000000e+00> : vector<64x128xf32>
    %207 = tpu.matmul %205, %195, %cst_88 {dimension_numbers = #tpu.dot_dimension_numbers<[1], [0], [0], [1], [0, 0, 1, 1], [], []>} : vector<64x64xbf16>, vector<64x128xbf16>, vector<64x128xf32> -> vector<64x128xf32>
    %208 = arith.addf %206, %207 : vector<64x128xf32>
    %cst_89 = arith.constant 0.000000e+00 : f32
    %cst_90 = arith.constant 4.000000e+00 : f32
    %209 = vector.broadcast %cst_89 : f32 to vector<64x128xf32>
    %210 = arith.maximumf %209, %208 : vector<64x128xf32>
    %211 = vector.broadcast %cst_90 : f32 to vector<64x128xf32>
    %212 = arith.minimumf %211, %210 : vector<64x128xf32>
    %cst_91 = arith.constant 5.000000e-01 : f32
    %213 = vector.broadcast %cst_91 : f32 to vector<64x128xf32>
    %214 = arith.addf %212, %213 : vector<64x128xf32>
    %215 = math.floor %214 : vector<64x128xf32>
    %cst_92 = arith.constant 4.000000e+00 : f32
    %216 = vector.broadcast %cst_92 : f32 to vector<64x128xf32>
    %217 = arith.divf %215, %216 : vector<64x128xf32>
    %218 = arith.truncf %217 : vector<64x128xf32> to vector<64x128xbf16>
    %cst_93 = arith.constant dense<0.000000e+00> : vector<64x128xf32>
    %219 = tpu.matmul %2, %218, %cst_93 {dimension_numbers = #tpu.dot_dimension_numbers<[1], [0], [0], [1], [0, 0, 1, 1], [], []>} : vector<64x64xbf16>, vector<64x128xbf16>, vector<64x128xf32> -> vector<64x128xf32>
    %220 = vector.broadcast %3 : vector<64x1xf32> to vector<64x128xf32>
    %221 = arith.addf %219, %220 : vector<64x128xf32>
    %c3_94 = arith.constant 3 : index
    %c0_95 = arith.constant 0 : index
    %c0_96 = arith.constant 0 : index
    %222 = vector.load %arg7[%c3_94, %c0_95, %c0_96] : memref<4x64x128xf32, #tpu.memory_space<vmem>>, vector<1x64x128xf32>
    %223 = vector.shape_cast %222 : vector<1x64x128xf32> to vector<64x128xf32>
    %224 = vector.shape_cast %221 : vector<64x128xf32> to vector<1x64x128xf32>
    tpu.vector_store %arg7[%c3_94, %c0_95, %c0_96], %224 {strides = array<i32>} : memref<4x64x128xf32, #tpu.memory_space<vmem>>, vector<1x64x128xf32>,
    return
  }
  func.func @transform_0(%arg0: i32) -> (i32, i32, i32) {
    %c0_i32 = arith.constant 0 : i32
    %c0_i32_0 = arith.constant 0 : i32
    %c0_i32_1 = arith.constant 0 : i32
    return %arg0, %c0_i32, %c0_i32_0 : i32, i32, i32
  }
  func.func @transform_1(%arg0: i32) -> (i32, i32) {
    %c0_i32 = arith.constant 0 : i32
    %c0_i32_0 = arith.constant 0 : i32
    %c0_i32_1 = arith.constant 0 : i32
    return %c0_i32, %c0_i32_0 : i32, i32
  }
  func.func @transform_2(%arg0: i32) -> (i32, i32) {
    %c0_i32 = arith.constant 0 : i32
    %c0_i32_0 = arith.constant 0 : i32
    %c0_i32_1 = arith.constant 0 : i32
    return %c0_i32, %c0_i32_0 : i32, i32
  }
  func.func @transform_3(%arg0: i32) -> (i32, i32) {
    %c0_i32 = arith.constant 0 : i32
    %c0_i32_0 = arith.constant 0 : i32
    %c0_i32_1 = arith.constant 0 : i32
    return %c0_i32, %c0_i32_0 : i32, i32
  }
  func.func @transform_4(%arg0: i32) -> (i32, i32) {
    %c0_i32 = arith.constant 0 : i32
    %c0_i32_0 = arith.constant 0 : i32
    %c0_i32_1 = arith.constant 0 : i32
    return %c0_i32, %c0_i32_0 : i32, i32
  }
  func.func @transform_5(%arg0: i32) -> (i32, i32) {
    %c0_i32 = arith.constant 0 : i32
    %c0_i32_0 = arith.constant 0 : i32
    %c0_i32_1 = arith.constant 0 : i32
    return %c0_i32, %c0_i32_0 : i32, i32
  }
  func.func @transform_6(%arg0: i32) -> (i32, i32, i32) {
    %c0_i32 = arith.constant 0 : i32
    %c0_i32_0 = arith.constant 0 : i32
    %c0_i32_1 = arith.constant 0 : i32
    return %arg0, %c0_i32, %c0_i32_0 : i32, i32, i32
  }
}

</mosaic_0001>

<llo_original>
// kernel: tpu_custom_call.1
$region0: #{tpu_custom_call.1}
  #allocation0 [shape = 'u32[]', space=smem, size = 0x4, offset = 0x4, fixed_abs, tag = 'smem constant byte address 0x4 - core index']
  #allocation1 [shape = 'u32[144,128]{1,0:T(1,128)}', space=vmem, size = 0x12000, scoped, tag = 'internal scratch']
  %s0 = inlined_call_operand.vmem [shape: f32[4,64,128], index: 0, kind: input, shape index: {}]
  %s1 = inlined_call_operand.vmem [shape: bf16[192,64], index: 1, kind: input, shape index: {}]
  %s2 = inlined_call_operand.vmem [shape: f32[192,1], index: 2, kind: input, shape index: {}]
  %s3 = inlined_call_operand.vmem [shape: bf16[64,64], index: 3, kind: input, shape index: {}]
  %s4 = inlined_call_operand.vmem [shape: f32[64,1], index: 4, kind: input, shape index: {}]
  %s5 = inlined_call_operand.vmem [shape: f32[64,64], index: 5, kind: input, shape index: {}]
  %s6 = inlined_call_operand.hbm [shape: f32[4,64,128], index: 6, kind: output, shape index: {}]
  %s7 = sld [smem:[#allocation0]]
  $region34: #{tpu_custom_call.1} parent=0
    _
  %s9 = ssub.s32 1, %s7
  %s10 = scalar_select 0, %s9, %s7
  $region1: #{tpu_custom_call.1} parent=0
    #allocation2 [shape = 'u8[131072]{0}', space=vmem, size = 0x20000, scoped, tag = 'output window, operand 0, single buffered']
    #allocation3 [shape = 's32[1]{0}', space=sflag, size = 0x4, scoped, tag = 'scoped memory for tpu_custom_call.1']
    %11 = vsyncpa [#allocation3], 0
    // Predicated region
    $region2: #{tpu_custom_call.1} parent=1 // pred_check
      _
    $region3: #{tpu_custom_call.1} parent=1 // pred_check_branch
      %13 = sbr.rel (0) target = $region5
    $region4: #{tpu_custom_call.1} parent=1 // pred_region
      _
    $region5: #{tpu_custom_call.1} parent=1 // pred_fallthru
      _
    // Predicated region
    $region6: #{tpu_custom_call.1} parent=1 // pred_check
      _
    $region7: #{tpu_custom_call.1} parent=1 // pred_check_branch
      %15 = sbr.rel (0) target = $region9
    $region8: #{tpu_custom_call.1} parent=1 // pred_region
      _
    $region9: #{tpu_custom_call.1} parent=1 // pred_fallthru
      _
    // Predicated region
    $region10: #{tpu_custom_call.1} parent=1 // pred_check
      _
    $region11: #{tpu_custom_call.1} parent=1 // pred_check_branch
      %17 = sbr.rel (0) target = $region13
    $region12: #{tpu_custom_call.1} parent=1 // pred_region
      _
    $region13: #{tpu_custom_call.1} parent=1 // pred_fallthru
      _
    // Predicated region
    $region14: #{tpu_custom_call.1} parent=1 // pred_check
      _
    $region15: #{tpu_custom_call.1} parent=1 // pred_check_branch
      %19 = sbr.rel (0) target = $region17
    $region16: #{tpu_custom_call.1} parent=1 // pred_region
      _
    $region17: #{tpu_custom_call.1} parent=1 // pred_fallthru
      _
    // Predicated region
    $region18: #{tpu_custom_call.1} parent=1 // pred_check
      _
    $region19: #{tpu_custom_call.1} parent=1 // pred_check_branch
      %21 = sbr.rel (0) target = $region21
    $region20: #{tpu_custom_call.1} parent=1 // pred_region
      _
    $region21: #{tpu_custom_call.1} parent=1 // pred_fallthru
      _
    // Predicated region
    $region22: #{tpu_custom_call.1} parent=1 // pred_check
      _
    $region23: #{tpu_custom_call.1} parent=1 // pred_check_branch
      %23 = sbr.rel (0) target = $region25
    $region24: #{tpu_custom_call.1} parent=1 // pred_region
      _
    $region25: #{tpu_custom_call.1} parent=1 // pred_fallthru
      _
    %v25 = vld [vmem:[%s1] sm:$0xf]
    %v26 = vld [vmem:[%s1 + $0x4] sm:$0xf]
    %v27 = vld [vmem:[%s1 + $0x8] sm:$0xf]
    %v28 = vld [vmem:[%s1 + $0xc] sm:$0xf]
    %v29 = vld [vmem:[%s1 + $0x10] sm:$0xf]
    %v30 = vld [vmem:[%s1 + $0x14] sm:$0xf]
    %v31 = vld [vmem:[%s1 + $0x18] sm:$0xf]
    %v32 = vld [vmem:[%s1 + $0x1c] sm:$0xf]
    %v33 = vld [vmem:[%s1 + $0x20] sm:$0xf]
    %v34 = vld [vmem:[%s1 + $0x24] sm:$0xf]
    %v35 = vld [vmem:[%s1 + $0x28] sm:$0xf]
    %v36 = vld [vmem:[%s1 + $0x2c] sm:$0xf]
    %v37 = vld [vmem:[%s1 + $0x30] sm:$0xf]
    %v38 = vld [vmem:[%s1 + $0x34] sm:$0xf]
    %v39 = vld [vmem:[%s1 + $0x38] sm:$0xf]
    %v40 = vld [vmem:[%s1 + $0x3c] sm:$0xf]
    %v41 = vld [vmem:[%s1 + $0x40] sm:$0xf]
    %v42 = vld [vmem:[%s1 + $0x44] sm:$0xf]
    %v43 = vld [vmem:[%s1 + $0x48] sm:$0xf]
    %v44 = vld [vmem:[%s1 + $0x4c] sm:$0xf]
    %v45 = vld [vmem:[%s1 + $0x50] sm:$0xf]
    %v46 = vld [vmem:[%s1 + $0x54] sm:$0xf]
    %v47 = vld [vmem:[%s1 + $0x58] sm:$0xf]
    %v48 = vld [vmem:[%s1 + $0x5c] sm:$0xf]
    %v49 = vld [vmem:[%s2] sm:$0xff]
    %v50 = vld [vmem:[%s2 + $0x8] sm:$0xff]
    %v51 = vld [vmem:[%s2 + $0x10] sm:$0xff]
    %v52 = vld [vmem:[%s2 + $0x18] sm:$0xff]
    %v53 = vld [vmem:[%s2 + $0x20] sm:$0xff]
    %v54 = vld [vmem:[%s2 + $0x28] sm:$0xff]
    %v55 = vld [vmem:[%s2 + $0x30] sm:$0xff]
    %v56 = vld [vmem:[%s2 + $0x38] sm:$0xff]
    %v57 = vld [vmem:[%s2 + $0x40] sm:$0xff]
    %v58 = vld [vmem:[%s2 + $0x48] sm:$0xff]
    %v59 = vld [vmem:[%s2 + $0x50] sm:$0xff]
    %v60 = vld [vmem:[%s2 + $0x58] sm:$0xff]
    %v61 = vld [vmem:[%s2 + $0x60] sm:$0xff]
    %v62 = vld [vmem:[%s2 + $0x68] sm:$0xff]
    %v63 = vld [vmem:[%s2 + $0x70] sm:$0xff]
    %v64 = vld [vmem:[%s2 + $0x78] sm:$0xff]
    %v65 = vld [vmem:[%s2 + $0x80] sm:$0xff]
    %v66 = vld [vmem:[%s2 + $0x88] sm:$0xff]
    %v67 = vld [vmem:[%s2 + $0x90] sm:$0xff]
    %v68 = vld [vmem:[%s2 + $0x98] sm:$0xff]
    %v69 = vld [vmem:[%s2 + $0xa0] sm:$0xff]
    %v70 = vld [vmem:[%s2 + $0xa8] sm:$0xff]
    %v71 = vld [vmem:[%s2 + $0xb0] sm:$0xff]
    %v72 = vld [vmem:[%s2 + $0xb8] sm:$0xff]
    %v73 = vld [vmem:[%s3] sm:$0xf]
    %v74 = vld [vmem:[%s3 + $0x4] sm:$0xf]
    %v75 = vld [vmem:[%s3 + $0x8] sm:$0xf]
    %v76 = vld [vmem:[%s3 + $0xc] sm:$0xf]
    %v77 = vld [vmem:[%s3 + $0x10] sm:$0xf]
    %v78 = vld [vmem:[%s3 + $0x14] sm:$0xf]
    %v79 = vld [vmem:[%s3 + $0x18] sm:$0xf]
    %v80 = vld [vmem:[%s3 + $0x1c] sm:$0xf]
    %v81 = vld [vmem:[%s4] sm:$0xff]
    %v82 = vld [vmem:[%s4 + $0x8] sm:$0xff]
    %v83 = vld [vmem:[%s4 + $0x10] sm:$0xff]
    %v84 = vld [vmem:[%s4 + $0x18] sm:$0xff]
    %v85 = vld [vmem:[%s4 + $0x20] sm:$0xff]
    %v86 = vld [vmem:[%s4 + $0x28] sm:$0xff]
    %v87 = vld [vmem:[%s4 + $0x30] sm:$0xff]
    %v88 = vld [vmem:[%s4 + $0x38] sm:$0xff]
    %v89 = vld [vmem:[%s5] sm:$0xff]
    %v90 = vld [vmem:[%s5 + $0x8] sm:$0xff]
    %v91 = vld [vmem:[%s5 + $0x10] sm:$0xff]
    %v92 = vld [vmem:[%s5 + $0x18] sm:$0xff]
    %v93 = vld [vmem:[%s5 + $0x20] sm:$0xff]
    %v94 = vld [vmem:[%s5 + $0x28] sm:$0xff]
    %v95 = vld [vmem:[%s5 + $0x30] sm:$0xff]
    %v96 = vld [vmem:[%s5 + $0x38] sm:$0xff]
    %v97 = vld [vmem:[%s0] sm:$0xff]
    %v98 = vld [vmem:[%s0 + $0x8] sm:$0xff]
    %v99 = vld [vmem:[%s0 + $0x10] sm:$0xff]
    %v100 = vld [vmem:[%s0 + $0x18] sm:$0xff]
    %v101 = vld [vmem:[%s0 + $0x20] sm:$0xff]
    %v102 = vld [vmem:[%s0 + $0x28] sm:$0xff]
    %v103 = vld [vmem:[%s0 + $0x30] sm:$0xff]
    %v104 = vld [vmem:[%s0 + $0x38] sm:$0xff]
    %v105 = vmax.f32 %v97, 0.0
    %v106 = vmax.f32 %v98, 0.0
    %v107 = vmax.f32 %v99, 0.0
    %v108 = vmax.f32 %v100, 0.0
    %v109 = vmax.f32 %v101, 0.0
    %v110 = vmax.f32 %v102, 0.0
    %v111 = vmax.f32 %v103, 0.0
    %v112 = vmax.f32 %v104, 0.0
    %v113 = vmin.f32 %v105, 4.0
    %v114 = vmin.f32 %v106, 4.0
    %v115 = vmin.f32 %v107, 4.0
    %v116 = vmin.f32 %v108, 4.0
    %v117 = vmin.f32 %v109, 4.0
    %v118 = vmin.f32 %v110, 4.0
    %v119 = vmin.f32 %v111, 4.0
    %v120 = vmin.f32 %v112, 4.0
    %v121 = vadd.f32 %v113, 0.5
    %v122 = vadd.f32 %v114, 0.5
    %v123 = vadd.f32 %v115, 0.5
    %v124 = vadd.f32 %v116, 0.5
    %v125 = vadd.f32 %v117, 0.5
    %v126 = vadd.f32 %v118, 0.5
    %v127 = vadd.f32 %v119, 0.5
    %v128 = vadd.f32 %v120, 0.5
    %v129 = vfloor.f32 %v121
    %v130 = vfloor.f32 %v122
    %v131 = vfloor.f32 %v123
    %v132 = vfloor.f32 %v124
    %v133 = vfloor.f32 %v125
    %v134 = vfloor.f32 %v126
    %v135 = vfloor.f32 %v127
    %v136 = vfloor.f32 %v128
    %v137 = vrcp.pop 4.0
    %v138 = vmul.f32 %v129, %v137
    %v139 = vmul.f32 %v130, %v137
    %v140 = vmul.f32 %v131, %v137
    %v141 = vmul.f32 %v132, %v137
    %v142 = vmul.f32 %v133, %v137
    %v143 = vmul.f32 %v134, %v137
    %v144 = vmul.f32 %v135, %v137
    %v145 = vmul.f32 %v136, %v137
    %v146 = vpack.c.bf16 %v139, %v138
    %v147 = vpack.c.bf16 %v141, %v140
    %v148 = vpack.c.bf16 %v143, %v142
    %v149 = vpack.c.bf16 %v145, %v144
    %151 = vset.pattern.permute.xlu0 0
    %152 = vperm.xlu0 %151, %v49
    %v153 = vpop.permute.xlu0 %152
    %156 = vset.pattern.permute.xlu0 0
    %157 = vperm.xlu0 %156, %v50
    %v158 = vpop.permute.xlu0 %157
    %161 = vset.pattern.permute.xlu0 0
    %162 = vperm.xlu0 %161, %v51
    %v163 = vpop.permute.xlu0 %162
    %166 = vset.pattern.permute.xlu0 0
    %167 = vperm.xlu0 %166, %v52
    %v168 = vpop.permute.xlu0 %167
    %171 = vset.pattern.permute.xlu0 0
    %172 = vperm.xlu0 %171, %v53
    %v173 = vpop.permute.xlu0 %172
    %176 = vset.pattern.permute.xlu0 0
    %177 = vperm.xlu0 %176, %v54
    %v178 = vpop.permute.xlu0 %177
    %181 = vset.pattern.permute.xlu0 0
    %182 = vperm.xlu0 %181, %v55
    %v183 = vpop.permute.xlu0 %182
    %186 = vset.pattern.permute.xlu0 0
    %187 = vperm.xlu0 %186, %v56
    %v188 = vpop.permute.xlu0 %187
    %191 = vset.pattern.permute.xlu0 0
    %192 = vperm.xlu0 %191, %v57
    %v193 = vpop.permute.xlu0 %192
    %196 = vset.pattern.permute.xlu0 0
    %197 = vperm.xlu0 %196, %v58
    %v198 = vpop.permute.xlu0 %197
    %201 = vset.pattern.permute.xlu0 0
    %202 = vperm.xlu0 %201, %v59
    %v203 = vpop.permute.xlu0 %202
    %206 = vset.pattern.permute.xlu0 0
    %207 = vperm.xlu0 %206, %v60
    %v208 = vpop.permute.xlu0 %207
    %211 = vset.pattern.permute.xlu0 0
    %212 = vperm.xlu0 %211, %v61
    %v213 = vpop.permute.xlu0 %212
    %216 = vset.pattern.permute.xlu0 0
    %217 = vperm.xlu0 %216, %v62
    %v218 = vpop.permute.xlu0 %217
    %221 = vset.pattern.permute.xlu0 0
    %222 = vperm.xlu0 %221, %v63
    %v223 = vpop.permute.xlu0 %222
    %226 = vset.pattern.permute.xlu0 0
    %227 = vperm.xlu0 %226, %v64
    %v228 = vpop.permute.xlu0 %227
    %231 = vset.pattern.permute.xlu0 0
    %232 = vperm.xlu0 %231, %v65
    %v233 = vpop.permute.xlu0 %232
    %236 = vset.pattern.permute.xlu0 0
    %237 = vperm.xlu0 %236, %v66
    %v238 = vpop.permute.xlu0 %237
    %241 = vset.pattern.permute.xlu0 0
    %242 = vperm.xlu0 %241, %v67
    %v243 = vpop.permute.xlu0 %242
    %246 = vset.pattern.permute.xlu0 0
    %247 = vperm.xlu0 %246, %v68
    %v248 = vpop.permute.xlu0 %247
    %251 = vset.pattern.permute.xlu0 0
    %252 = vperm.xlu0 %251, %v69
    %v253 = vpop.permute.xlu0 %252
    %256 = vset.pattern.permute.xlu0 0
    %257 = vperm.xlu0 %256, %v70
    %v258 = vpop.permute.xlu0 %257
    %261 = vset.pattern.permute.xlu0 0
    %262 = vperm.xlu0 %261, %v71
    %v263 = vpop.permute.xlu0 %262
    %266 = vset.pattern.permute.xlu0 0
    %267 = vperm.xlu0 %266, %v72
    %v268 = vpop.permute.xlu0 %267
    %v294 = vunpack.c.l.b16 %v25
    %v295 = vunpack.c.l.b16 %v26
    %v296 = vunpack.c.l.b16 %v27
    %v297 = vunpack.c.l.b16 %v28
    %v298 = vunpack.c.l.b16 %v29
    %v299 = vunpack.c.l.b16 %v30
    %v300 = vunpack.c.l.b16 %v31
    %v301 = vunpack.c.l.b16 %v32
    %v302 = vunpack.c.l.b16 %v33
    %v303 = vunpack.c.l.b16 %v34
    %v304 = vunpack.c.l.b16 %v35
    %v305 = vunpack.c.l.b16 %v36
    %v306 = vunpack.c.l.b16 %v37
    %v307 = vunpack.c.l.b16 %v38
    %v308 = vunpack.c.l.b16 %v39
    %v309 = vunpack.c.l.b16 %v40
    %v310 = vunpack.c.l.b16 %v41
    %v311 = vunpack.c.l.b16 %v42
    %v312 = vunpack.c.l.b16 %v43
    %v313 = vunpack.c.l.b16 %v44
    %v314 = vunpack.c.l.b16 %v45
    %v315 = vunpack.c.l.b16 %v46
    %v316 = vunpack.c.l.b16 %v47
    %v317 = vunpack.c.l.b16 %v48
    %v318 = vpack.c.b16 %v295, %v294
    %v319 = vpack.c.b16 %v297, %v296
    %v320 = vpack.c.b16 %v299, %v298
    %v321 = vpack.c.b16 %v301, %v300
    %v322 = vpack.c.b16 %v303, %v302
    %v323 = vpack.c.b16 %v305, %v304
    %v324 = vpack.c.b16 %v307, %v306
    %v325 = vpack.c.b16 %v309, %v308
    %v326 = vpack.c.b16 %v311, %v310
    %v327 = vpack.c.b16 %v313, %v312
    %v328 = vpack.c.b16 %v315, %v314
    %v329 = vpack.c.b16 %v317, %v316
    %vm330 = vcmask 523264
    %v332 = vsel %vm330, %v318, 0
    %v335 = vsel %vm330, %v319, 0
    %v338 = vsel %vm330, %v320, 0
    %v341 = vsel %vm330, %v321, 0
    %v344 = vsel %vm330, %v322, 0
    %v347 = vsel %vm330, %v323, 0
    %v350 = vsel %vm330, %v324, 0
    %v353 = vsel %vm330, %v325, 0
    %v356 = vsel %vm330, %v326, 0
    %v359 = vsel %vm330, %v327, 0
    %v362 = vsel %vm330, %v328, 0
    %v365 = vsel %vm330, %v329, 0
    %367 = vmatprep.subr.bf16.mxu0 0
    %368 = vmatpush1.bf16.msra.mxu0 %v146
    %369 = vmatprep.subr.bf16.mxu0 0
    %370 = vmatpush1.bf16.msra.mxu0 %v147
    %371 = vmatprep.subr.bf16.mxu0 0
    %372 = vmatpush1.bf16.msra.mxu0 %v148
    %373 = vmatprep.subr.bf16.mxu0 0
    %374 = vmatpush1.bf16.msra.mxu0 %v149
    %375 = vmatprep.subr.bf16.mxu0 0
    %376 = vmatpush1.bf16.msra.mxu0 0
    %377 = vmatprep.subr.bf16.mxu0 0
    %378 = vmatpush1.bf16.msra.mxu0 0
    %379 = vmatprep.subr.bf16.mxu0 0
    %380 = vmatpush1.bf16.msra.mxu0 0
    %381 = vmatprep.subr.bf16.mxu0 0
    %382 = vmatpush1.bf16.msra.mxu0 0
    %383 = vmatprep.subr.bf16.mxu0 0
    %384 = vmatpush1.bf16.msra.mxu0 0
    %385 = vmatprep.subr.bf16.mxu0 0
    %386 = vmatpush1.bf16.msra.mxu0 0
    %387 = vmatprep.subr.bf16.mxu0 0
    %388 = vmatpush1.bf16.msra.mxu0 0
    %389 = vmatprep.subr.bf16.mxu0 0
    %390 = vmatpush1.bf16.msra.mxu0 0
    %391 = vmatprep.subr.bf16.mxu0 0
    %392 = vmatpush1.bf16.msra.mxu0 0
    %393 = vmatprep.subr.bf16.mxu0 0
    %394 = vmatpush1.bf16.msra.mxu0 0
    %395 = vmatprep.subr.bf16.mxu0 0
    %396 = vmatpush1.bf16.msra.mxu0 0
    %397 = vmatprep.subr.bf16.mxu0 0
    %398 = vmatpush1.bf16.msra.mxu0 0
    %399 = vmatprep.mubr.bf16.mxu0 0
    %400 = vmatmul.mubr.bf16.gmra.mrb[0].mxu0 %v332
    %v401 = vpop.f32.mrb[0].mxu0
    %v402 = vadd.f32 %v153, %v401
    %v403 = vpop.f32.mrb[0].mxu0
    %v404 = vpop.f32.mrb[0].mxu0
    %v405 = vadd.f32 %v158, %v404
    %v406 = vpop.f32.mrb[0].mxu0
    %407 = vmatprep.mubr.bf16.mxu0 0
    %408 = vmatmul.mubr.bf16.gmra.mrb[0].mxu0 %v335
    %v409 = vpop.f32.mrb[0].mxu0
    %v410 = vadd.f32 %v163, %v409
    %v411 = vpop.f32.mrb[0].mxu0
    %v412 = vpop.f32.mrb[0].mxu0
    %v413 = vadd.f32 %v168, %v412
    %v414 = vpop.f32.mrb[0].mxu0
    %415 = vmatprep.mubr.bf16.mxu0 0
    %416 = vmatmul.mubr.bf16.gmra.mrb[0].mxu0 %v338
    %v417 = vpop.f32.mrb[0].mxu0
    %v418 = vadd.f32 %v173, %v417
    %v419 = vpop.f32.mrb[0].mxu0
    %v420 = vpop.f32.mrb[0].mxu0
    %v421 = vadd.f32 %v178, %v420
    %v422 = vpop.f32.mrb[0].mxu0
    %423 = vmatprep.mubr.bf16.mxu0 0
    %424 = vmatmul.mubr.bf16.gmra.mrb[0].mxu0 %v341
    %v425 = vpop.f32.mrb[0].mxu0
    %v426 = vadd.f32 %v183, %v425
    %v427 = vpop.f32.mrb[0].mxu0
    %v428 = vpop.f32.mrb[0].mxu0
    %v429 = vadd.f32 %v188, %v428
    %v430 = vpop.f32.mrb[0].mxu0
    %431 = vmatprep.mubr.bf16.mxu0 0
    %432 = vmatmul.mubr.bf16.gmra.mrb[0].mxu0 %v344
    %v433 = vpop.f32.mrb[0].mxu0
    %v434 = vadd.f32 %v193, %v433
    %v435 = vpop.f32.mrb[0].mxu0
    %v436 = vpop.f32.mrb[0].mxu0
    %v437 = vadd.f32 %v198, %v436
    %v438 = vpop.f32.mrb[0].mxu0
    %439 = vmatprep.mubr.bf16.mxu0 0
    %440 = vmatmul.mubr.bf16.gmra.mrb[0].mxu0 %v347
    %v441 = vpop.f32.mrb[0].mxu0
    %v442 = vadd.f32 %v203, %v441
    %v443 = vpop.f32.mrb[0].mxu0
    %v444 = vpop.f32.mrb[0].mxu0
    %v445 = vadd.f32 %v208, %v444
    %v446 = vpop.f32.mrb[0].mxu0
    %447 = vmatprep.mubr.bf16.mxu0 0
    %448 = vmatmul.mubr.bf16.gmra.mrb[0].mxu0 %v350
    %v449 = vpop.f32.mrb[0].mxu0
    %v450 = vadd.f32 %v213, %v449
    %v451 = vpop.f32.mrb[0].mxu0
    %v452 = vpop.f32.mrb[0].mxu0
    %v453 = vadd.f32 %v218, %v452
    %v454 = vpop.f32.mrb[0].mxu0
    %455 = vmatprep.mubr.bf16.mxu0 0
    %456 = vmatmul.mubr.bf16.gmra.mrb[0].mxu0 %v353
    %v457 = vpop.f32.mrb[0].mxu0
    %v458 = vadd.f32 %v223, %v457
    %v459 = vpop.f32.mrb[0].mxu0
    %v460 = vpop.f32.mrb[0].mxu0
    %v461 = vadd.f32 %v228, %v460
    %v462 = vpop.f32.mrb[0].mxu0
    %463 = vmatprep.mubr.bf16.mxu0 0
    %464 = vmatmul.mubr.bf16.gmra.mrb[0].mxu0 %v356
    %v465 = vpop.f32.mrb[0].mxu0
    %v466 = vadd.f32 %v233, %v465
    %v467 = vpop.f32.mrb[0].mxu0
    %v468 = vpop.f32.mrb[0].mxu0
    %v469 = vadd.f32 %v238, %v468
    %v470 = vpop.f32.mrb[0].mxu0
    %471 = vmatprep.mubr.bf16.mxu0 0
    %472 = vmatmul.mubr.bf16.gmra.mrb[0].mxu0 %v359
    %v473 = vpop.f32.mrb[0].mxu0
    %v474 = vadd.f32 %v243, %v473
    %v475 = vpop.f32.mrb[0].mxu0
    %v476 = vpop.f32.mrb[0].mxu0
    %v477 = vadd.f32 %v248, %v476
    %v478 = vpop.f32.mrb[0].mxu0
    %479 = vmatprep.mubr.bf16.mxu0 0
    %480 = vmatmul.mubr.bf16.gmra.mrb[0].mxu0 %v362
    %v481 = vpop.f32.mrb[0].mxu0
    %v482 = vadd.f32 %v253, %v481
    %v483 = vpop.f32.mrb[0].mxu0
    %v484 = vpop.f32.mrb[0].mxu0
    %v485 = vadd.f32 %v258, %v484
    %v486 = vpop.f32.mrb[0].mxu0
    %487 = vmatprep.mubr.bf16.mxu0 0
    %488 = vmatmul.mubr.bf16.gmra.mrb[0].mxu0 %v365
    %v489 = vpop.f32.mrb[0].mxu0
    %v490 = vadd.f32 %v263, %v489
    %v491 = vpop.f32.mrb[0].mxu0
    %v492 = vpop.f32.mrb[0].mxu0
    %v493 = vadd.f32 %v268, %v492
    %v494 = vpop.f32.mrb[0].mxu0
    %495 = vdwg.mxu0
    %v496 = vmax.f32 %v402, 0.0
    %v497 = vmax.f32 %v405, 0.0
    %v498 = vmax.f32 %v410, 0.0
    %v499 = vmax.f32 %v413, 0.0
    %v500 = vmax.f32 %v418, 0.0
    %v501 = vmax.f32 %v421, 0.0
    %v502 = vmax.f32 %v426, 0.0
    %v503 = vmax.f32 %v429, 0.0
    %v504 = vmax.f32 %v434, 0.0
    %v505 = vmax.f32 %v437, 0.0
    %v506 = vmax.f32 %v442, 0.0
    %v507 = vmax.f32 %v445, 0.0
    %v508 = vmax.f32 %v450, 0.0
    %v509 = vmax.f32 %v453, 0.0
    %v510 = vmax.f32 %v458, 0.0
    %v511 = vmax.f32 %v461, 0.0
    %v512 = vmax.f32 %v466, 0.0
    %v513 = vmax.f32 %v469, 0.0
    %v514 = vmax.f32 %v474, 0.0
    %v515 = vmax.f32 %v477, 0.0
    %v516 = vmax.f32 %v482, 0.0
    %v517 = vmax.f32 %v485, 0.0
    %v518 = vmax.f32 %v490, 0.0
    %v519 = vmax.f32 %v493, 0.0
    %v520 = vmin.f32 %v496, 4.0
    %v521 = vmin.f32 %v497, 4.0
    %v522 = vmin.f32 %v498, 4.0
    %v523 = vmin.f32 %v499, 4.0
    %v524 = vmin.f32 %v500, 4.0
    %v525 = vmin.f32 %v501, 4.0
    %v526 = vmin.f32 %v502, 4.0
    %v527 = vmin.f32 %v503, 4.0
    %v528 = vmin.f32 %v504, 4.0
    %v529 = vmin.f32 %v505, 4.0
    %v530 = vmin.f32 %v506, 4.0
    %v531 = vmin.f32 %v507, 4.0
    %v532 = vmin.f32 %v508, 4.0
    %v533 = vmin.f32 %v509, 4.0
    %v534 = vmin.f32 %v510, 4.0
    %v535 = vmin.f32 %v511, 4.0
    %v536 = vmin.f32 %v512, 4.0
    %v537 = vmin.f32 %v513, 4.0
    %v538 = vmin.f32 %v514, 4.0
    %v539 = vmin.f32 %v515, 4.0
    %v540 = vmin.f32 %v516, 4.0
    %v541 = vmin.f32 %v517, 4.0
    %v542 = vmin.f32 %v518, 4.0
    %v543 = vmin.f32 %v519, 4.0
    %v544 = vadd.f32 %v520, 0.5
    %v545 = vadd.f32 %v521, 0.5
    %v546 = vadd.f32 %v522, 0.5
    %v547 = vadd.f32 %v523, 0.5
    %v548 = vadd.f32 %v524, 0.5
    %v549 = vadd.f32 %v525, 0.5
    %v550 = vadd.f32 %v526, 0.5
    %v551 = vadd.f32 %v527, 0.5
    %v552 = vadd.f32 %v528, 0.5
    %v553 = vadd.f32 %v529, 0.5
    %v554 = vadd.f32 %v530, 0.5
    %v555 = vadd.f32 %v531, 0.5
    %v556 = vadd.f32 %v532, 0.5
    %v557 = vadd.f32 %v533, 0.5
    %v558 = vadd.f32 %v534, 0.5
    %v559 = vadd.f32 %v535, 0.5
    %v560 = vadd.f32 %v536, 0.5
    %v561 = vadd.f32 %v537, 0.5
    %v562 = vadd.f32 %v538, 0.5
    %v563 = vadd.f32 %v539, 0.5
    %v564 = vadd.f32 %v540, 0.5
    %v565 = vadd.f32 %v541, 0.5
    %v566 = vadd.f32 %v542, 0.5
    %v567 = vadd.f32 %v543, 0.5
    %v568 = vfloor.f32 %v544
    %v569 = vfloor.f32 %v545
    %v570 = vfloor.f32 %v546
    %v571 = vfloor.f32 %v547
    %v572 = vfloor.f32 %v548
    %v573 = vfloor.f32 %v549
    %v574 = vfloor.f32 %v550
    %v575 = vfloor.f32 %v551
    %v576 = vfloor.f32 %v552
    %v577 = vfloor.f32 %v553
    %v578 = vfloor.f32 %v554
    %v579 = vfloor.f32 %v555
    %v580 = vfloor.f32 %v556
    %v581 = vfloor.f32 %v557
    %v582 = vfloor.f32 %v558
    %v583 = vfloor.f32 %v559
    %v584 = vfloor.f32 %v560
    %v585 = vfloor.f32 %v561
    %v586 = vfloor.f32 %v562
    %v587 = vfloor.f32 %v563
    %v588 = vfloor.f32 %v564
    %v589 = vfloor.f32 %v565
    %v590 = vfloor.f32 %v566
    %v591 = vfloor.f32 %v567
    %v592 = vmul.f32 %v568, %v137
    %v593 = vmul.f32 %v569, %v137
    %v594 = vmul.f32 %v570, %v137
    %v595 = vmul.f32 %v571, %v137
    %v596 = vmul.f32 %v572, %v137
    %v597 = vmul.f32 %v573, %v137
    %v598 = vmul.f32 %v574, %v137
    %v599 = vmul.f32 %v575, %v137
    %v600 = vmul.f32 %v576, %v137
    %v601 = vmul.f32 %v577, %v137
    %v602 = vmul.f32 %v578, %v137
    %v603 = vmul.f32 %v579, %v137
    %v604 = vmul.f32 %v580, %v137
    %v605 = vmul.f32 %v581, %v137
    %v606 = vmul.f32 %v582, %v137
    %v607 = vmul.f32 %v583, %v137
    %v608 = vmul.f32 %v584, %v137
    %v609 = vmul.f32 %v585, %v137
    %v610 = vmul.f32 %v586, %v137
    %v611 = vmul.f32 %v587, %v137
    %v612 = vmul.f32 %v588, %v137
    %v613 = vmul.f32 %v589, %v137
    %v614 = vmul.f32 %v590, %v137
    %v615 = vmul.f32 %v591, %v137
    %v616 = vpack.c.bf16 %v593, %v592
    %v617 = vpack.c.bf16 %v595, %v594
    %v618 = vpack.c.bf16 %v597, %v596
    %v619 = vpack.c.bf16 %v599, %v598
    %v620 = vpack.c.bf16 %v601, %v600
    %v621 = vpack.c.bf16 %v603, %v602
    %v622 = vpack.c.bf16 %v605, %v604
    %v623 = vpack.c.bf16 %v607, %v606
    %v624 = vpack.c.bf16 %v609, %v608
    %v625 = vpack.c.bf16 %v611, %v610
    %v626 = vpack.c.bf16 %v613, %v612
    %v627 = vpack.c.bf16 %v615, %v614
    %628 = vmatprep.subr.bf16.mxu0 0
    %629 = vmatpush1.bf16.xpose.msra.mxu0 %v620
    %630 = vmatprep.subr.bf16.mxu0 0
    %631 = vmatpush1.bf16.xpose.msra.mxu0 %v621
    %632 = vmatprep.subr.bf16.mxu0 0
    %633 = vmatpush1.bf16.xpose.msra.mxu0 %v622
    %634 = vmatprep.subr.bf16.mxu0 0
    %635 = vmatpush1.bf16.xpose.msra.mxu0 %v623
    %636 = vmatprep.subr.bf16.mxu0 0
    %637 = vmatpush1.bf16.xpose.msra.mxu0 0
    %638 = vmatprep.subr.bf16.mxu0 0
    %639 = vmatpush1.bf16.xpose.msra.mxu0 0
    %640 = vmatprep.subr.bf16.mxu0 0
    %641 = vmatpush1.bf16.xpose.msra.mxu0 0
    %642 = vmatprep.subr.bf16.mxu0 0
    %643 = vmatpush1.bf16.xpose.msra.mxu0 0
    %644 = vmatprep.subr.bf16.mxu0 0
    %645 = vmatpush1.bf16.xpose.msra.mxu0 0
    %646 = vmatprep.subr.bf16.mxu0 0
    %647 = vmatpush1.bf16.xpose.msra.mxu0 0
    %648 = vmatprep.subr.bf16.mxu0 0
    %649 = vmatpush1.bf16.xpose.msra.mxu0 0
    %650 = vmatprep.subr.bf16.mxu0 0
    %651 = vmatpush1.bf16.xpose.msra.mxu0 0
    %652 = vmatprep.subr.bf16.mxu0 0
    %653 = vmatpush1.bf16.xpose.msra.mxu0 0
    %654 = vmatprep.subr.bf16.mxu0 0
    %655 = vmatpush1.bf16.xpose.msra.mxu0 0
    %656 = vmatprep.subr.bf16.mxu0 0
    %657 = vmatpush1.bf16.xpose.msra.mxu0 0
    %658 = vmatprep.subr.bf16.mxu0 0
    %659 = vmatpush1.bf16.xpose.msra.mxu0 0
    %660 = vmatprep.mubr.bf16.mxu0 0
    %661 = vmatmul.mubr.bf16.gmra.mrb[0].mxu0 %v624
    %v662 = vpop.f32.mrb[0].mxu0
    %v663 = vadd.f32 0.0, %v662
    %v664 = vpop.f32.mrb[0].mxu0
    %v665 = vpop.f32.mrb[0].mxu0
    %v666 = vadd.f32 0.0, %v665
    %v667 = vpop.f32.mrb[0].mxu0
    %668 = vmatprep.mubr.bf16.mxu0 0
    %669 = vmatmul.mubr.bf16.gmra.mrb[0].mxu0 %v625
    %v670 = vpop.f32.mrb[0].mxu0
    %v671 = vadd.f32 0.0, %v670
    %v672 = vpop.f32.mrb[0].mxu0
    %v673 = vpop.f32.mrb[0].mxu0
    %v674 = vadd.f32 0.0, %v673
    %v675 = vpop.f32.mrb[0].mxu0
    %676 = vmatprep.mubr.bf16.mxu0 0
    %677 = vmatmul.mubr.bf16.gmra.mrb[0].mxu0 %v626
    %v678 = vpop.f32.mrb[0].mxu0
    %v679 = vadd.f32 0.0, %v678
    %v680 = vpop.f32.mrb[0].mxu0
    %v681 = vpop.f32.mrb[0].mxu0
    %v682 = vadd.f32 0.0, %v681
    %v683 = vpop.f32.mrb[0].mxu0
    %684 = vmatprep.mubr.bf16.mxu0 0
    %685 = vmatmul.mubr.bf16.gmra.mrb[0].mxu0 %v627
    %v686 = vpop.f32.mrb[0].mxu0
    %v687 = vadd.f32 0.0, %v686
    %v688 = vpop.f32.mrb[0].mxu0
    %v689 = vpop.f32.mrb[0].mxu0
    %v690 = vadd.f32 0.0, %v689
    %v691 = vpop.f32.mrb[0].mxu0
    %692 = vdwg.mxu0
    %v693 = vmul.f32 %v663, %v89
    %v694 = vmul.f32 %v666, %v90
    %v695 = vmul.f32 %v671, %v91
    %v696 = vmul.f32 %v674, %v92
    %v697 = vmul.f32 %v679, %v93
    %v698 = vmul.f32 %v682, %v94
    %v699 = vmul.f32 %v687, %v95
    %v700 = vmul.f32 %v690, %v96
    %v701 = vpack.c.bf16 %v694, %v693
    %v702 = vpack.c.bf16 %v696, %v695
    %v703 = vpack.c.bf16 %v698, %v697
    %v704 = vpack.c.bf16 %v700, %v699
    %v705 = vunpack.c.l.bf16 %v701
    %v706 = vunpack.c.h.bf16 %v701
    %v707 = vunpack.c.l.bf16 %v702
    %v708 = vunpack.c.h.bf16 %v702
    %v709 = vunpack.c.l.bf16 %v703
    %v710 = vunpack.c.h.bf16 %v703
    %v711 = vunpack.c.l.bf16 %v704
    %v712 = vunpack.c.h.bf16 %v704
    %v713 = vsub.f32 %v693, %v705
    %v714 = vsub.f32 %v694, %v706
    %v715 = vsub.f32 %v695, %v707
    %v716 = vsub.f32 %v696, %v708
    %v717 = vsub.f32 %v697, %v709
    %v718 = vsub.f32 %v698, %v710
    %v719 = vsub.f32 %v699, %v711
    %v720 = vsub.f32 %v700, %v712
    %v721 = vpack.c.bf16 %v714, %v713
    %v722 = vpack.c.bf16 %v716, %v715
    %v723 = vpack.c.bf16 %v718, %v717
    %v724 = vpack.c.bf16 %v720, %v719
    %v726 = vsel %vm330, %v721, 0
    %v729 = vsel %vm330, %v722, 0
    %v732 = vsel %vm330, %v723, 0
    %v735 = vsel %vm330, %v724, 0
    %737 = vmatprep.subr.bf16.mxu0 0
    %738 = vmatpush1.bf16.msra.mxu0 %v616
    %739 = vmatprep.subr.bf16.mxu0 0
    %740 = vmatpush1.bf16.msra.mxu0 %v617
    %741 = vmatprep.subr.bf16.mxu0 0
    %742 = vmatpush1.bf16.msra.mxu0 %v618
    %743 = vmatprep.subr.bf16.mxu0 0
    %744 = vmatpush1.bf16.msra.mxu0 %v619
    %745 = vmatprep.subr.bf16.mxu0 0
    %746 = vmatpush1.bf16.msra.mxu0 0
    %747 = vmatprep.subr.bf16.mxu0 0
    %748 = vmatpush1.bf16.msra.mxu0 0
    %749 = vmatprep.subr.bf16.mxu0 0
    %750 = vmatpush1.bf16.msra.mxu0 0
    %751 = vmatprep.subr.bf16.mxu0 0
    %752 = vmatpush1.bf16.msra.mxu0 0
    %753 = vmatprep.subr.bf16.mxu0 0
    %754 = vmatpush1.bf16.msra.mxu0 0
    %755 = vmatprep.subr.bf16.mxu0 0
    %756 = vmatpush1.bf16.msra.mxu0 0
    %757 = vmatprep.subr.bf16.mxu0 0
    %758 = vmatpush1.bf16.msra.mxu0 0
    %759 = vmatprep.subr.bf16.mxu0 0
    %760 = vmatpush1.bf16.msra.mxu0 0
    %761 = vmatprep.subr.bf16.mxu0 0
    %762 = vmatpush1.bf16.msra.mxu0 0
    %763 = vmatprep.subr.bf16.mxu0 0
    %764 = vmatpush1.bf16.msra.mxu0 0
    %765 = vmatprep.subr.bf16.mxu0 0
    %766 = vmatpush1.bf16.msra.mxu0 0
    %767 = vmatprep.subr.bf16.mxu0 0
    %768 = vmatpush1.bf16.msra.mxu0 0
    %769 = vmatprep.mubr.bf16.mxu0 0
    %770 = vmatmul.mubr.bf16.gmra.mrb[0].mxu0 %v726
    %v771 = vpop.f32.mrb[0].mxu0
    %v772 = vadd.f32 0.0, %v771
    %v773 = vpop.f32.mrb[0].mxu0
    %v774 = vpop.f32.mrb[0].mxu0
    %v775 = vadd.f32 0.0, %v774
    %v776 = vpop.f32.mrb[0].mxu0
    %777 = vmatprep.mubr.bf16.mxu0 0
    %778 = vmatmul.mubr.bf16.gmra.mrb[0].mxu0 %v729
    %v779 = vpop.f32.mrb[0].mxu0
    %v780 = vadd.f32 0.0, %v779
    %v781 = vpop.f32.mrb[0].mxu0
    %v782 = vpop.f32.mrb[0].mxu0
    %v783 = vadd.f32 0.0, %v782
    %v784 = vpop.f32.mrb[0].mxu0
    %785 = vmatprep.mubr.bf16.mxu0 0
    %786 = vmatmul.mubr.bf16.gmra.mrb[0].mxu0 %v732
    %v787 = vpop.f32.mrb[0].mxu0
    %v788 = vadd.f32 0.0, %v787
    %v789 = vpop.f32.mrb[0].mxu0
    %v790 = vpop.f32.mrb[0].mxu0
    %v791 = vadd.f32 0.0, %v790
    %v792 = vpop.f32.mrb[0].mxu0
    %793 = vmatprep.mubr.bf16.mxu0 0
    %794 = vmatmul.mubr.bf16.gmra.mrb[0].mxu0 %v735
    %v795 = vpop.f32.mrb[0].mxu0
    %v796 = vadd.f32 0.0, %v795
    %v797 = vpop.f32.mrb[0].mxu0
    %v798 = vpop.f32.mrb[0].mxu0
    %v799 = vadd.f32 0.0, %v798
    %v800 = vpop.f32.mrb[0].mxu0
    %801 = vdwg.mxu0
    %v803 = vsel %vm330, %v701, 0
    %v806 = vsel %vm330, %v702, 0
    %v809 = vsel %vm330, %v703, 0
    %v812 = vsel %vm330, %v704, 0
    %814 = vmatprep.subr.bf16.mxu0 0
    %815 = vmatpush1.bf16.msra.mxu0 %v616
    %816 = vmatprep.subr.bf16.mxu0 0
    %817 = vmatpush1.bf16.msra.mxu0 %v617
    %818 = vmatprep.subr.bf16.mxu0 0
    %819 = vmatpush1.bf16.msra.mxu0 %v618
    %820 = vmatprep.subr.bf16.mxu0 0
    %821 = vmatpush1.bf16.msra.mxu0 %v619
    %822 = vmatprep.subr.bf16.mxu0 0
    %823 = vmatpush1.bf16.msra.mxu0 0
    %824 = vmatprep.subr.bf16.mxu0 0
    %825 = vmatpush1.bf16.msra.mxu0 0
    %826 = vmatprep.subr.bf16.mxu0 0
    %827 = vmatpush1.bf16.msra.mxu0 0
    %828 = vmatprep.subr.bf16.mxu0 0
    %829 = vmatpush1.bf16.msra.mxu0 0
    %830 = vmatprep.subr.bf16.mxu0 0
    %831 = vmatpush1.bf16.msra.mxu0 0
    %832 = vmatprep.subr.bf16.mxu0 0
    %833 = vmatpush1.bf16.msra.mxu0 0
    %834 = vmatprep.subr.bf16.mxu0 0
    %835 = vmatpush1.bf16.msra.mxu0 0
    %836 = vmatprep.subr.bf16.mxu0 0
    %837 = vmatpush1.bf16.msra.mxu0 0
    %838 = vmatprep.subr.bf16.mxu0 0
    %839 = vmatpush1.bf16.msra.mxu0 0
    %840 = vmatprep.subr.bf16.mxu0 0
    %841 = vmatpush1.bf16.msra.mxu0 0
    %842 = vmatprep.subr.bf16.mxu0 0
    %843 = vmatpush1.bf16.msra.mxu0 0
    %844 = vmatprep.subr.bf16.mxu0 0
    %845 = vmatpush1.bf16.msra.mxu0 0
    %846 = vmatprep.mubr.bf16.mxu0 0
    %847 = vmatmul.mubr.bf16.gmra.mrb[0].mxu0 %v803
    %v848 = vpop.f32.mrb[0].mxu0
    %v849 = vadd.f32 %v772, %v848
    %v850 = vpop.f32.mrb[0].mxu0
    %v851 = vpop.f32.mrb[0].mxu0
    %v852 = vadd.f32 %v775, %v851
    %v853 = vpop.f32.mrb[0].mxu0
    %854 = vmatprep.mubr.bf16.mxu0 0
    %855 = vmatmul.mubr.bf16.gmra.mrb[0].mxu0 %v806
    %v856 = vpop.f32.mrb[0].mxu0
    %v857 = vadd.f32 %v780, %v856
    %v858 = vpop.f32.mrb[0].mxu0
    %v859 = vpop.f32.mrb[0].mxu0
    %v860 = vadd.f32 %v783, %v859
    %v861 = vpop.f32.mrb[0].mxu0
    %862 = vmatprep.mubr.bf16.mxu0 0
    %863 = vmatmul.mubr.bf16.gmra.mrb[0].mxu0 %v809
    %v864 = vpop.f32.mrb[0].mxu0
    %v865 = vadd.f32 %v788, %v864
    %v866 = vpop.f32.mrb[0].mxu0
    %v867 = vpop.f32.mrb[0].mxu0
    %v868 = vadd.f32 %v791, %v867
    %v869 = vpop.f32.mrb[0].mxu0
    %870 = vmatprep.mubr.bf16.mxu0 0
    %871 = vmatmul.mubr.bf16.gmra.mrb[0].mxu0 %v812
    %v872 = vpop.f32.mrb[0].mxu0
    %v873 = vadd.f32 %v796, %v872
    %v874 = vpop.f32.mrb[0].mxu0
    %v875 = vpop.f32.mrb[0].mxu0
    %v876 = vadd.f32 %v799, %v875
    %v877 = vpop.f32.mrb[0].mxu0
    %878 = vdwg.mxu0
    %v879 = vmax.f32 %v849, 0.0
    %v880 = vmax.f32 %v852, 0.0
    %v881 = vmax.f32 %v857, 0.0
    %v882 = vmax.f32 %v860, 0.0
    %v883 = vmax.f32 %v865, 0.0
    %v884 = vmax.f32 %v868, 0.0
    %v885 = vmax.f32 %v873, 0.0
    %v886 = vmax.f32 %v876, 0.0
    %v887 = vmin.f32 %v879, 4.0
    %v888 = vmin.f32 %v880, 4.0
    %v889 = vmin.f32 %v881, 4.0
    %v890 = vmin.f32 %v882, 4.0
    %v891 = vmin.f32 %v883, 4.0
    %v892 = vmin.f32 %v884, 4.0
    %v893 = vmin.f32 %v885, 4.0
    %v894 = vmin.f32 %v886, 4.0
    %v895 = vadd.f32 %v887, 0.5
    %v896 = vadd.f32 %v888, 0.5
    %v897 = vadd.f32 %v889, 0.5
    %v898 = vadd.f32 %v890, 0.5
    %v899 = vadd.f32 %v891, 0.5
    %v900 = vadd.f32 %v892, 0.5
    %v901 = vadd.f32 %v893, 0.5
    %v902 = vadd.f32 %v894, 0.5
    %v903 = vfloor.f32 %v895
    %v904 = vfloor.f32 %v896
    %v905 = vfloor.f32 %v897
    %v906 = vfloor.f32 %v898
    %v907 = vfloor.f32 %v899
    %v908 = vfloor.f32 %v900
    %v909 = vfloor.f32 %v901
    %v910 = vfloor.f32 %v902
    %v911 = vmul.f32 %v903, %v137
    %v912 = vmul.f32 %v904, %v137
    %v913 = vmul.f32 %v905, %v137
    %v914 = vmul.f32 %v906, %v137
    %v915 = vmul.f32 %v907, %v137
    %v916 = vmul.f32 %v908, %v137
    %v917 = vmul.f32 %v909, %v137
    %v918 = vmul.f32 %v910, %v137
    %v919 = vpack.c.bf16 %v912, %v911
    %v920 = vpack.c.bf16 %v914, %v913
    %v921 = vpack.c.bf16 %v916, %v915
    %v922 = vpack.c.bf16 %v918, %v917
    %924 = vset.pattern.permute.xlu0 0
    %925 = vperm.xlu0 %924, %v81
    %v926 = vpop.permute.xlu0 %925
    %929 = vset.pattern.permute.xlu0 0
    %930 = vperm.xlu0 %929, %v82
    %v931 = vpop.permute.xlu0 %930
    %934 = vset.pattern.permute.xlu0 0
    %935 = vperm.xlu0 %934, %v83
    %v936 = vpop.permute.xlu0 %935
    %939 = vset.pattern.permute.xlu0 0
    %940 = vperm.xlu0 %939, %v84
    %v941 = vpop.permute.xlu0 %940
    %944 = vset.pattern.permute.xlu0 0
    %945 = vperm.xlu0 %944, %v85
    %v946 = vpop.permute.xlu0 %945
    %949 = vset.pattern.permute.xlu0 0
    %950 = vperm.xlu0 %949, %v86
    %v951 = vpop.permute.xlu0 %950
    %954 = vset.pattern.permute.xlu0 0
    %955 = vperm.xlu0 %954, %v87
    %v956 = vpop.permute.xlu0 %955
    %959 = vset.pattern.permute.xlu0 0
    %960 = vperm.xlu0 %959, %v88
    %v961 = vpop.permute.xlu0 %960
    %v971 = vunpack.c.l.b16 %v73
    %v972 = vunpack.c.l.b16 %v74
    %v973 = vunpack.c.l.b16 %v75
    %v974 = vunpack.c.l.b16 %v76
    %v975 = vunpack.c.l.b16 %v77
    %v976 = vunpack.c.l.b16 %v78
    %v977 = vunpack.c.l.b16 %v79
    %v978 = vunpack.c.l.b16 %v80
    %v979 = vpack.c.b16 %v972, %v971
    %v980 = vpack.c.b16 %v974, %v973
    %v981 = vpack.c.b16 %v976, %v975
    %v982 = vpack.c.b16 %v978, %v977
    %v984 = vsel %vm330, %v979, 0
    %v987 = vsel %vm330, %v980, 0
    %v990 = vsel %vm330, %v981, 0
    %v993 = vsel %vm330, %v982, 0
    %995 = vmatprep.subr.bf16.mxu0 0
    %996 = vmatpush1.bf16.msra.mxu0 %v919
    %997 = vmatprep.subr.bf16.mxu0 0
    %998 = vmatpush1.bf16.msra.mxu0 %v920
    %999 = vmatprep.subr.bf16.mxu0 0
    %1000 = vmatpush1.bf16.msra.mxu0 %v921
    %1001 = vmatprep.subr.bf16.mxu0 0
    %1002 = vmatpush1.bf16.msra.mxu0 %v922
    %1003 = vmatprep.subr.bf16.mxu0 0
    %1004 = vmatpush1.bf16.msra.mxu0 0
    %1005 = vmatprep.subr.bf16.mxu0 0
    %1006 = vmatpush1.bf16.msra.mxu0 0
    %1007 = vmatprep.subr.bf16.mxu0 0
    %1008 = vmatpush1.bf16.msra.mxu0 0
    %1009 = vmatprep.subr.bf16.mxu0 0
    %1010 = vmatpush1.bf16.msra.mxu0 0
    %1011 = vmatprep.subr.bf16.mxu0 0
    %1012 = vmatpush1.bf16.msra.mxu0 0
    %1013 = vmatprep.subr.bf16.mxu0 0
    %1014 = vmatpush1.bf16.msra.mxu0 0
    %1015 = vmatprep.subr.bf16.mxu0 0
    %1016 = vmatpush1.bf16.msra.mxu0 0
    %1017 = vmatprep.subr.bf16.mxu0 0
    %1018 = vmatpush1.bf16.msra.mxu0 0
    %1019 = vmatprep.subr.bf16.mxu0 0
    %1020 = vmatpush1.bf16.msra.mxu0 0
    %1021 = vmatprep.subr.bf16.mxu0 0
    %1022 = vmatpush1.bf16.msra.mxu0 0
    %1023 = vmatprep.subr.bf16.mxu0 0
    %1024 = vmatpush1.bf16.msra.mxu0 0
    %1025 = vmatprep.subr.bf16.mxu0 0
    %1026 = vmatpush1.bf16.msra.mxu0 0
    %1027 = vmatprep.mubr.bf16.mxu0 0
    %1028 = vmatmul.mubr.bf16.gmra.mrb[0].mxu0 %v984
    %v1029 = vpop.f32.mrb[0].mxu0
    %v1030 = vadd.f32 %v926, %v1029
    %v1031 = vpop.f32.mrb[0].mxu0
    %v1032 = vpop.f32.mrb[0].mxu0
    %v1033 = vadd.f32 %v931, %v1032
    %v1034 = vpop.f32.mrb[0].mxu0
    %1035 = vmatprep.mubr.bf16.mxu0 0
    %1036 = vmatmul.mubr.bf16.gmra.mrb[0].mxu0 %v987
    %v1037 = vpop.f32.mrb[0].mxu0
    %v1038 = vadd.f32 %v936, %v1037
    %v1039 = vpop.f32.mrb[0].mxu0
    %v1040 = vpop.f32.mrb[0].mxu0
    %v1041 = vadd.f32 %v941, %v1040
    %v1042 = vpop.f32.mrb[0].mxu0
    %1043 = vmatprep.mubr.bf16.mxu0 0
    %1044 = vmatmul.mubr.bf16.gmra.mrb[0].mxu0 %v990
    %v1045 = vpop.f32.mrb[0].mxu0
    %v1046 = vadd.f32 %v946, %v1045
    %v1047 = vpop.f32.mrb[0].mxu0
    %v1048 = vpop.f32.mrb[0].mxu0
    %v1049 = vadd.f32 %v951, %v1048
    %v1050 = vpop.f32.mrb[0].mxu0
    %1051 = vmatprep.mubr.bf16.mxu0 0
    %1052 = vmatmul.mubr.bf16.gmra.mrb[0].mxu0 %v993
    %v1053 = vpop.f32.mrb[0].mxu0
    %v1054 = vadd.f32 %v956, %v1053
    %v1055 = vpop.f32.mrb[0].mxu0
    %v1056 = vpop.f32.mrb[0].mxu0
    %v1057 = vadd.f32 %v961, %v1056
    %v1058 = vpop.f32.mrb[0].mxu0
    %1059 = vdwg.mxu0
    %1060 = vst [vmem:[#allocation2] sm:$0xff] %v1030
    %1061 = vst [vmem:[#allocation2 + $0x8] sm:$0xff] %v1033
    %1062 = vst [vmem:[#allocation2 + $0x10] sm:$0xff] %v1038
    %1063 = vst [vmem:[#allocation2 + $0x18] sm:$0xff] %v1041
    %1064 = vst [vmem:[#allocation2 + $0x20] sm:$0xff] %v1046
    %1065 = vst [vmem:[#allocation2 + $0x28] sm:$0xff] %v1049
    %1066 = vst [vmem:[#allocation2 + $0x30] sm:$0xff] %v1054
    %1067 = vst [vmem:[#allocation2 + $0x38] sm:$0xff] %v1057
    %s1068 = scalar_lea.vmem %s0, 64
    %v1069 = vld [vmem:[%s1068] sm:$0xff]
    %v1070 = vld [vmem:[%s1068 + $0x8] sm:$0xff]
    %v1071 = vld [vmem:[%s1068 + $0x10] sm:$0xff]
    %v1072 = vld [vmem:[%s1068 + $0x18] sm:$0xff]
    %v1073 = vld [vmem:[%s1068 + $0x20] sm:$0xff]
    %v1074 = vld [vmem:[%s1068 + $0x28] sm:$0xff]
    %v1075 = vld [vmem:[%s1068 + $0x30] sm:$0xff]
    %v1076 = vld [vmem:[%s1068 + $0x38] sm:$0xff]
    %v1077 = vmax.f32 %v1069, 0.0
    %v1078 = vmax.f32 %v1070, 0.0
    %v1079 = vmax.f32 %v1071, 0.0
    %v1080 = vmax.f32 %v1072, 0.0
    %v1081 = vmax.f32 %v1073, 0.0
    %v1082 = vmax.f32 %v1074, 0.0
    %v1083 = vmax.f32 %v1075, 0.0
    %v1084 = vmax.f32 %v1076, 0.0
    %v1085 = vmin.f32 %v1077, 4.0
    %v1086 = vmin.f32 %v1078, 4.0
    %v1087 = vmin.f32 %v1079, 4.0
    %v1088 = vmin.f32 %v1080, 4.0
    %v1089 = vmin.f32 %v1081, 4.0
    %v1090 = vmin.f32 %v1082, 4.0
    %v1091 = vmin.f32 %v1083, 4.0
    %v1092 = vmin.f32 %v1084, 4.0
    %v1093 = vadd.f32 %v1085, 0.5
    %v1094 = vadd.f32 %v1086, 0.5
    %v1095 = vadd.f32 %v1087, 0.5
    %v1096 = vadd.f32 %v1088, 0.5
    %v1097 = vadd.f32 %v1089, 0.5
    %v1098 = vadd.f32 %v1090, 0.5
    %v1099 = vadd.f32 %v1091, 0.5
    %v1100 = vadd.f32 %v1092, 0.5
    %v1101 = vfloor.f32 %v1093
    %v1102 = vfloor.f32 %v1094
    %v1103 = vfloor.f32 %v1095
    %v1104 = vfloor.f32 %v1096
    %v1105 = vfloor.f32 %v1097
    %v1106 = vfloor.f32 %v1098
    %v1107 = vfloor.f32 %v1099
    %v1108 = vfloor.f32 %v1100
    %v1109 = vmul.f32 %v1101, %v137
    %v1110 = vmul.f32 %v1102, %v137
    %v1111 = vmul.f32 %v1103, %v137
    %v1112 = vmul.f32 %v1104, %v137
    %v1113 = vmul.f32 %v1105, %v137
    %v1114 = vmul.f32 %v1106, %v137
    %v1115 = vmul.f32 %v1107, %v137
    %v1116 = vmul.f32 %v1108, %v137
    %v1117 = vpack.c.bf16 %v1110, %v1109
    %v1118 = vpack.c.bf16 %v1112, %v1111
    %v1119 = vpack.c.bf16 %v1114, %v1113
    %v1120 = vpack.c.bf16 %v1116, %v1115
    %1121 = vmatprep.subr.bf16.mxu0 0
    %1122 = vmatpush1.bf16.msra.mxu0 %v1117
    %1123 = vmatprep.subr.bf16.mxu0 0
    %1124 = vmatpush1.bf16.msra.mxu0 %v1118
    %1125 = vmatprep.subr.bf16.mxu0 0
    %1126 = vmatpush1.bf16.msra.mxu0 %v1119
    %1127 = vmatprep.subr.bf16.mxu0 0
    %1128 = vmatpush1.bf16.msra.mxu0 %v1120
    %1129 = vmatprep.subr.bf16.mxu0 0
    %1130 = vmatpush1.bf16.msra.mxu0 0
    %1131 = vmatprep.subr.bf16.mxu0 0
    %1132 = vmatpush1.bf16.msra.mxu0 0
    %1133 = vmatprep.subr.bf16.mxu0 0
    %1134 = vmatpush1.bf16.msra.mxu0 0
    %1135 = vmatprep.subr.bf16.mxu0 0
    %1136 = vmatpush1.bf16.msra.mxu0 0
    %1137 = vmatprep.subr.bf16.mxu0 0
    %1138 = vmatpush1.bf16.msra.mxu0 0
    %1139 = vmatprep.subr.bf16.mxu0 0
    %1140 = vmatpush1.bf16.msra.mxu0 0
    %1141 = vmatprep.subr.bf16.mxu0 0
    %1142 = vmatpush1.bf16.msra.mxu0 0
    %1143 = vmatprep.subr.bf16.mxu0 0
    %1144 = vmatpush1.bf16.msra.mxu0 0
    %1145 = vmatprep.subr.bf16.mxu0 0
    %1146 = vmatpush1.bf16.msra.mxu0 0
    %1147 = vmatprep.subr.bf16.mxu0 0
    %1148 = vmatpush1.bf16.msra.mxu0 0
    %1149 = vmatprep.subr.bf16.mxu0 0
    %1150 = vmatpush1.bf16.msra.mxu0 0
    %1151 = vmatprep.subr.bf16.mxu0 0
    %1152 = vmatpush1.bf16.msra.mxu0 0
    %1153 = vmatprep.mubr.bf16.mxu0 0
    %1154 = vmatmul.mubr.bf16.gmra.mrb[0].mxu0 %v332
    %v1155 = vpop.f32.mrb[0].mxu0
    %v1156 = vadd.f32 %v153, %v1155
    %v1157 = vpop.f32.mrb[0].mxu0
    %v1158 = vpop.f32.mrb[0].mxu0
    %v1159 = vadd.f32 %v158, %v1158
    %v1160 = vpop.f32.mrb[0].mxu0
    %1161 = vmatprep.mubr.bf16.mxu0 0
    %1162 = vmatmul.mubr.bf16.gmra.mrb[0].mxu0 %v335
    %v1163 = vpop.f32.mrb[0].mxu0
    %v1164 = vadd.f32 %v163, %v1163
    %v1165 = vpop.f32.mrb[0].mxu0
    %v1166 = vpop.f32.mrb[0].mxu0
    %v1167 = vadd.f32 %v168, %v1166
    %v1168 = vpop.f32.mrb[0].mxu0
    %1169 = vmatprep.mubr.bf16.mxu0 0
    %1170 = vmatmul.mubr.bf16.gmra.mrb[0].mxu0 %v338
    %v1171 = vpop.f32.mrb[0].mxu0
    %v1172 = vadd.f32 %v173, %v1171
    %v1173 = vpop.f32.mrb[0].mxu0
    %v1174 = vpop.f32.mrb[0].mxu0
    %v1175 = vadd.f32 %v178, %v1174
    %v1176 = vpop.f32.mrb[0].mxu0
    %1177 = vmatprep.mubr.bf16.mxu0 0
    %1178 = vmatmul.mubr.bf16.gmra.mrb[0].mxu0 %v341
    %v1179 = vpop.f32.mrb[0].mxu0
    %v1180 = vadd.f32 %v183, %v1179
    %v1181 = vpop.f32.mrb[0].mxu0
    %v1182 = vpop.f32.mrb[0].mxu0
    %v1183 = vadd.f32 %v188, %v1182
    %v1184 = vpop.f32.mrb[0].mxu0
    %1185 = vmatprep.mubr.bf16.mxu0 0
    %1186 = vmatmul.mubr.bf16.gmra.mrb[0].mxu0 %v344
    %v1187 = vpop.f32.mrb[0].mxu0
    %v1188 = vadd.f32 %v193, %v1187
    %v1189 = vpop.f32.mrb[0].mxu0
    %v1190 = vpop.f32.mrb[0].mxu0
    %v1191 = vadd.f32 %v198, %v1190
    %v1192 = vpop.f32.mrb[0].mxu0
    %1193 = vmatprep.mubr.bf16.mxu0 0
    %1194 = vmatmul.mubr.bf16.gmra.mrb[0].mxu0 %v347
    %v1195 = vpop.f32.mrb[0].mxu0
    %v1196 = vadd.f32 %v203, %v1195
    %v1197 = vpop.f32.mrb[0].mxu0
    %v1198 = vpop.f32.mrb[0].mxu0
    %v1199 = vadd.f32 %v208, %v1198
    %v1200 = vpop.f32.mrb[0].mxu0
    %1201 = vmatprep.mubr.bf16.mxu0 0
    %1202 = vmatmul.mubr.bf16.gmra.mrb[0].mxu0 %v350
    %v1203 = vpop.f32.mrb[0].mxu0
    %v1204 = vadd.f32 %v213, %v1203
    %v1205 = vpop.f32.mrb[0].mxu0
    %v1206 = vpop.f32.mrb[0].mxu0
    %v1207 = vadd.f32 %v218, %v1206
    %v1208 = vpop.f32.mrb[0].mxu0
    %1209 = vmatprep.mubr.bf16.mxu0 0
    %1210 = vmatmul.mubr.bf16.gmra.mrb[0].mxu0 %v353
    %v1211 = vpop.f32.mrb[0].mxu0
    %v1212 = vadd.f32 %v223, %v1211
    %v1213 = vpop.f32.mrb[0].mxu0
    %v1214 = vpop.f32.mrb[0].mxu0
    %v1215 = vadd.f32 %v228, %v1214
    %v1216 = vpop.f32.mrb[0].mxu0
    %1217 = vmatprep.mubr.bf16.mxu0 0
    %1218 = vmatmul.mubr.bf16.gmra.mrb[0].mxu0 %v356
    %v1219 = vpop.f32.mrb[0].mxu0
    %v1220 = vadd.f32 %v233, %v1219
    %v1221 = vpop.f32.mrb[0].mxu0
    %v1222 = vpop.f32.mrb[0].mxu0
    %v1223 = vadd.f32 %v238, %v1222
    %v1224 = vpop.f32.mrb[0].mxu0
    %1225 = vmatprep.mubr.bf16.mxu0 0
    %1226 = vmatmul.mubr.bf16.gmra.mrb[0].mxu0 %v359
    %v1227 = vpop.f32.mrb[0].mxu0
    %v1228 = vadd.f32 %v243, %v1227
    %v1229 = vpop.f32.mrb[0].mxu0
    %v1230 = vpop.f32.mrb[0].mxu0
    %v1231 = vadd.f32 %v248, %v1230
    %v1232 = vpop.f32.mrb[0].mxu0
    %1233 = vmatprep.mubr.bf16.mxu0 0
    %1234 = vmatmul.mubr.bf16.gmra.mrb[0].mxu0 %v362
    %v1235 = vpop.f32.mrb[0].mxu0
    %v1236 = vadd.f32 %v253, %v1235
    %v1237 = vpop.f32.mrb[0].mxu0
    %v1238 = vpop.f32.mrb[0].mxu0
    %v1239 = vadd.f32 %v258, %v1238
    %v1240 = vpop.f32.mrb[0].mxu0
    %1241 = vmatprep.mubr.bf16.mxu0 0
    %1242 = vmatmul.mubr.bf16.gmra.mrb[0].mxu0 %v365
    %v1243 = vpop.f32.mrb[0].mxu0
    %v1244 = vadd.f32 %v263, %v1243
    %v1245 = vpop.f32.mrb[0].mxu0
    %v1246 = vpop.f32.mrb[0].mxu0
    %v1247 = vadd.f32 %v268, %v1246
    %v1248 = vpop.f32.mrb[0].mxu0
    %1249 = vdwg.mxu0
    %v1250 = vmax.f32 %v1156, 0.0
    %v1251 = vmax.f32 %v1159, 0.0
    %v1252 = vmax.f32 %v1164, 0.0
    %v1253 = vmax.f32 %v1167, 0.0
    %v1254 = vmax.f32 %v1172, 0.0
    %v1255 = vmax.f32 %v1175, 0.0
    %v1256 = vmax.f32 %v1180, 0.0
    %v1257 = vmax.f32 %v1183, 0.0
    %v1258 = vmax.f32 %v1188, 0.0
    %v1259 = vmax.f32 %v1191, 0.0
    %v1260 = vmax.f32 %v1196, 0.0
    %v1261 = vmax.f32 %v1199, 0.0
    %v1262 = vmax.f32 %v1204, 0.0
    %v1263 = vmax.f32 %v1207, 0.0
    %v1264 = vmax.f32 %v1212, 0.0
    %v1265 = vmax.f32 %v1215, 0.0
    %v1266 = vmax.f32 %v1220, 0.0
    %v1267 = vmax.f32 %v1223, 0.0
    %v1268 = vmax.f32 %v1228, 0.0
    %v1269 = vmax.f32 %v1231, 0.0
    %v1270 = vmax.f32 %v1236, 0.0
    %v1271 = vmax.f32 %v1239, 0.0
    %v1272 = vmax.f32 %v1244, 0.0
    %v1273 = vmax.f32 %v1247, 0.0
    %v1274 = vmin.f32 %v1250, 4.0
    %v1275 = vmin.f32 %v1251, 4.0
    %v1276 = vmin.f32 %v1252, 4.0
    %v1277 = vmin.f32 %v1253, 4.0
    %v1278 = vmin.f32 %v1254, 4.0
    %v1279 = vmin.f32 %v1255, 4.0
    %v1280 = vmin.f32 %v1256, 4.0
    %v1281 = vmin.f32 %v1257, 4.0
    %v1282 = vmin.f32 %v1258, 4.0
    %v1283 = vmin.f32 %v1259, 4.0
    %v1284 = vmin.f32 %v1260, 4.0
    %v1285 = vmin.f32 %v1261, 4.0
    %v1286 = vmin.f32 %v1262, 4.0
    %v1287 = vmin.f32 %v1263, 4.0
    %v1288 = vmin.f32 %v1264, 4.0
    %v1289 = vmin.f32 %v1265, 4.0
    %v1290 = vmin.f32 %v1266, 4.0
    %v1291 = vmin.f32 %v1267, 4.0
    %v1292 = vmin.f32 %v1268, 4.0
    %v1293 = vmin.f32 %v1269, 4.0
    %v1294 = vmin.f32 %v1270, 4.0
    %v1295 = vmin.f32 %v1271, 4.0
    %v1296 = vmin.f32 %v1272, 4.0
    %v1297 = vmin.f32 %v1273, 4.0
    %v1298 = vadd.f32 %v1274, 0.5
    %v1299 = vadd.f32 %v1275, 0.5
    %v1300 = vadd.f32 %v1276, 0.5
    %v1301 = vadd.f32 %v1277, 0.5
    %v1302 = vadd.f32 %v1278, 0.5
    %v1303 = vadd.f32 %v1279, 0.5
    %v1304 = vadd.f32 %v1280, 0.5
    %v1305 = vadd.f32 %v1281, 0.5
    %v1306 = vadd.f32 %v1282, 0.5
    %v1307 = vadd.f32 %v1283, 0.5
    %v1308 = vadd.f32 %v1284, 0.5
    %v1309 = vadd.f32 %v1285, 0.5
    %v1310 = vadd.f32 %v1286, 0.5
    %v1311 = vadd.f32 %v1287, 0.5
    %v1312 = vadd.f32 %v1288, 0.5
    %v1313 = vadd.f32 %v1289, 0.5
    %v1314 = vadd.f32 %v1290, 0.5
    %v1315 = vadd.f32 %v1291, 0.5
    %v1316 = vadd.f32 %v1292, 0.5
    %v1317 = vadd.f32 %v1293, 0.5
    %v1318 = vadd.f32 %v1294, 0.5
    %v1319 = vadd.f32 %v1295, 0.5
    %v1320 = vadd.f32 %v1296, 0.5
    %v1321 = vadd.f32 %v1297, 0.5
    %v1322 = vfloor.f32 %v1298
    %v1323 = vfloor.f32 %v1299
    %v1324 = vfloor.f32 %v1300
    %v1325 = vfloor.f32 %v1301
    %v1326 = vfloor.f32 %v1302
    %v1327 = vfloor.f32 %v1303
    %v1328 = vfloor.f32 %v1304
    %v1329 = vfloor.f32 %v1305
    %v1330 = vfloor.f32 %v1306
    %v1331 = vfloor.f32 %v1307
    %v1332 = vfloor.f32 %v1308
    %v1333 = vfloor.f32 %v1309
    %v1334 = vfloor.f32 %v1310
    %v1335 = vfloor.f32 %v1311
    %v1336 = vfloor.f32 %v1312
    %v1337 = vfloor.f32 %v1313
    %v1338 = vfloor.f32 %v1314
    %v1339 = vfloor.f32 %v1315
    %v1340 = vfloor.f32 %v1316
    %v1341 = vfloor.f32 %v1317
    %v1342 = vfloor.f32 %v1318
    %v1343 = vfloor.f32 %v1319
    %v1344 = vfloor.f32 %v1320
    %v1345 = vfloor.f32 %v1321
    %v1346 = vmul.f32 %v1322, %v137
    %v1347 = vmul.f32 %v1323, %v137
    %v1348 = vmul.f32 %v1324, %v137
    %v1349 = vmul.f32 %v1325, %v137
    %v1350 = vmul.f32 %v1326, %v137
    %v1351 = vmul.f32 %v1327, %v137
    %v1352 = vmul.f32 %v1328, %v137
    %v1353 = vmul.f32 %v1329, %v137
    %v1354 = vmul.f32 %v1330, %v137
    %v1355 = vmul.f32 %v1331, %v137
    %v1356 = vmul.f32 %v1332, %v137
    %v1357 = vmul.f32 %v1333, %v137
    %v1358 = vmul.f32 %v1334, %v137
    %v1359 = vmul.f32 %v1335, %v137
    %v1360 = vmul.f32 %v1336, %v137
    %v1361 = vmul.f32 %v1337, %v137
    %v1362 = vmul.f32 %v1338, %v137
    %v1363 = vmul.f32 %v1339, %v137
    %v1364 = vmul.f32 %v1340, %v137
    %v1365 = vmul.f32 %v1341, %v137
    %v1366 = vmul.f32 %v1342, %v137
    %v1367 = vmul.f32 %v1343, %v137
    %v1368 = vmul.f32 %v1344, %v137
    %v1369 = vmul.f32 %v1345, %v137
    %v1370 = vpack.c.bf16 %v1347, %v1346
    %v1371 = vpack.c.bf16 %v1349, %v1348
    %v1372 = vpack.c.bf16 %v1351, %v1350
    %v1373 = vpack.c.bf16 %v1353, %v1352
    %v1374 = vpack.c.bf16 %v1355, %v1354
    %v1375 = vpack.c.bf16 %v1357, %v1356
    %v1376 = vpack.c.bf16 %v1359, %v1358
    %v1377 = vpack.c.bf16 %v1361, %v1360
    %v1378 = vpack.c.bf16 %v1363, %v1362
    %v1379 = vpack.c.bf16 %v1365, %v1364
    %v1380 = vpack.c.bf16 %v1367, %v1366
    %v1381 = vpack.c.bf16 %v1369, %v1368
    %1382 = vmatprep.subr.bf16.mxu0 0
    %1383 = vmatpush1.bf16.xpose.msra.mxu0 %v1374
    %1384 = vmatprep.subr.bf16.mxu0 0
    %1385 = vmatpush1.bf16.xpose.msra.mxu0 %v1375
    %1386 = vmatprep.subr.bf16.mxu0 0
    %1387 = vmatpush1.bf16.xpose.msra.mxu0 %v1376
    %1388 = vmatprep.subr.bf16.mxu0 0
    %1389 = vmatpush1.bf16.xpose.msra.mxu0 %v1377
    %1390 = vmatprep.subr.bf16.mxu0 0
    %1391 = vmatpush1.bf16.xpose.msra.mxu0 0
    %1392 = vmatprep.subr.bf16.mxu0 0
    %1393 = vmatpush1.bf16.xpose.msra.mxu0 0
    %1394 = vmatprep.subr.bf16.mxu0 0
    %1395 = vmatpush1.bf16.xpose.msra.mxu0 0
    %1396 = vmatprep.subr.bf16.mxu0 0
    %1397 = vmatpush1.bf16.xpose.msra.mxu0 0
    %1398 = vmatprep.subr.bf16.mxu0 0
    %1399 = vmatpush1.bf16.xpose.msra.mxu0 0
    %1400 = vmatprep.subr.bf16.mxu0 0
    %1401 = vmatpush1.bf16.xpose.msra.mxu0 0
    %1402 = vmatprep.subr.bf16.mxu0 0
    %1403 = vmatpush1.bf16.xpose.msra.mxu0 0
    %1404 = vmatprep.subr.bf16.mxu0 0
    %1405 = vmatpush1.bf16.xpose.msra.mxu0 0
    %1406 = vmatprep.subr.bf16.mxu0 0
    %1407 = vmatpush1.bf16.xpose.msra.mxu0 0
    %1408 = vmatprep.subr.bf16.mxu0 0
    %1409 = vmatpush1.bf16.xpose.msra.mxu0 0
    %1410 = vmatprep.subr.bf16.mxu0 0
    %1411 = vmatpush1.bf16.xpose.msra.mxu0 0
    %1412 = vmatprep.subr.bf16.mxu0 0
    %1413 = vmatpush1.bf16.xpose.msra.mxu0 0
    %1414 = vmatprep.mubr.bf16.mxu0 0
    %1415 = vmatmul.mubr.bf16.gmra.mrb[0].mxu0 %v1378
    %v1416 = vpop.f32.mrb[0].mxu0
    %v1417 = vadd.f32 0.0, %v1416
    %v1418 = vpop.f32.mrb[0].mxu0
    %v1419 = vpop.f32.mrb[0].mxu0
    %v1420 = vadd.f32 0.0, %v1419
    %v1421 = vpop.f32.mrb[0].mxu0
    %1422 = vmatprep.mubr.bf16.mxu0 0
    %1423 = vmatmul.mubr.bf16.gmra.mrb[0].mxu0 %v1379
    %v1424 = vpop.f32.mrb[0].mxu0
    %v1425 = vadd.f32 0.0, %v1424
    %v1426 = vpop.f32.mrb[0].mxu0
    %v1427 = vpop.f32.mrb[0].mxu0
    %v1428 = vadd.f32 0.0, %v1427
    %v1429 = vpop.f32.mrb[0].mxu0
    %1430 = vmatprep.mubr.bf16.mxu0 0
    %1431 = vmatmul.mubr.bf16.gmra.mrb[0].mxu0 %v1380
    %v1432 = vpop.f32.mrb[0].mxu0
    %v1433 = vadd.f32 0.0, %v1432
    %v1434 = vpop.f32.mrb[0].mxu0
    %v1435 = vpop.f32.mrb[0].mxu0
    %v1436 = vadd.f32 0.0, %v1435
    %v1437 = vpop.f32.mrb[0].mxu0
    %1438 = vmatprep.mubr.bf16.mxu0 0
    %1439 = vmatmul.mubr.bf16.gmra.mrb[0].mxu0 %v1381
    %v1440 = vpop.f32.mrb[0].mxu0
    %v1441 = vadd.f32 0.0, %v1440
    %v1442 = vpop.f32.mrb[0].mxu0
    %v1443 = vpop.f32.mrb[0].mxu0
    %v1444 = vadd.f32 0.0, %v1443
    %v1445 = vpop.f32.mrb[0].mxu0
    %1446 = vdwg.mxu0
    %v1447 = vmul.f32 %v1417, %v89
    %v1448 = vmul.f32 %v1420, %v90
    %v1449 = vmul.f32 %v1425, %v91
    %v1450 = vmul.f32 %v1428, %v92
    %v1451 = vmul.f32 %v1433, %v93
    %v1452 = vmul.f32 %v1436, %v94
    %v1453 = vmul.f32 %v1441, %v95
    %v1454 = vmul.f32 %v1444, %v96
    %v1455 = vpack.c.bf16 %v1448, %v1447
    %v1456 = vpack.c.bf16 %v1450, %v1449
    %v1457 = vpack.c.bf16 %v1452, %v1451
    %v1458 = vpack.c.bf16 %v1454, %v1453
    %v1459 = vunpack.c.l.bf16 %v1455
    %v1460 = vunpack.c.h.bf16 %v1455
    %v1461 = vunpack.c.l.bf16 %v1456
    %v1462 = vunpack.c.h.bf16 %v1456
    %v1463 = vunpack.c.l.bf16 %v1457
    %v1464 = vunpack.c.h.bf16 %v1457
    %v1465 = vunpack.c.l.bf16 %v1458
    %v1466 = vunpack.c.h.bf16 %v1458
    %v1467 = vsub.f32 %v1447, %v1459
    %v1468 = vsub.f32 %v1448, %v1460
    %v1469 = vsub.f32 %v1449, %v1461
    %v1470 = vsub.f32 %v1450, %v1462
    %v1471 = vsub.f32 %v1451, %v1463
    %v1472 = vsub.f32 %v1452, %v1464
    %v1473 = vsub.f32 %v1453, %v1465
    %v1474 = vsub.f32 %v1454, %v1466
    %v1475 = vpack.c.bf16 %v1468, %v1467
    %v1476 = vpack.c.bf16 %v1470, %v1469
    %v1477 = vpack.c.bf16 %v1472, %v1471
    %v1478 = vpack.c.bf16 %v1474, %v1473
    %v1480 = vsel %vm330, %v1475, 0
    %v1483 = vsel %vm330, %v1476, 0
    %v1486 = vsel %vm330, %v1477, 0
    %v1489 = vsel %vm330, %v1478, 0
    %1491 = vmatprep.subr.bf16.mxu0 0
    %1492 = vmatpush1.bf16.msra.mxu0 %v1370
    %1493 = vmatprep.subr.bf16.mxu0 0
    %1494 = vmatpush1.bf16.msra.mxu0 %v1371
    %1495 = vmatprep.subr.bf16.mxu0 0
    %1496 = vmatpush1.bf16.msra.mxu0 %v1372
    %1497 = vmatprep.subr.bf16.mxu0 0
    %1498 = vmatpush1.bf16.msra.mxu0 %v1373
    %1499 = vmatprep.subr.bf16.mxu0 0
    %1500 = vmatpush1.bf16.msra.mxu0 0
    %1501 = vmatprep.subr.bf16.mxu0 0
    %1502 = vmatpush1.bf16.msra.mxu0 0
    %1503 = vmatprep.subr.bf16.mxu0 0
    %1504 = vmatpush1.bf16.msra.mxu0 0
    %1505 = vmatprep.subr.bf16.mxu0 0
    %1506 = vmatpush1.bf16.msra.mxu0 0
    %1507 = vmatprep.subr.bf16.mxu0 0
    %1508 = vmatpush1.bf16.msra.mxu0 0
    %1509 = vmatprep.subr.bf16.mxu0 0
    %1510 = vmatpush1.bf16.msra.mxu0 0
    %1511 = vmatprep.subr.bf16.mxu0 0
    %1512 = vmatpush1.bf16.msra.mxu0 0
    %1513 = vmatprep.subr.bf16.mxu0 0
    %1514 = vmatpush1.bf16.msra.mxu0 0
    %1515 = vmatprep.subr.bf16.mxu0 0
    %1516 = vmatpush1.bf16.msra.mxu0 0
    %1517 = vmatprep.subr.bf16.mxu0 0
    %1518 = vmatpush1.bf16.msra.mxu0 0
    %1519 = vmatprep.subr.bf16.mxu0 0
    %1520 = vmatpush1.bf16.msra.mxu0 0
    %1521 = vmatprep.subr.bf16.mxu0 0
    %1522 = vmatpush1.bf16.msra.mxu0 0
    %1523 = vmatprep.mubr.bf16.mxu0 0
    %1524 = vmatmul.mubr.bf16.gmra.mrb[0].mxu0 %v1480
    %v1525 = vpop.f32.mrb[0].mxu0
    %v1526 = vadd.f32 0.0, %v1525
    %v1527 = vpop.f32.mrb[0].mxu0
    %v1528 = vpop.f32.mrb[0].mxu0
    %v1529 = vadd.f32 0.0, %v1528
    %v1530 = vpop.f32.mrb[0].mxu0
    %1531 = vmatprep.mubr.bf16.mxu0 0
    %1532 = vmatmul.mubr.bf16.gmra.mrb[0].mxu0 %v1483
    %v1533 = vpop.f32.mrb[0].mxu0
    %v1534 = vadd.f32 0.0, %v1533
    %v1535 = vpop.f32.mrb[0].mxu0
    %v1536 = vpop.f32.mrb[0].mxu0
    %v1537 = vadd.f32 0.0, %v1536
    %v1538 = vpop.f32.mrb[0].mxu0
    %1539 = vmatprep.mubr.bf16.mxu0 0
    %1540 = vmatmul.mubr.bf16.gmra.mrb[0].mxu0 %v1486
    %v1541 = vpop.f32.mrb[0].mxu0
    %v1542 = vadd.f32 0.0, %v1541
    %v1543 = vpop.f32.mrb[0].mxu0
    %v1544 = vpop.f32.mrb[0].mxu0
    %v1545 = vadd.f32 0.0, %v1544
    %v1546 = vpop.f32.mrb[0].mxu0
    %1547 = vmatprep.mubr.bf16.mxu0 0
    %1548 = vmatmul.mubr.bf16.gmra.mrb[0].mxu0 %v1489
    %v1549 = vpop.f32.mrb[0].mxu0
    %v1550 = vadd.f32 0.0, %v1549
    %v1551 = vpop.f32.mrb[0].mxu0
    %v1552 = vpop.f32.mrb[0].mxu0
    %v1553 = vadd.f32 0.0, %v1552
    %v1554 = vpop.f32.mrb[0].mxu0
    %1555 = vdwg.mxu0
    %v1557 = vsel %vm330, %v1455, 0
    %v1560 = vsel %vm330, %v1456, 0
    %v1563 = vsel %vm330, %v1457, 0
    %v1566 = vsel %vm330, %v1458, 0
    %1568 = vmatprep.subr.bf16.mxu0 0
    %1569 = vmatpush1.bf16.msra.mxu0 %v1370
    %1570 = vmatprep.subr.bf16.mxu0 0
    %1571 = vmatpush1.bf16.msra.mxu0 %v1371
    %1572 = vmatprep.subr.bf16.mxu0 0
    %1573 = vmatpush1.bf16.msra.mxu0 %v1372
    %1574 = vmatprep.subr.bf16.mxu0 0
    %1575 = vmatpush1.bf16.msra.mxu0 %v1373
    %1576 = vmatprep.subr.bf16.mxu0 0
    %1577 = vmatpush1.bf16.msra.mxu0 0
    %1578 = vmatprep.subr.bf16.mxu0 0
    %1579 = vmatpush1.bf16.msra.mxu0 0
    %1580 = vmatprep.subr.bf16.mxu0 0
    %1581 = vmatpush1.bf16.msra.mxu0 0
    %1582 = vmatprep.subr.bf16.mxu0 0
    %1583 = vmatpush1.bf16.msra.mxu0 0
    %1584 = vmatprep.subr.bf16.mxu0 0
    %1585 = vmatpush1.bf16.msra.mxu0 0
    %1586 = vmatprep.subr.bf16.mxu0 0
    %1587 = vmatpush1.bf16.msra.mxu0 0
    %1588 = vmatprep.subr.bf16.mxu0 0
    %1589 = vmatpush1.bf16.msra.mxu0 0
    %1590 = vmatprep.subr.bf16.mxu0 0
    %1591 = vmatpush1.bf16.msra.mxu0 0
    %1592 = vmatprep.subr.bf16.mxu0 0
    %1593 = vmatpush1.bf16.msra.mxu0 0
    %1594 = vmatprep.subr.bf16.mxu0 0
    %1595 = vmatpush1.bf16.msra.mxu0 0
    %1596 = vmatprep.subr.bf16.mxu0 0
    %1597 = vmatpush1.bf16.msra.mxu0 0
    %1598 = vmatprep.subr.bf16.mxu0 0
    %1599 = vmatpush1.bf16.msra.mxu0 0
    %1600 = vmatprep.mubr.bf16.mxu0 0
    %1601 = vmatmul.mubr.bf16.gmra.mrb[0].mxu0 %v1557
    %v1602 = vpop.f32.mrb[0].mxu0
    %v1603 = vadd.f32 %v1526, %v1602
    %v1604 = vpop.f32.mrb[0].mxu0
    %v1605 = vpop.f32.mrb[0].mxu0
    %v1606 = vadd.f32 %v1529, %v1605
    %v1607 = vpop.f32.mrb[0].mxu0
    %1608 = vmatprep.mubr.bf16.mxu0 0
    %1609 = vmatmul.mubr.bf16.gmra.mrb[0].mxu0 %v1560
    %v1610 = vpop.f32.mrb[0].mxu0
    %v1611 = vadd.f32 %v1534, %v1610
    %v1612 = vpop.f32.mrb[0].mxu0
    %v1613 = vpop.f32.mrb[0].mxu0
    %v1614 = vadd.f32 %v1537, %v1613
    %v1615 = vpop.f32.mrb[0].mxu0
    %1616 = vmatprep.mubr.bf16.mxu0 0
    %1617 = vmatmul.mubr.bf16.gmra.mrb[0].mxu0 %v1563
    %v1618 = vpop.f32.mrb[0].mxu0
    %v1619 = vadd.f32 %v1542, %v1618
    %v1620 = vpop.f32.mrb[0].mxu0
    %v1621 = vpop.f32.mrb[0].mxu0
    %v1622 = vadd.f32 %v1545, %v1621
    %v1623 = vpop.f32.mrb[0].mxu0
    %1624 = vmatprep.mubr.bf16.mxu0 0
    %1625 = vmatmul.mubr.bf16.gmra.mrb[0].mxu0 %v1566
    %v1626 = vpop.f32.mrb[0].mxu0
    %v1627 = vadd.f32 %v1550, %v1626
    %v1628 = vpop.f32.mrb[0].mxu0
    %v1629 = vpop.f32.mrb[0].mxu0
    %v1630 = vadd.f32 %v1553, %v1629
    %v1631 = vpop.f32.mrb[0].mxu0
    %1632 = vdwg.mxu0
    %v1633 = vmax.f32 %v1603, 0.0
    %v1634 = vmax.f32 %v1606, 0.0
    %v1635 = vmax.f32 %v1611, 0.0
    %v1636 = vmax.f32 %v1614, 0.0
    %v1637 = vmax.f32 %v1619, 0.0
    %v1638 = vmax.f32 %v1622, 0.0
    %v1639 = vmax.f32 %v1627, 0.0
    %v1640 = vmax.f32 %v1630, 0.0
    %v1641 = vmin.f32 %v1633, 4.0
    %v1642 = vmin.f32 %v1634, 4.0
    %v1643 = vmin.f32 %v1635, 4.0
    %v1644 = vmin.f32 %v1636, 4.0
    %v1645 = vmin.f32 %v1637, 4.0
    %v1646 = vmin.f32 %v1638, 4.0
    %v1647 = vmin.f32 %v1639, 4.0
    %v1648 = vmin.f32 %v1640, 4.0
    %v1649 = vadd.f32 %v1641, 0.5
    %v1650 = vadd.f32 %v1642, 0.5
    %v1651 = vadd.f32 %v1643, 0.5
    %v1652 = vadd.f32 %v1644, 0.5
    %v1653 = vadd.f32 %v1645, 0.5
    %v1654 = vadd.f32 %v1646, 0.5
    %v1655 = vadd.f32 %v1647, 0.5
    %v1656 = vadd.f32 %v1648, 0.5
    %v1657 = vfloor.f32 %v1649
    %v1658 = vfloor.f32 %v1650
    %v1659 = vfloor.f32 %v1651
    %v1660 = vfloor.f32 %v1652
    %v1661 = vfloor.f32 %v1653
    %v1662 = vfloor.f32 %v1654
    %v1663 = vfloor.f32 %v1655
    %v1664 = vfloor.f32 %v1656
    %v1665 = vmul.f32 %v1657, %v137
    %v1666 = vmul.f32 %v1658, %v137
    %v1667 = vmul.f32 %v1659, %v137
    %v1668 = vmul.f32 %v1660, %v137
    %v1669 = vmul.f32 %v1661, %v137
    %v1670 = vmul.f32 %v1662, %v137
    %v1671 = vmul.f32 %v1663, %v137
    %v1672 = vmul.f32 %v1664, %v137
    %v1673 = vpack.c.bf16 %v1666, %v1665
    %v1674 = vpack.c.bf16 %v1668, %v1667
    %v1675 = vpack.c.bf16 %v1670, %v1669
    %v1676 = vpack.c.bf16 %v1672, %v1671
    %1677 = vmatprep.subr.bf16.mxu0 0
    %1678 = vmatpush1.bf16.msra.mxu0 %v1673
    %1679 = vmatprep.subr.bf16.mxu0 0
    %1680 = vmatpush1.bf16.msra.mxu0 %v1674
    %1681 = vmatprep.subr.bf16.mxu0 0
    %1682 = vmatpush1.bf16.msra.mxu0 %v1675
    %1683 = vmatprep.subr.bf16.mxu0 0
    %1684 = vmatpush1.bf16.msra.mxu0 %v1676
    %1685 = vmatprep.subr.bf16.mxu0 0
    %1686 = vmatpush1.bf16.msra.mxu0 0
    %1687 = vmatprep.subr.bf16.mxu0 0
    %1688 = vmatpush1.bf16.msra.mxu0 0
    %1689 = vmatprep.subr.bf16.mxu0 0
    %1690 = vmatpush1.bf16.msra.mxu0 0
    %1691 = vmatprep.subr.bf16.mxu0 0
    %1692 = vmatpush1.bf16.msra.mxu0 0
    %1693 = vmatprep.subr.bf16.mxu0 0
    %1694 = vmatpush1.bf16.msra.mxu0 0
    %1695 = vmatprep.subr.bf16.mxu0 0
    %1696 = vmatpush1.bf16.msra.mxu0 0
    %1697 = vmatprep.subr.bf16.mxu0 0
    %1698 = vmatpush1.bf16.msra.mxu0 0
    %1699 = vmatprep.subr.bf16.mxu0 0
    %1700 = vmatpush1.bf16.msra.mxu0 0
    %1701 = vmatprep.subr.bf16.mxu0 0
    %1702 = vmatpush1.bf16.msra.mxu0 0
    %1703 = vmatprep.subr.bf16.mxu0 0
    %1704 = vmatpush1.bf16.msra.mxu0 0
    %1705 = vmatprep.subr.bf16.mxu0 0
    %1706 = vmatpush1.bf16.msra.mxu0 0
    %1707 = vmatprep.subr.bf16.mxu0 0
    %1708 = vmatpush1.bf16.msra.mxu0 0
    %1709 = vmatprep.mubr.bf16.mxu0 0
    %1710 = vmatmul.mubr.bf16.gmra.mrb[0].mxu0 %v984
    %v1711 = vpop.f32.mrb[0].mxu0
    %v1712 = vadd.f32 %v926, %v1711
    %v1713 = vpop.f32.mrb[0].mxu0
    %v1714 = vpop.f32.mrb[0].mxu0
    %v1715 = vadd.f32 %v931, %v1714
    %v1716 = vpop.f32.mrb[0].mxu0
    %1717 = vmatprep.mubr.bf16.mxu0 0
    %1718 = vmatmul.mubr.bf16.gmra.mrb[0].mxu0 %v987
    %v1719 = vpop.f32.mrb[0].mxu0
    %v1720 = vadd.f32 %v936, %v1719
    %v1721 = vpop.f32.mrb[0].mxu0
    %v1722 = vpop.f32.mrb[0].mxu0
    %v1723 = vadd.f32 %v941, %v1722
    %v1724 = vpop.f32.mrb[0].mxu0
    %1725 = vmatprep.mubr.bf16.mxu0 0
    %1726 = vmatmul.mubr.bf16.gmra.mrb[0].mxu0 %v990
    %v1727 = vpop.f32.mrb[0].mxu0
    %v1728 = vadd.f32 %v946, %v1727
    %v1729 = vpop.f32.mrb[0].mxu0
    %v1730 = vpop.f32.mrb[0].mxu0
    %v1731 = vadd.f32 %v951, %v1730
    %v1732 = vpop.f32.mrb[0].mxu0
    %1733 = vmatprep.mubr.bf16.mxu0 0
    %1734 = vmatmul.mubr.bf16.gmra.mrb[0].mxu0 %v993
    %v1735 = vpop.f32.mrb[0].mxu0
    %v1736 = vadd.f32 %v956, %v1735
    %v1737 = vpop.f32.mrb[0].mxu0
    %v1738 = vpop.f32.mrb[0].mxu0
    %v1739 = vadd.f32 %v961, %v1738
    %v1740 = vpop.f32.mrb[0].mxu0
    %1741 = vdwg.mxu0
    %s1742 = scalar_lea.vmem [#allocation2], 64
    %1743 = vst [vmem:[%s1742] sm:$0xff] %v1712
    %1744 = vst [vmem:[%s1742 + $0x8] sm:$0xff] %v1715
    %1745 = vst [vmem:[%s1742 + $0x10] sm:$0xff] %v1720
    %1746 = vst [vmem:[%s1742 + $0x18] sm:$0xff] %v1723
    %1747 = vst [vmem:[%s1742 + $0x20] sm:$0xff] %v1728
    %1748 = vst [vmem:[%s1742 + $0x28] sm:$0xff] %v1731
    %1749 = vst [vmem:[%s1742 + $0x30] sm:$0xff] %v1736
    %1750 = vst [vmem:[%s1742 + $0x38] sm:$0xff] %v1739
    %s1751 = scalar_lea.vmem %s0, 128
    %v1752 = vld [vmem:[%s1751] sm:$0xff]
    %v1753 = vld [vmem:[%s1751 + $0x8] sm:$0xff]
    %v1754 = vld [vmem:[%s1751 + $0x10] sm:$0xff]
    %v1755 = vld [vmem:[%s1751 + $0x18] sm:$0xff]
    %v1756 = vld [vmem:[%s1751 + $0x20] sm:$0xff]
    %v1757 = vld [vmem:[%s1751 + $0x28] sm:$0xff]
    %v1758 = vld [vmem:[%s1751 + $0x30] sm:$0xff]
    %v1759 = vld [vmem:[%s1751 + $0x38] sm:$0xff]
    %v1760 = vmax.f32 %v1752, 0.0
    %v1761 = vmax.f32 %v1753, 0.0
    %v1762 = vmax.f32 %v1754, 0.0
    %v1763 = vmax.f32 %v1755, 0.0
    %v1764 = vmax.f32 %v1756, 0.0
    %v1765 = vmax.f32 %v1757, 0.0
    %v1766 = vmax.f32 %v1758, 0.0
    %v1767 = vmax.f32 %v1759, 0.0
    %v1768 = vmin.f32 %v1760, 4.0
    %v1769 = vmin.f32 %v1761, 4.0
    %v1770 = vmin.f32 %v1762, 4.0
    %v1771 = vmin.f32 %v1763, 4.0
    %v1772 = vmin.f32 %v1764, 4.0
    %v1773 = vmin.f32 %v1765, 4.0
    %v1774 = vmin.f32 %v1766, 4.0
    %v1775 = vmin.f32 %v1767, 4.0
    %v1776 = vadd.f32 %v1768, 0.5
    %v1777 = vadd.f32 %v1769, 0.5
    %v1778 = vadd.f32 %v1770, 0.5
    %v1779 = vadd.f32 %v1771, 0.5
    %v1780 = vadd.f32 %v1772, 0.5
    %v1781 = vadd.f32 %v1773, 0.5
    %v1782 = vadd.f32 %v1774, 0.5
    %v1783 = vadd.f32 %v1775, 0.5
    %v1784 = vfloor.f32 %v1776
    %v1785 = vfloor.f32 %v1777
    %v1786 = vfloor.f32 %v1778
    %v1787 = vfloor.f32 %v1779
    %v1788 = vfloor.f32 %v1780
    %v1789 = vfloor.f32 %v1781
    %v1790 = vfloor.f32 %v1782
    %v1791 = vfloor.f32 %v1783
    %v1792 = vmul.f32 %v1784, %v137
    %v1793 = vmul.f32 %v1785, %v137
    %v1794 = vmul.f32 %v1786, %v137
    %v1795 = vmul.f32 %v1787, %v137
    %v1796 = vmul.f32 %v1788, %v137
    %v1797 = vmul.f32 %v1789, %v137
    %v1798 = vmul.f32 %v1790, %v137
    %v1799 = vmul.f32 %v1791, %v137
    %v1800 = vpack.c.bf16 %v1793, %v1792
    %v1801 = vpack.c.bf16 %v1795, %v1794
    %v1802 = vpack.c.bf16 %v1797, %v1796
    %v1803 = vpack.c.bf16 %v1799, %v1798
    %1804 = vmatprep.subr.bf16.mxu0 0
    %1805 = vmatpush1.bf16.msra.mxu0 %v1800
    %1806 = vmatprep.subr.bf16.mxu0 0
    %1807 = vmatpush1.bf16.msra.mxu0 %v1801
    %1808 = vmatprep.subr.bf16.mxu0 0
    %1809 = vmatpush1.bf16.msra.mxu0 %v1802
    %1810 = vmatprep.subr.bf16.mxu0 0
    %1811 = vmatpush1.bf16.msra.mxu0 %v1803
    %1812 = vmatprep.subr.bf16.mxu0 0
    %1813 = vmatpush1.bf16.msra.mxu0 0
    %1814 = vmatprep.subr.bf16.mxu0 0
    %1815 = vmatpush1.bf16.msra.mxu0 0
    %1816 = vmatprep.subr.bf16.mxu0 0
    %1817 = vmatpush1.bf16.msra.mxu0 0
    %1818 = vmatprep.subr.bf16.mxu0 0
    %1819 = vmatpush1.bf16.msra.mxu0 0
    %1820 = vmatprep.subr.bf16.mxu0 0
    %1821 = vmatpush1.bf16.msra.mxu0 0
    %1822 = vmatprep.subr.bf16.mxu0 0
    %1823 = vmatpush1.bf16.msra.mxu0 0
    %1824 = vmatprep.subr.bf16.mxu0 0
    %1825 = vmatpush1.bf16.msra.mxu0 0
    %1826 = vmatprep.subr.bf16.mxu0 0
    %1827 = vmatpush1.bf16.msra.mxu0 0
    %1828 = vmatprep.subr.bf16.mxu0 0
    %1829 = vmatpush1.bf16.msra.mxu0 0
    %1830 = vmatprep.subr.bf16.mxu0 0
    %1831 = vmatpush1.bf16.msra.mxu0 0
    %1832 = vmatprep.subr.bf16.mxu0 0
    %1833 = vmatpush1.bf16.msra.mxu0 0
    %1834 = vmatprep.subr.bf16.mxu0 0
    %1835 = vmatpush1.bf16.msra.mxu0 0
    %1836 = vmatprep.mubr.bf16.mxu0 0
    %1837 = vmatmul.mubr.bf16.gmra.mrb[0].mxu0 %v332
    %v1838 = vpop.f32.mrb[0].mxu0
    %v1839 = vadd.f32 %v153, %v1838
    %v1840 = vpop.f32.mrb[0].mxu0
    %v1841 = vpop.f32.mrb[0].mxu0
    %v1842 = vadd.f32 %v158, %v1841
    %v1843 = vpop.f32.mrb[0].mxu0
    %1844 = vmatprep.mubr.bf16.mxu0 0
    %1845 = vmatmul.mubr.bf16.gmra.mrb[0].mxu0 %v335
    %v1846 = vpop.f32.mrb[0].mxu0
    %v1847 = vadd.f32 %v163, %v1846
    %v1848 = vpop.f32.mrb[0].mxu0
    %v1849 = vpop.f32.mrb[0].mxu0
    %v1850 = vadd.f32 %v168, %v1849
    %v1851 = vpop.f32.mrb[0].mxu0
    %1852 = vmatprep.mubr.bf16.mxu0 0
    %1853 = vmatmul.mubr.bf16.gmra.mrb[0].mxu0 %v338
    %v1854 = vpop.f32.mrb[0].mxu0
    %v1855 = vadd.f32 %v173, %v1854
    %v1856 = vpop.f32.mrb[0].mxu0
    %v1857 = vpop.f32.mrb[0].mxu0
    %v1858 = vadd.f32 %v178, %v1857
    %v1859 = vpop.f32.mrb[0].mxu0
    %1860 = vmatprep.mubr.bf16.mxu0 0
    %1861 = vmatmul.mubr.bf16.gmra.mrb[0].mxu0 %v341
    %v1862 = vpop.f32.mrb[0].mxu0
    %v1863 = vadd.f32 %v183, %v1862
    %v1864 = vpop.f32.mrb[0].mxu0
    %v1865 = vpop.f32.mrb[0].mxu0
    %v1866 = vadd.f32 %v188, %v1865
    %v1867 = vpop.f32.mrb[0].mxu0
    %1868 = vmatprep.mubr.bf16.mxu0 0
    %1869 = vmatmul.mubr.bf16.gmra.mrb[0].mxu0 %v344
    %v1870 = vpop.f32.mrb[0].mxu0
    %v1871 = vadd.f32 %v193, %v1870
    %v1872 = vpop.f32.mrb[0].mxu0
    %v1873 = vpop.f32.mrb[0].mxu0
    %v1874 = vadd.f32 %v198, %v1873
    %v1875 = vpop.f32.mrb[0].mxu0
    %1876 = vmatprep.mubr.bf16.mxu0 0
    %1877 = vmatmul.mubr.bf16.gmra.mrb[0].mxu0 %v347
    %v1878 = vpop.f32.mrb[0].mxu0
    %v1879 = vadd.f32 %v203, %v1878
    %v1880 = vpop.f32.mrb[0].mxu0
    %v1881 = vpop.f32.mrb[0].mxu0
    %v1882 = vadd.f32 %v208, %v1881
    %v1883 = vpop.f32.mrb[0].mxu0
    %1884 = vmatprep.mubr.bf16.mxu0 0
    %1885 = vmatmul.mubr.bf16.gmra.mrb[0].mxu0 %v350
    %v1886 = vpop.f32.mrb[0].mxu0
    %v1887 = vadd.f32 %v213, %v1886
    %v1888 = vpop.f32.mrb[0].mxu0
    %v1889 = vpop.f32.mrb[0].mxu0
    %v1890 = vadd.f32 %v218, %v1889
    %v1891 = vpop.f32.mrb[0].mxu0
    %1892 = vmatprep.mubr.bf16.mxu0 0
    %1893 = vmatmul.mubr.bf16.gmra.mrb[0].mxu0 %v353
    %v1894 = vpop.f32.mrb[0].mxu0
    %v1895 = vadd.f32 %v223, %v1894
    %v1896 = vpop.f32.mrb[0].mxu0
    %v1897 = vpop.f32.mrb[0].mxu0
    %v1898 = vadd.f32 %v228, %v1897
    %v1899 = vpop.f32.mrb[0].mxu0
    %1900 = vmatprep.mubr.bf16.mxu0 0
    %1901 = vmatmul.mubr.bf16.gmra.mrb[0].mxu0 %v356
    %v1902 = vpop.f32.mrb[0].mxu0
    %v1903 = vadd.f32 %v233, %v1902
    %v1904 = vpop.f32.mrb[0].mxu0
    %v1905 = vpop.f32.mrb[0].mxu0
    %v1906 = vadd.f32 %v238, %v1905
    %v1907 = vpop.f32.mrb[0].mxu0
    %1908 = vmatprep.mubr.bf16.mxu0 0
    %1909 = vmatmul.mubr.bf16.gmra.mrb[0].mxu0 %v359
    %v1910 = vpop.f32.mrb[0].mxu0
    %v1911 = vadd.f32 %v243, %v1910
    %v1912 = vpop.f32.mrb[0].mxu0
    %v1913 = vpop.f32.mrb[0].mxu0
    %v1914 = vadd.f32 %v248, %v1913
    %v1915 = vpop.f32.mrb[0].mxu0
    %1916 = vmatprep.mubr.bf16.mxu0 0
    %1917 = vmatmul.mubr.bf16.gmra.mrb[0].mxu0 %v362
    %v1918 = vpop.f32.mrb[0].mxu0
    %v1919 = vadd.f32 %v253, %v1918
    %v1920 = vpop.f32.mrb[0].mxu0
    %v1921 = vpop.f32.mrb[0].mxu0
    %v1922 = vadd.f32 %v258, %v1921
    %v1923 = vpop.f32.mrb[0].mxu0
    %1924 = vmatprep.mubr.bf16.mxu0 0
    %1925 = vmatmul.mubr.bf16.gmra.mrb[0].mxu0 %v365
    %v1926 = vpop.f32.mrb[0].mxu0
    %v1927 = vadd.f32 %v263, %v1926
    %v1928 = vpop.f32.mrb[0].mxu0
    %v1929 = vpop.f32.mrb[0].mxu0
    %v1930 = vadd.f32 %v268, %v1929
    %v1931 = vpop.f32.mrb[0].mxu0
    %1932 = vdwg.mxu0
    %v1933 = vmax.f32 %v1839, 0.0
    %v1934 = vmax.f32 %v1842, 0.0
    %v1935 = vmax.f32 %v1847, 0.0
    %v1936 = vmax.f32 %v1850, 0.0
    %v1937 = vmax.f32 %v1855, 0.0
    %v1938 = vmax.f32 %v1858, 0.0
    %v1939 = vmax.f32 %v1863, 0.0
    %v1940 = vmax.f32 %v1866, 0.0
    %v1941 = vmax.f32 %v1871, 0.0
    %v1942 = vmax.f32 %v1874, 0.0
    %v1943 = vmax.f32 %v1879, 0.0
    %v1944 = vmax.f32 %v1882, 0.0
    %v1945 = vmax.f32 %v1887, 0.0
    %v1946 = vmax.f32 %v1890, 0.0
    %v1947 = vmax.f32 %v1895, 0.0
    %v1948 = vmax.f32 %v1898, 0.0
    %v1949 = vmax.f32 %v1903, 0.0
    %v1950 = vmax.f32 %v1906, 0.0
    %v1951 = vmax.f32 %v1911, 0.0
    %v1952 = vmax.f32 %v1914, 0.0
    %v1953 = vmax.f32 %v1919, 0.0
    %v1954 = vmax.f32 %v1922, 0.0
    %v1955 = vmax.f32 %v1927, 0.0
    %v1956 = vmax.f32 %v1930, 0.0
    %v1957 = vmin.f32 %v1933, 4.0
    %v1958 = vmin.f32 %v1934, 4.0
    %v1959 = vmin.f32 %v1935, 4.0
    %v1960 = vmin.f32 %v1936, 4.0
    %v1961 = vmin.f32 %v1937, 4.0
    %v1962 = vmin.f32 %v1938, 4.0
    %v1963 = vmin.f32 %v1939, 4.0
    %v1964 = vmin.f32 %v1940, 4.0
    %v1965 = vmin.f32 %v1941, 4.0
    %v1966 = vmin.f32 %v1942, 4.0
    %v1967 = vmin.f32 %v1943, 4.0
    %v1968 = vmin.f32 %v1944, 4.0
    %v1969 = vmin.f32 %v1945, 4.0
    %v1970 = vmin.f32 %v1946, 4.0
    %v1971 = vmin.f32 %v1947, 4.0
    %v1972 = vmin.f32 %v1948, 4.0
    %v1973 = vmin.f32 %v1949, 4.0
    %v1974 = vmin.f32 %v1950, 4.0
    %v1975 = vmin.f32 %v1951, 4.0
    %v1976 = vmin.f32 %v1952, 4.0
    %v1977 = vmin.f32 %v1953, 4.0
    %v1978 = vmin.f32 %v1954, 4.0
    %v1979 = vmin.f32 %v1955, 4.0
    %v1980 = vmin.f32 %v1956, 4.0
    %v1981 = vadd.f32 %v1957, 0.5
    %v1982 = vadd.f32 %v1958, 0.5
    %v1983 = vadd.f32 %v1959, 0.5
    %v1984 = vadd.f32 %v1960, 0.5
    %v1985 = vadd.f32 %v1961, 0.5
    %v1986 = vadd.f32 %v1962, 0.5
    %v1987 = vadd.f32 %v1963, 0.5
    %v1988 = vadd.f32 %v1964, 0.5
    %v1989 = vadd.f32 %v1965, 0.5
    %v1990 = vadd.f32 %v1966, 0.5
    %v1991 = vadd.f32 %v1967, 0.5
    %v1992 = vadd.f32 %v1968, 0.5
    %v1993 = vadd.f32 %v1969, 0.5
    %v1994 = vadd.f32 %v1970, 0.5
    %v1995 = vadd.f32 %v1971, 0.5
    %v1996 = vadd.f32 %v1972, 0.5
    %v1997 = vadd.f32 %v1973, 0.5
    %v1998 = vadd.f32 %v1974, 0.5
    %v1999 = vadd.f32 %v1975, 0.5
    %v2000 = vadd.f32 %v1976, 0.5
    %v2001 = vadd.f32 %v1977, 0.5
    %v2002 = vadd.f32 %v1978, 0.5
    %v2003 = vadd.f32 %v1979, 0.5
    %v2004 = vadd.f32 %v1980, 0.5
    %v2005 = vfloor.f32 %v1981
    %v2006 = vfloor.f32 %v1982
    %v2007 = vfloor.f32 %v1983
    %v2008 = vfloor.f32 %v1984
    %v2009 = vfloor.f32 %v1985
    %v2010 = vfloor.f32 %v1986
    %v2011 = vfloor.f32 %v1987
    %v2012 = vfloor.f32 %v1988
    %v2013 = vfloor.f32 %v1989
    %v2014 = vfloor.f32 %v1990
    %v2015 = vfloor.f32 %v1991
    %v2016 = vfloor.f32 %v1992
    %v2017 = vfloor.f32 %v1993
    %v2018 = vfloor.f32 %v1994
    %v2019 = vfloor.f32 %v1995
    %v2020 = vfloor.f32 %v1996
    %v2021 = vfloor.f32 %v1997
    %v2022 = vfloor.f32 %v1998
    %v2023 = vfloor.f32 %v1999
    %v2024 = vfloor.f32 %v2000
    %v2025 = vfloor.f32 %v2001
    %v2026 = vfloor.f32 %v2002
    %v2027 = vfloor.f32 %v2003
    %v2028 = vfloor.f32 %v2004
    %v2029 = vmul.f32 %v2005, %v137
    %v2030 = vmul.f32 %v2006, %v137
    %v2031 = vmul.f32 %v2007, %v137
    %v2032 = vmul.f32 %v2008, %v137
    %v2033 = vmul.f32 %v2009, %v137
    %v2034 = vmul.f32 %v2010, %v137
    %v2035 = vmul.f32 %v2011, %v137
    %v2036 = vmul.f32 %v2012, %v137
    %v2037 = vmul.f32 %v2013, %v137
    %v2038 = vmul.f32 %v2014, %v137
    %v2039 = vmul.f32 %v2015, %v137
    %v2040 = vmul.f32 %v2016, %v137
    %v2041 = vmul.f32 %v2017, %v137
    %v2042 = vmul.f32 %v2018, %v137
    %v2043 = vmul.f32 %v2019, %v137
    %v2044 = vmul.f32 %v2020, %v137
    %v2045 = vmul.f32 %v2021, %v137
    %v2046 = vmul.f32 %v2022, %v137
    %v2047 = vmul.f32 %v2023, %v137
    %v2048 = vmul.f32 %v2024, %v137
    %v2049 = vmul.f32 %v2025, %v137
    %v2050 = vmul.f32 %v2026, %v137
    %v2051 = vmul.f32 %v2027, %v137
    %v2052 = vmul.f32 %v2028, %v137
    %v2053 = vpack.c.bf16 %v2030, %v2029
    %v2054 = vpack.c.bf16 %v2032, %v2031
    %v2055 = vpack.c.bf16 %v2034, %v2033
    %v2056 = vpack.c.bf16 %v2036, %v2035
    %v2057 = vpack.c.bf16 %v2038, %v2037
    %v2058 = vpack.c.bf16 %v2040, %v2039
    %v2059 = vpack.c.bf16 %v2042, %v2041
    %v2060 = vpack.c.bf16 %v2044, %v2043
    %v2061 = vpack.c.bf16 %v2046, %v2045
    %v2062 = vpack.c.bf16 %v2048, %v2047
    %v2063 = vpack.c.bf16 %v2050, %v2049
    %v2064 = vpack.c.bf16 %v2052, %v2051
    %2065 = vmatprep.subr.bf16.mxu0 0
    %2066 = vmatpush1.bf16.xpose.msra.mxu0 %v2057
    %2067 = vmatprep.subr.bf16.mxu0 0
    %2068 = vmatpush1.bf16.xpose.msra.mxu0 %v2058
    %2069 = vmatprep.subr.bf16.mxu0 0
    %2070 = vmatpush1.bf16.xpose.msra.mxu0 %v2059
    %2071 = vmatprep.subr.bf16.mxu0 0
    %2072 = vmatpush1.bf16.xpose.msra.mxu0 %v2060
    %2073 = vmatprep.subr.bf16.mxu0 0
    %2074 = vmatpush1.bf16.xpose.msra.mxu0 0
    %2075 = vmatprep.subr.bf16.mxu0 0
    %2076 = vmatpush1.bf16.xpose.msra.mxu0 0
    %2077 = vmatprep.subr.bf16.mxu0 0
    %2078 = vmatpush1.bf16.xpose.msra.mxu0 0
    %2079 = vmatprep.subr.bf16.mxu0 0
    %2080 = vmatpush1.bf16.xpose.msra.mxu0 0
    %2081 = vmatprep.subr.bf16.mxu0 0
    %2082 = vmatpush1.bf16.xpose.msra.mxu0 0
    %2083 = vmatprep.subr.bf16.mxu0 0
    %2084 = vmatpush1.bf16.xpose.msra.mxu0 0
    %2085 = vmatprep.subr.bf16.mxu0 0
    %2086 = vmatpush1.bf16.xpose.msra.mxu0 0
    %2087 = vmatprep.subr.bf16.mxu0 0
    %2088 = vmatpush1.bf16.xpose.msra.mxu0 0
    %2089 = vmatprep.subr.bf16.mxu0 0
    %2090 = vmatpush1.bf16.xpose.msra.mxu0 0
    %2091 = vmatprep.subr.bf16.mxu0 0
    %2092 = vmatpush1.bf16.xpose.msra.mxu0 0
    %2093 = vmatprep.subr.bf16.mxu0 0
    %2094 = vmatpush1.bf16.xpose.msra.mxu0 0
    %2095 = vmatprep.subr.bf16.mxu0 0
    %2096 = vmatpush1.bf16.xpose.msra.mxu0 0
    %2097 = vmatprep.mubr.bf16.mxu0 0
    %2098 = vmatmul.mubr.bf16.gmra.mrb[0].mxu0 %v2061
    %v2099 = vpop.f32.mrb[0].mxu0
    %v2100 = vadd.f32 0.0, %v2099
    %v2101 = vpop.f32.mrb[0].mxu0
    %v2102 = vpop.f32.mrb[0].mxu0
    %v2103 = vadd.f32 0.0, %v2102
    %v2104 = vpop.f32.mrb[0].mxu0
    %2105 = vmatprep.mubr.bf16.mxu0 0
    %2106 = vmatmul.mubr.bf16.gmra.mrb[0].mxu0 %v2062
    %v2107 = vpop.f32.mrb[0].mxu0
    %v2108 = vadd.f32 0.0, %v2107
    %v2109 = vpop.f32.mrb[0].mxu0
    %v2110 = vpop.f32.mrb[0].mxu0
    %v2111 = vadd.f32 0.0, %v2110
    %v2112 = vpop.f32.mrb[0].mxu0
    %2113 = vmatprep.mubr.bf16.mxu0 0
    %2114 = vmatmul.mubr.bf16.gmra.mrb[0].mxu0 %v2063
    %v2115 = vpop.f32.mrb[0].mxu0
    %v2116 = vadd.f32 0.0, %v2115
    %v2117 = vpop.f32.mrb[0].mxu0
    %v2118 = vpop.f32.mrb[0].mxu0
    %v2119 = vadd.f32 0.0, %v2118
    %v2120 = vpop.f32.mrb[0].mxu0
    %2121 = vmatprep.mubr.bf16.mxu0 0
    %2122 = vmatmul.mubr.bf16.gmra.mrb[0].mxu0 %v2064
    %v2123 = vpop.f32.mrb[0].mxu0
    %v2124 = vadd.f32 0.0, %v2123
    %v2125 = vpop.f32.mrb[0].mxu0
    %v2126 = vpop.f32.mrb[0].mxu0
    %v2127 = vadd.f32 0.0, %v2126
    %v2128 = vpop.f32.mrb[0].mxu0
    %2129 = vdwg.mxu0
    %v2130 = vmul.f32 %v2100, %v89
    %v2131 = vmul.f32 %v2103, %v90
    %v2132 = vmul.f32 %v2108, %v91
    %v2133 = vmul.f32 %v2111, %v92
    %v2134 = vmul.f32 %v2116, %v93
    %v2135 = vmul.f32 %v2119, %v94
    %v2136 = vmul.f32 %v2124, %v95
    %v2137 = vmul.f32 %v2127, %v96
    %v2138 = vpack.c.bf16 %v2131, %v2130
    %v2139 = vpack.c.bf16 %v2133, %v2132
    %v2140 = vpack.c.bf16 %v2135, %v2134
    %v2141 = vpack.c.bf16 %v2137, %v2136
    %v2142 = vunpack.c.l.bf16 %v2138
    %v2143 = vunpack.c.h.bf16 %v2138
    %v2144 = vunpack.c.l.bf16 %v2139
    %v2145 = vunpack.c.h.bf16 %v2139
    %v2146 = vunpack.c.l.bf16 %v2140
    %v2147 = vunpack.c.h.bf16 %v2140
    %v2148 = vunpack.c.l.bf16 %v2141
    %v2149 = vunpack.c.h.bf16 %v2141
    %v2150 = vsub.f32 %v2130, %v2142
    %v2151 = vsub.f32 %v2131, %v2143
    %v2152 = vsub.f32 %v2132, %v2144
    %v2153 = vsub.f32 %v2133, %v2145
    %v2154 = vsub.f32 %v2134, %v2146
    %v2155 = vsub.f32 %v2135, %v2147
    %v2156 = vsub.f32 %v2136, %v2148
    %v2157 = vsub.f32 %v2137, %v2149
    %v2158 = vpack.c.bf16 %v2151, %v2150
    %v2159 = vpack.c.bf16 %v2153, %v2152
    %v2160 = vpack.c.bf16 %v2155, %v2154
    %v2161 = vpack.c.bf16 %v2157, %v2156
    %v2163 = vsel %vm330, %v2158, 0
    %v2166 = vsel %vm330, %v2159, 0
    %v2169 = vsel %vm330, %v2160, 0
    %v2172 = vsel %vm330, %v2161, 0
    %2174 = vmatprep.subr.bf16.mxu0 0
    %2175 = vmatpush1.bf16.msra.mxu0 %v2053
    %2176 = vmatprep.subr.bf16.mxu0 0
    %2177 = vmatpush1.bf16.msra.mxu0 %v2054
    %2178 = vmatprep.subr.bf16.mxu0 0
    %2179 = vmatpush1.bf16.msra.mxu0 %v2055
    %2180 = vmatprep.subr.bf16.mxu0 0
    %2181 = vmatpush1.bf16.msra.mxu0 %v2056
    %2182 = vmatprep.subr.bf16.mxu0 0
    %2183 = vmatpush1.bf16.msra.mxu0 0
    %2184 = vmatprep.subr.bf16.mxu0 0
    %2185 = vmatpush1.bf16.msra.mxu0 0
    %2186 = vmatprep.subr.bf16.mxu0 0
    %2187 = vmatpush1.bf16.msra.mxu0 0
    %2188 = vmatprep.subr.bf16.mxu0 0
    %2189 = vmatpush1.bf16.msra.mxu0 0
    %2190 = vmatprep.subr.bf16.mxu0 0
    %2191 = vmatpush1.bf16.msra.mxu0 0
    %2192 = vmatprep.subr.bf16.mxu0 0
    %2193 = vmatpush1.bf16.msra.mxu0 0
    %2194 = vmatprep.subr.bf16.mxu0 0
    %2195 = vmatpush1.bf16.msra.mxu0 0
    %2196 = vmatprep.subr.bf16.mxu0 0
    %2197 = vmatpush1.bf16.msra.mxu0 0
    %2198 = vmatprep.subr.bf16.mxu0 0
    %2199 = vmatpush1.bf16.msra.mxu0 0
    %2200 = vmatprep.subr.bf16.mxu0 0
    %2201 = vmatpush1.bf16.msra.mxu0 0
    %2202 = vmatprep.subr.bf16.mxu0 0
    %2203 = vmatpush1.bf16.msra.mxu0 0
    %2204 = vmatprep.subr.bf16.mxu0 0
    %2205 = vmatpush1.bf16.msra.mxu0 0
    %2206 = vmatprep.mubr.bf16.mxu0 0
    %2207 = vmatmul.mubr.bf16.gmra.mrb[0].mxu0 %v2163
    %v2208 = vpop.f32.mrb[0].mxu0
    %v2209 = vadd.f32 0.0, %v2208
    %v2210 = vpop.f32.mrb[0].mxu0
    %v2211 = vpop.f32.mrb[0].mxu0
    %v2212 = vadd.f32 0.0, %v2211
    %v2213 = vpop.f32.mrb[0].mxu0
    %2214 = vmatprep.mubr.bf16.mxu0 0
    %2215 = vmatmul.mubr.bf16.gmra.mrb[0].mxu0 %v2166
    %v2216 = vpop.f32.mrb[0].mxu0
    %v2217 = vadd.f32 0.0, %v2216
    %v2218 = vpop.f32.mrb[0].mxu0
    %v2219 = vpop.f32.mrb[0].mxu0
    %v2220 = vadd.f32 0.0, %v2219
    %v2221 = vpop.f32.mrb[0].mxu0
    %2222 = vmatprep.mubr.bf16.mxu0 0
    %2223 = vmatmul.mubr.bf16.gmra.mrb[0].mxu0 %v2169
    %v2224 = vpop.f32.mrb[0].mxu0
    %v2225 = vadd.f32 0.0, %v2224
    %v2226 = vpop.f32.mrb[0].mxu0
    %v2227 = vpop.f32.mrb[0].mxu0
    %v2228 = vadd.f32 0.0, %v2227
    %v2229 = vpop.f32.mrb[0].mxu0
    %2230 = vmatprep.mubr.bf16.mxu0 0
    %2231 = vmatmul.mubr.bf16.gmra.mrb[0].mxu0 %v2172
    %v2232 = vpop.f32.mrb[0].mxu0
    %v2233 = vadd.f32 0.0, %v2232
    %v2234 = vpop.f32.mrb[0].mxu0
    %v2235 = vpop.f32.mrb[0].mxu0
    %v2236 = vadd.f32 0.0, %v2235
    %v2237 = vpop.f32.mrb[0].mxu0
    %2238 = vdwg.mxu0
    %v2240 = vsel %vm330, %v2138, 0
    %v2243 = vsel %vm330, %v2139, 0
    %v2246 = vsel %vm330, %v2140, 0
    %v2249 = vsel %vm330, %v2141, 0
    %2251 = vmatprep.subr.bf16.mxu0 0
    %2252 = vmatpush1.bf16.msra.mxu0 %v2053
    %2253 = vmatprep.subr.bf16.mxu0 0
    %2254 = vmatpush1.bf16.msra.mxu0 %v2054
    %2255 = vmatprep.subr.bf16.mxu0 0
    %2256 = vmatpush1.bf16.msra.mxu0 %v2055
    %2257 = vmatprep.subr.bf16.mxu0 0
    %2258 = vmatpush1.bf16.msra.mxu0 %v2056
    %2259 = vmatprep.subr.bf16.mxu0 0
    %2260 = vmatpush1.bf16.msra.mxu0 0
    %2261 = vmatprep.subr.bf16.mxu0 0
    %2262 = vmatpush1.bf16.msra.mxu0 0
    %2263 = vmatprep.subr.bf16.mxu0 0
    %2264 = vmatpush1.bf16.msra.mxu0 0
    %2265 = vmatprep.subr.bf16.mxu0 0
    %2266 = vmatpush1.bf16.msra.mxu0 0
    %2267 = vmatprep.subr.bf16.mxu0 0
    %2268 = vmatpush1.bf16.msra.mxu0 0
    %2269 = vmatprep.subr.bf16.mxu0 0
    %2270 = vmatpush1.bf16.msra.mxu0 0
    %2271 = vmatprep.subr.bf16.mxu0 0
    %2272 = vmatpush1.bf16.msra.mxu0 0
    %2273 = vmatprep.subr.bf16.mxu0 0
    %2274 = vmatpush1.bf16.msra.mxu0 0
    %2275 = vmatprep.subr.bf16.mxu0 0
    %2276 = vmatpush1.bf16.msra.mxu0 0
    %2277 = vmatprep.subr.bf16.mxu0 0
    %2278 = vmatpush1.bf16.msra.mxu0 0
    %2279 = vmatprep.subr.bf16.mxu0 0
    %2280 = vmatpush1.bf16.msra.mxu0 0
    %2281 = vmatprep.subr.bf16.mxu0 0
    %2282 = vmatpush1.bf16.msra.mxu0 0
    %2283 = vmatprep.mubr.bf16.mxu0 0
    %2284 = vmatmul.mubr.bf16.gmra.mrb[0].mxu0 %v2240
    %v2285 = vpop.f32.mrb[0].mxu0
    %v2286 = vadd.f32 %v2209, %v2285
    %v2287 = vpop.f32.mrb[0].mxu0
    %v2288 = vpop.f32.mrb[0].mxu0
    %v2289 = vadd.f32 %v2212, %v2288
    %v2290 = vpop.f32.mrb[0].mxu0
    %2291 = vmatprep.mubr.bf16.mxu0 0
    %2292 = vmatmul.mubr.bf16.gmra.mrb[0].mxu0 %v2243
    %v2293 = vpop.f32.mrb[0].mxu0
    %v2294 = vadd.f32 %v2217, %v2293
    %v2295 = vpop.f32.mrb[0].mxu0
    %v2296 = vpop.f32.mrb[0].mxu0
    %v2297 = vadd.f32 %v2220, %v2296
    %v2298 = vpop.f32.mrb[0].mxu0
    %2299 = vmatprep.mubr.bf16.mxu0 0
    %2300 = vmatmul.mubr.bf16.gmra.mrb[0].mxu0 %v2246
    %v2301 = vpop.f32.mrb[0].mxu0
    %v2302 = vadd.f32 %v2225, %v2301
    %v2303 = vpop.f32.mrb[0].mxu0
    %v2304 = vpop.f32.mrb[0].mxu0
    %v2305 = vadd.f32 %v2228, %v2304
    %v2306 = vpop.f32.mrb[0].mxu0
    %2307 = vmatprep.mubr.bf16.mxu0 0
    %2308 = vmatmul.mubr.bf16.gmra.mrb[0].mxu0 %v2249
    %v2309 = vpop.f32.mrb[0].mxu0
    %v2310 = vadd.f32 %v2233, %v2309
    %v2311 = vpop.f32.mrb[0].mxu0
    %v2312 = vpop.f32.mrb[0].mxu0
    %v2313 = vadd.f32 %v2236, %v2312
    %v2314 = vpop.f32.mrb[0].mxu0
    %2315 = vdwg.mxu0
    %v2316 = vmax.f32 %v2286, 0.0
    %v2317 = vmax.f32 %v2289, 0.0
    %v2318 = vmax.f32 %v2294, 0.0
    %v2319 = vmax.f32 %v2297, 0.0
    %v2320 = vmax.f32 %v2302, 0.0
    %v2321 = vmax.f32 %v2305, 0.0
    %v2322 = vmax.f32 %v2310, 0.0
    %v2323 = vmax.f32 %v2313, 0.0
    %v2324 = vmin.f32 %v2316, 4.0
    %v2325 = vmin.f32 %v2317, 4.0
    %v2326 = vmin.f32 %v2318, 4.0
    %v2327 = vmin.f32 %v2319, 4.0
    %v2328 = vmin.f32 %v2320, 4.0
    %v2329 = vmin.f32 %v2321, 4.0
    %v2330 = vmin.f32 %v2322, 4.0
    %v2331 = vmin.f32 %v2323, 4.0
    %v2332 = vadd.f32 %v2324, 0.5
    %v2333 = vadd.f32 %v2325, 0.5
    %v2334 = vadd.f32 %v2326, 0.5
    %v2335 = vadd.f32 %v2327, 0.5
    %v2336 = vadd.f32 %v2328, 0.5
    %v2337 = vadd.f32 %v2329, 0.5
    %v2338 = vadd.f32 %v2330, 0.5
    %v2339 = vadd.f32 %v2331, 0.5
    %v2340 = vfloor.f32 %v2332
    %v2341 = vfloor.f32 %v2333
    %v2342 = vfloor.f32 %v2334
    %v2343 = vfloor.f32 %v2335
    %v2344 = vfloor.f32 %v2336
    %v2345 = vfloor.f32 %v2337
    %v2346 = vfloor.f32 %v2338
    %v2347 = vfloor.f32 %v2339
    %v2348 = vmul.f32 %v2340, %v137
    %v2349 = vmul.f32 %v2341, %v137
    %v2350 = vmul.f32 %v2342, %v137
    %v2351 = vmul.f32 %v2343, %v137
    %v2352 = vmul.f32 %v2344, %v137
    %v2353 = vmul.f32 %v2345, %v137
    %v2354 = vmul.f32 %v2346, %v137
    %v2355 = vmul.f32 %v2347, %v137
    %v2356 = vpack.c.bf16 %v2349, %v2348
    %v2357 = vpack.c.bf16 %v2351, %v2350
    %v2358 = vpack.c.bf16 %v2353, %v2352
    %v2359 = vpack.c.bf16 %v2355, %v2354
    %2360 = vmatprep.subr.bf16.mxu0 0
    %2361 = vmatpush1.bf16.msra.mxu0 %v2356
    %2362 = vmatprep.subr.bf16.mxu0 0
    %2363 = vmatpush1.bf16.msra.mxu0 %v2357
    %2364 = vmatprep.subr.bf16.mxu0 0
    %2365 = vmatpush1.bf16.msra.mxu0 %v2358
    %2366 = vmatprep.subr.bf16.mxu0 0
    %2367 = vmatpush1.bf16.msra.mxu0 %v2359
    %2368 = vmatprep.subr.bf16.mxu0 0
    %2369 = vmatpush1.bf16.msra.mxu0 0
    %2370 = vmatprep.subr.bf16.mxu0 0
    %2371 = vmatpush1.bf16.msra.mxu0 0
    %2372 = vmatprep.subr.bf16.mxu0 0
    %2373 = vmatpush1.bf16.msra.mxu0 0
    %2374 = vmatprep.subr.bf16.mxu0 0
    %2375 = vmatpush1.bf16.msra.mxu0 0
    %2376 = vmatprep.subr.bf16.mxu0 0
    %2377 = vmatpush1.bf16.msra.mxu0 0
    %2378 = vmatprep.subr.bf16.mxu0 0
    %2379 = vmatpush1.bf16.msra.mxu0 0
    %2380 = vmatprep.subr.bf16.mxu0 0
    %2381 = vmatpush1.bf16.msra.mxu0 0
    %2382 = vmatprep.subr.bf16.mxu0 0
    %2383 = vmatpush1.bf16.msra.mxu0 0
    %2384 = vmatprep.subr.bf16.mxu0 0
    %2385 = vmatpush1.bf16.msra.mxu0 0
    %2386 = vmatprep.subr.bf16.mxu0 0
    %2387 = vmatpush1.bf16.msra.mxu0 0
    %2388 = vmatprep.subr.bf16.mxu0 0
    %2389 = vmatpush1.bf16.msra.mxu0 0
    %2390 = vmatprep.subr.bf16.mxu0 0
    %2391 = vmatpush1.bf16.msra.mxu0 0
    %2392 = vmatprep.mubr.bf16.mxu0 0
    %2393 = vmatmul.mubr.bf16.gmra.mrb[0].mxu0 %v984
    %v2394 = vpop.f32.mrb[0].mxu0
    %v2395 = vadd.f32 %v926, %v2394
    %v2396 = vpop.f32.mrb[0].mxu0
    %v2397 = vpop.f32.mrb[0].mxu0
    %v2398 = vadd.f32 %v931, %v2397
    %v2399 = vpop.f32.mrb[0].mxu0
    %2400 = vmatprep.mubr.bf16.mxu0 0
    %2401 = vmatmul.mubr.bf16.gmra.mrb[0].mxu0 %v987
    %v2402 = vpop.f32.mrb[0].mxu0
    %v2403 = vadd.f32 %v936, %v2402
    %v2404 = vpop.f32.mrb[0].mxu0
    %v2405 = vpop.f32.mrb[0].mxu0
    %v2406 = vadd.f32 %v941, %v2405
    %v2407 = vpop.f32.mrb[0].mxu0
    %2408 = vmatprep.mubr.bf16.mxu0 0
    %2409 = vmatmul.mubr.bf16.gmra.mrb[0].mxu0 %v990
    %v2410 = vpop.f32.mrb[0].mxu0
    %v2411 = vadd.f32 %v946, %v2410
    %v2412 = vpop.f32.mrb[0].mxu0
    %v2413 = vpop.f32.mrb[0].mxu0
    %v2414 = vadd.f32 %v951, %v2413
    %v2415 = vpop.f32.mrb[0].mxu0
    %2416 = vmatprep.mubr.bf16.mxu0 0
    %2417 = vmatmul.mubr.bf16.gmra.mrb[0].mxu0 %v993
    %v2418 = vpop.f32.mrb[0].mxu0
    %v2419 = vadd.f32 %v956, %v2418
    %v2420 = vpop.f32.mrb[0].mxu0
    %v2421 = vpop.f32.mrb[0].mxu0
    %v2422 = vadd.f32 %v961, %v2421
    %v2423 = vpop.f32.mrb[0].mxu0
    %2424 = vdwg.mxu0
    %s2425 = scalar_lea.vmem [#allocation2], 128
    %2426 = vst [vmem:[%s2425] sm:$0xff] %v2395
    %2427 = vst [vmem:[%s2425 + $0x8] sm:$0xff] %v2398
    %2428 = vst [vmem:[%s2425 + $0x10] sm:$0xff] %v2403
    %2429 = vst [vmem:[%s2425 + $0x18] sm:$0xff] %v2406
    %2430 = vst [vmem:[%s2425 + $0x20] sm:$0xff] %v2411
    %2431 = vst [vmem:[%s2425 + $0x28] sm:$0xff] %v2414
    %2432 = vst [vmem:[%s2425 + $0x30] sm:$0xff] %v2419
    %2433 = vst [vmem:[%s2425 + $0x38] sm:$0xff] %v2422
    %s2434 = scalar_lea.vmem %s0, 192
    %v2435 = vld [vmem:[%s2434] sm:$0xff]
    %v2436 = vld [vmem:[%s2434 + $0x8] sm:$0xff]
    %v2437 = vld [vmem:[%s2434 + $0x10] sm:$0xff]
    %v2438 = vld [vmem:[%s2434 + $0x18] sm:$0xff]
    %v2439 = vld [vmem:[%s2434 + $0x20] sm:$0xff]
    %v2440 = vld [vmem:[%s2434 + $0x28] sm:$0xff]
    %v2441 = vld [vmem:[%s2434 + $0x30] sm:$0xff]
    %v2442 = vld [vmem:[%s2434 + $0x38] sm:$0xff]
    %v2443 = vmax.f32 %v2435, 0.0
    %v2444 = vmax.f32 %v2436, 0.0
    %v2445 = vmax.f32 %v2437, 0.0
    %v2446 = vmax.f32 %v2438, 0.0
    %v2447 = vmax.f32 %v2439, 0.0
    %v2448 = vmax.f32 %v2440, 0.0
    %v2449 = vmax.f32 %v2441, 0.0
    %v2450 = vmax.f32 %v2442, 0.0
    %v2451 = vmin.f32 %v2443, 4.0
    %v2452 = vmin.f32 %v2444, 4.0
    %v2453 = vmin.f32 %v2445, 4.0
    %v2454 = vmin.f32 %v2446, 4.0
    %v2455 = vmin.f32 %v2447, 4.0
    %v2456 = vmin.f32 %v2448, 4.0
    %v2457 = vmin.f32 %v2449, 4.0
    %v2458 = vmin.f32 %v2450, 4.0
    %v2459 = vadd.f32 %v2451, 0.5
    %v2460 = vadd.f32 %v2452, 0.5
    %v2461 = vadd.f32 %v2453, 0.5
    %v2462 = vadd.f32 %v2454, 0.5
    %v2463 = vadd.f32 %v2455, 0.5
    %v2464 = vadd.f32 %v2456, 0.5
    %v2465 = vadd.f32 %v2457, 0.5
    %v2466 = vadd.f32 %v2458, 0.5
    %v2467 = vfloor.f32 %v2459
    %v2468 = vfloor.f32 %v2460
    %v2469 = vfloor.f32 %v2461
    %v2470 = vfloor.f32 %v2462
    %v2471 = vfloor.f32 %v2463
    %v2472 = vfloor.f32 %v2464
    %v2473 = vfloor.f32 %v2465
    %v2474 = vfloor.f32 %v2466
    %v2475 = vmul.f32 %v2467, %v137
    %v2476 = vmul.f32 %v2468, %v137
    %v2477 = vmul.f32 %v2469, %v137
    %v2478 = vmul.f32 %v2470, %v137
    %v2479 = vmul.f32 %v2471, %v137
    %v2480 = vmul.f32 %v2472, %v137
    %v2481 = vmul.f32 %v2473, %v137
    %v2482 = vmul.f32 %v2474, %v137
    %v2483 = vpack.c.bf16 %v2476, %v2475
    %v2484 = vpack.c.bf16 %v2478, %v2477
    %v2485 = vpack.c.bf16 %v2480, %v2479
    %v2486 = vpack.c.bf16 %v2482, %v2481
    %2487 = vmatprep.subr.bf16.mxu0 0
    %2488 = vmatpush1.bf16.msra.mxu0 %v2483
    %2489 = vmatprep.subr.bf16.mxu0 0
    %2490 = vmatpush1.bf16.msra.mxu0 %v2484
    %2491 = vmatprep.subr.bf16.mxu0 0
    %2492 = vmatpush1.bf16.msra.mxu0 %v2485
    %2493 = vmatprep.subr.bf16.mxu0 0
    %2494 = vmatpush1.bf16.msra.mxu0 %v2486
    %2495 = vmatprep.subr.bf16.mxu0 0
    %2496 = vmatpush1.bf16.msra.mxu0 0
    %2497 = vmatprep.subr.bf16.mxu0 0
    %2498 = vmatpush1.bf16.msra.mxu0 0
    %2499 = vmatprep.subr.bf16.mxu0 0
    %2500 = vmatpush1.bf16.msra.mxu0 0
    %2501 = vmatprep.subr.bf16.mxu0 0
    %2502 = vmatpush1.bf16.msra.mxu0 0
    %2503 = vmatprep.subr.bf16.mxu0 0
    %2504 = vmatpush1.bf16.msra.mxu0 0
    %2505 = vmatprep.subr.bf16.mxu0 0
    %2506 = vmatpush1.bf16.msra.mxu0 0
    %2507 = vmatprep.subr.bf16.mxu0 0
    %2508 = vmatpush1.bf16.msra.mxu0 0
    %2509 = vmatprep.subr.bf16.mxu0 0
    %2510 = vmatpush1.bf16.msra.mxu0 0
    %2511 = vmatprep.subr.bf16.mxu0 0
    %2512 = vmatpush1.bf16.msra.mxu0 0
    %2513 = vmatprep.subr.bf16.mxu0 0
    %2514 = vmatpush1.bf16.msra.mxu0 0
    %2515 = vmatprep.subr.bf16.mxu0 0
    %2516 = vmatpush1.bf16.msra.mxu0 0
    %2517 = vmatprep.subr.bf16.mxu0 0
    %2518 = vmatpush1.bf16.msra.mxu0 0
    %2519 = vmatprep.mubr.bf16.mxu0 0
    %2520 = vmatmul.mubr.bf16.gmra.mrb[0].mxu0 %v332
    %v2521 = vpop.f32.mrb[0].mxu0
    %v2522 = vadd.f32 %v153, %v2521
    %v2523 = vpop.f32.mrb[0].mxu0
    %v2524 = vpop.f32.mrb[0].mxu0
    %v2525 = vadd.f32 %v158, %v2524
    %v2526 = vpop.f32.mrb[0].mxu0
    %2527 = vmatprep.mubr.bf16.mxu0 0
    %2528 = vmatmul.mubr.bf16.gmra.mrb[0].mxu0 %v335
    %v2529 = vpop.f32.mrb[0].mxu0
    %v2530 = vadd.f32 %v163, %v2529
    %v2531 = vpop.f32.mrb[0].mxu0
    %v2532 = vpop.f32.mrb[0].mxu0
    %v2533 = vadd.f32 %v168, %v2532
    %v2534 = vpop.f32.mrb[0].mxu0
    %2535 = vmatprep.mubr.bf16.mxu0 0
    %2536 = vmatmul.mubr.bf16.gmra.mrb[0].mxu0 %v338
    %v2537 = vpop.f32.mrb[0].mxu0
    %v2538 = vadd.f32 %v173, %v2537
    %v2539 = vpop.f32.mrb[0].mxu0
    %v2540 = vpop.f32.mrb[0].mxu0
    %v2541 = vadd.f32 %v178, %v2540
    %v2542 = vpop.f32.mrb[0].mxu0
    %2543 = vmatprep.mubr.bf16.mxu0 0
    %2544 = vmatmul.mubr.bf16.gmra.mrb[0].mxu0 %v341
    %v2545 = vpop.f32.mrb[0].mxu0
    %v2546 = vadd.f32 %v183, %v2545
    %v2547 = vpop.f32.mrb[0].mxu0
    %v2548 = vpop.f32.mrb[0].mxu0
    %v2549 = vadd.f32 %v188, %v2548
    %v2550 = vpop.f32.mrb[0].mxu0
    %2551 = vmatprep.mubr.bf16.mxu0 0
    %2552 = vmatmul.mubr.bf16.gmra.mrb[0].mxu0 %v344
    %v2553 = vpop.f32.mrb[0].mxu0
    %v2554 = vadd.f32 %v193, %v2553
    %v2555 = vpop.f32.mrb[0].mxu0
    %v2556 = vpop.f32.mrb[0].mxu0
    %v2557 = vadd.f32 %v198, %v2556
    %v2558 = vpop.f32.mrb[0].mxu0
    %2559 = vmatprep.mubr.bf16.mxu0 0
    %2560 = vmatmul.mubr.bf16.gmra.mrb[0].mxu0 %v347
    %v2561 = vpop.f32.mrb[0].mxu0
    %v2562 = vadd.f32 %v203, %v2561
    %v2563 = vpop.f32.mrb[0].mxu0
    %v2564 = vpop.f32.mrb[0].mxu0
    %v2565 = vadd.f32 %v208, %v2564
    %v2566 = vpop.f32.mrb[0].mxu0
    %2567 = vmatprep.mubr.bf16.mxu0 0
    %2568 = vmatmul.mubr.bf16.gmra.mrb[0].mxu0 %v350
    %v2569 = vpop.f32.mrb[0].mxu0
    %v2570 = vadd.f32 %v213, %v2569
    %v2571 = vpop.f32.mrb[0].mxu0
    %v2572 = vpop.f32.mrb[0].mxu0
    %v2573 = vadd.f32 %v218, %v2572
    %v2574 = vpop.f32.mrb[0].mxu0
    %2575 = vmatprep.mubr.bf16.mxu0 0
    %2576 = vmatmul.mubr.bf16.gmra.mrb[0].mxu0 %v353
    %v2577 = vpop.f32.mrb[0].mxu0
    %v2578 = vadd.f32 %v223, %v2577
    %v2579 = vpop.f32.mrb[0].mxu0
    %v2580 = vpop.f32.mrb[0].mxu0
    %v2581 = vadd.f32 %v228, %v2580
    %v2582 = vpop.f32.mrb[0].mxu0
    %2583 = vmatprep.mubr.bf16.mxu0 0
    %2584 = vmatmul.mubr.bf16.gmra.mrb[0].mxu0 %v356
    %v2585 = vpop.f32.mrb[0].mxu0
    %v2586 = vadd.f32 %v233, %v2585
    %v2587 = vpop.f32.mrb[0].mxu0
    %v2588 = vpop.f32.mrb[0].mxu0
    %v2589 = vadd.f32 %v238, %v2588
    %v2590 = vpop.f32.mrb[0].mxu0
    %2591 = vmatprep.mubr.bf16.mxu0 0
    %2592 = vmatmul.mubr.bf16.gmra.mrb[0].mxu0 %v359
    %v2593 = vpop.f32.mrb[0].mxu0
    %v2594 = vadd.f32 %v243, %v2593
    %v2595 = vpop.f32.mrb[0].mxu0
    %v2596 = vpop.f32.mrb[0].mxu0
    %v2597 = vadd.f32 %v248, %v2596
    %v2598 = vpop.f32.mrb[0].mxu0
    %2599 = vmatprep.mubr.bf16.mxu0 0
    %2600 = vmatmul.mubr.bf16.gmra.mrb[0].mxu0 %v362
    %v2601 = vpop.f32.mrb[0].mxu0
    %v2602 = vadd.f32 %v253, %v2601
    %v2603 = vpop.f32.mrb[0].mxu0
    %v2604 = vpop.f32.mrb[0].mxu0
    %v2605 = vadd.f32 %v258, %v2604
    %v2606 = vpop.f32.mrb[0].mxu0
    %2607 = vmatprep.mubr.bf16.mxu0 0
    %2608 = vmatmul.mubr.bf16.gmra.mrb[0].mxu0 %v365
    %v2609 = vpop.f32.mrb[0].mxu0
    %v2610 = vadd.f32 %v263, %v2609
    %v2611 = vpop.f32.mrb[0].mxu0
    %v2612 = vpop.f32.mrb[0].mxu0
    %v2613 = vadd.f32 %v268, %v2612
    %v2614 = vpop.f32.mrb[0].mxu0
    %2615 = vdwg.mxu0
    %v2616 = vmax.f32 %v2522, 0.0
    %v2617 = vmax.f32 %v2525, 0.0
    %v2618 = vmax.f32 %v2530, 0.0
    %v2619 = vmax.f32 %v2533, 0.0
    %v2620 = vmax.f32 %v2538, 0.0
    %v2621 = vmax.f32 %v2541, 0.0
    %v2622 = vmax.f32 %v2546, 0.0
    %v2623 = vmax.f32 %v2549, 0.0
    %v2624 = vmax.f32 %v2554, 0.0
    %v2625 = vmax.f32 %v2557, 0.0
    %v2626 = vmax.f32 %v2562, 0.0
    %v2627 = vmax.f32 %v2565, 0.0
    %v2628 = vmax.f32 %v2570, 0.0
    %v2629 = vmax.f32 %v2573, 0.0
    %v2630 = vmax.f32 %v2578, 0.0
    %v2631 = vmax.f32 %v2581, 0.0
    %v2632 = vmax.f32 %v2586, 0.0
    %v2633 = vmax.f32 %v2589, 0.0
    %v2634 = vmax.f32 %v2594, 0.0
    %v2635 = vmax.f32 %v2597, 0.0
    %v2636 = vmax.f32 %v2602, 0.0
    %v2637 = vmax.f32 %v2605, 0.0
    %v2638 = vmax.f32 %v2610, 0.0
    %v2639 = vmax.f32 %v2613, 0.0
    %v2640 = vmin.f32 %v2616, 4.0
    %v2641 = vmin.f32 %v2617, 4.0
    %v2642 = vmin.f32 %v2618, 4.0
    %v2643 = vmin.f32 %v2619, 4.0
    %v2644 = vmin.f32 %v2620, 4.0
    %v2645 = vmin.f32 %v2621, 4.0
    %v2646 = vmin.f32 %v2622, 4.0
    %v2647 = vmin.f32 %v2623, 4.0
    %v2648 = vmin.f32 %v2624, 4.0
    %v2649 = vmin.f32 %v2625, 4.0
    %v2650 = vmin.f32 %v2626, 4.0
    %v2651 = vmin.f32 %v2627, 4.0
    %v2652 = vmin.f32 %v2628, 4.0
    %v2653 = vmin.f32 %v2629, 4.0
    %v2654 = vmin.f32 %v2630, 4.0
    %v2655 = vmin.f32 %v2631, 4.0
    %v2656 = vmin.f32 %v2632, 4.0
    %v2657 = vmin.f32 %v2633, 4.0
    %v2658 = vmin.f32 %v2634, 4.0
    %v2659 = vmin.f32 %v2635, 4.0
    %v2660 = vmin.f32 %v2636, 4.0
    %v2661 = vmin.f32 %v2637, 4.0
    %v2662 = vmin.f32 %v2638, 4.0
    %v2663 = vmin.f32 %v2639, 4.0
    %v2664 = vadd.f32 %v2640, 0.5
    %v2665 = vadd.f32 %v2641, 0.5
    %v2666 = vadd.f32 %v2642, 0.5
    %v2667 = vadd.f32 %v2643, 0.5
    %v2668 = vadd.f32 %v2644, 0.5
    %v2669 = vadd.f32 %v2645, 0.5
    %v2670 = vadd.f32 %v2646, 0.5
    %v2671 = vadd.f32 %v2647, 0.5
    %v2672 = vadd.f32 %v2648, 0.5
    %v2673 = vadd.f32 %v2649, 0.5
    %v2674 = vadd.f32 %v2650, 0.5
    %v2675 = vadd.f32 %v2651, 0.5
    %v2676 = vadd.f32 %v2652, 0.5
    %v2677 = vadd.f32 %v2653, 0.5
    %v2678 = vadd.f32 %v2654, 0.5
    %v2679 = vadd.f32 %v2655, 0.5
    %v2680 = vadd.f32 %v2656, 0.5
    %v2681 = vadd.f32 %v2657, 0.5
    %v2682 = vadd.f32 %v2658, 0.5
    %v2683 = vadd.f32 %v2659, 0.5
    %v2684 = vadd.f32 %v2660, 0.5
    %v2685 = vadd.f32 %v2661, 0.5
    %v2686 = vadd.f32 %v2662, 0.5
    %v2687 = vadd.f32 %v2663, 0.5
    %v2688 = vfloor.f32 %v2664
    %v2689 = vfloor.f32 %v2665
    %v2690 = vfloor.f32 %v2666
    %v2691 = vfloor.f32 %v2667
    %v2692 = vfloor.f32 %v2668
    %v2693 = vfloor.f32 %v2669
    %v2694 = vfloor.f32 %v2670
    %v2695 = vfloor.f32 %v2671
    %v2696 = vfloor.f32 %v2672
    %v2697 = vfloor.f32 %v2673
    %v2698 = vfloor.f32 %v2674
    %v2699 = vfloor.f32 %v2675
    %v2700 = vfloor.f32 %v2676
    %v2701 = vfloor.f32 %v2677
    %v2702 = vfloor.f32 %v2678
    %v2703 = vfloor.f32 %v2679
    %v2704 = vfloor.f32 %v2680
    %v2705 = vfloor.f32 %v2681
    %v2706 = vfloor.f32 %v2682
    %v2707 = vfloor.f32 %v2683
    %v2708 = vfloor.f32 %v2684
    %v2709 = vfloor.f32 %v2685
    %v2710 = vfloor.f32 %v2686
    %v2711 = vfloor.f32 %v2687
    %v2712 = vmul.f32 %v2688, %v137
    %v2713 = vmul.f32 %v2689, %v137
    %v2714 = vmul.f32 %v2690, %v137
    %v2715 = vmul.f32 %v2691, %v137
    %v2716 = vmul.f32 %v2692, %v137
    %v2717 = vmul.f32 %v2693, %v137
    %v2718 = vmul.f32 %v2694, %v137
    %v2719 = vmul.f32 %v2695, %v137
    %v2720 = vmul.f32 %v2696, %v137
    %v2721 = vmul.f32 %v2697, %v137
    %v2722 = vmul.f32 %v2698, %v137
    %v2723 = vmul.f32 %v2699, %v137
    %v2724 = vmul.f32 %v2700, %v137
    %v2725 = vmul.f32 %v2701, %v137
    %v2726 = vmul.f32 %v2702, %v137
    %v2727 = vmul.f32 %v2703, %v137
    %v2728 = vmul.f32 %v2704, %v137
    %v2729 = vmul.f32 %v2705, %v137
    %v2730 = vmul.f32 %v2706, %v137
    %v2731 = vmul.f32 %v2707, %v137
    %v2732 = vmul.f32 %v2708, %v137
    %v2733 = vmul.f32 %v2709, %v137
    %v2734 = vmul.f32 %v2710, %v137
    %v2735 = vmul.f32 %v2711, %v137
    %v2736 = vpack.c.bf16 %v2713, %v2712
    %v2737 = vpack.c.bf16 %v2715, %v2714
    %v2738 = vpack.c.bf16 %v2717, %v2716
    %v2739 = vpack.c.bf16 %v2719, %v2718
    %v2740 = vpack.c.bf16 %v2721, %v2720
    %v2741 = vpack.c.bf16 %v2723, %v2722
    %v2742 = vpack.c.bf16 %v2725, %v2724
    %v2743 = vpack.c.bf16 %v2727, %v2726
    %v2744 = vpack.c.bf16 %v2729, %v2728
    %v2745 = vpack.c.bf16 %v2731, %v2730
    %v2746 = vpack.c.bf16 %v2733, %v2732
    %v2747 = vpack.c.bf16 %v2735, %v2734
    %2748 = vmatprep.subr.bf16.mxu0 0
    %2749 = vmatpush1.bf16.xpose.msra.mxu0 %v2740
    %2750 = vmatprep.subr.bf16.mxu0 0
    %2751 = vmatpush1.bf16.xpose.msra.mxu0 %v2741
    %2752 = vmatprep.subr.bf16.mxu0 0
    %2753 = vmatpush1.bf16.xpose.msra.mxu0 %v2742
    %2754 = vmatprep.subr.bf16.mxu0 0
    %2755 = vmatpush1.bf16.xpose.msra.mxu0 %v2743
    %2756 = vmatprep.subr.bf16.mxu0 0
    %2757 = vmatpush1.bf16.xpose.msra.mxu0 0
    %2758 = vmatprep.subr.bf16.mxu0 0
    %2759 = vmatpush1.bf16.xpose.msra.mxu0 0
    %2760 = vmatprep.subr.bf16.mxu0 0
    %2761 = vmatpush1.bf16.xpose.msra.mxu0 0
    %2762 = vmatprep.subr.bf16.mxu0 0
    %2763 = vmatpush1.bf16.xpose.msra.mxu0 0
    %2764 = vmatprep.subr.bf16.mxu0 0
    %2765 = vmatpush1.bf16.xpose.msra.mxu0 0
    %2766 = vmatprep.subr.bf16.mxu0 0
    %2767 = vmatpush1.bf16.xpose.msra.mxu0 0
    %2768 = vmatprep.subr.bf16.mxu0 0
    %2769 = vmatpush1.bf16.xpose.msra.mxu0 0
    %2770 = vmatprep.subr.bf16.mxu0 0
    %2771 = vmatpush1.bf16.xpose.msra.mxu0 0
    %2772 = vmatprep.subr.bf16.mxu0 0
    %2773 = vmatpush1.bf16.xpose.msra.mxu0 0
    %2774 = vmatprep.subr.bf16.mxu0 0
    %2775 = vmatpush1.bf16.xpose.msra.mxu0 0
    %2776 = vmatprep.subr.bf16.mxu0 0
    %2777 = vmatpush1.bf16.xpose.msra.mxu0 0
    %2778 = vmatprep.subr.bf16.mxu0 0
    %2779 = vmatpush1.bf16.xpose.msra.mxu0 0
    %2780 = vmatprep.mubr.bf16.mxu0 0
    %2781 = vmatmul.mubr.bf16.gmra.mrb[0].mxu0 %v2744
    %v2782 = vpop.f32.mrb[0].mxu0
    %v2783 = vadd.f32 0.0, %v2782
    %v2784 = vpop.f32.mrb[0].mxu0
    %v2785 = vpop.f32.mrb[0].mxu0
    %v2786 = vadd.f32 0.0, %v2785
    %v2787 = vpop.f32.mrb[0].mxu0
    %2788 = vmatprep.mubr.bf16.mxu0 0
    %2789 = vmatmul.mubr.bf16.gmra.mrb[0].mxu0 %v2745
    %v2790 = vpop.f32.mrb[0].mxu0
    %v2791 = vadd.f32 0.0, %v2790
    %v2792 = vpop.f32.mrb[0].mxu0
    %v2793 = vpop.f32.mrb[0].mxu0
    %v2794 = vadd.f32 0.0, %v2793
    %v2795 = vpop.f32.mrb[0].mxu0
    %2796 = vmatprep.mubr.bf16.mxu0 0
    %2797 = vmatmul.mubr.bf16.gmra.mrb[0].mxu0 %v2746
    %v2798 = vpop.f32.mrb[0].mxu0
    %v2799 = vadd.f32 0.0, %v2798
    %v2800 = vpop.f32.mrb[0].mxu0
    %v2801 = vpop.f32.mrb[0].mxu0
    %v2802 = vadd.f32 0.0, %v2801
    %v2803 = vpop.f32.mrb[0].mxu0
    %2804 = vmatprep.mubr.bf16.mxu0 0
    %2805 = vmatmul.mubr.bf16.gmra.mrb[0].mxu0 %v2747
    %v2806 = vpop.f32.mrb[0].mxu0
    %v2807 = vadd.f32 0.0, %v2806
    %v2808 = vpop.f32.mrb[0].mxu0
    %v2809 = vpop.f32.mrb[0].mxu0
    %v2810 = vadd.f32 0.0, %v2809
    %v2811 = vpop.f32.mrb[0].mxu0
    %2812 = vdwg.mxu0
    %v2813 = vmul.f32 %v2783, %v89
    %v2814 = vmul.f32 %v2786, %v90
    %v2815 = vmul.f32 %v2791, %v91
    %v2816 = vmul.f32 %v2794, %v92
    %v2817 = vmul.f32 %v2799, %v93
    %v2818 = vmul.f32 %v2802, %v94
    %v2819 = vmul.f32 %v2807, %v95
    %v2820 = vmul.f32 %v2810, %v96
    %v2821 = vpack.c.bf16 %v2814, %v2813
    %v2822 = vpack.c.bf16 %v2816, %v2815
    %v2823 = vpack.c.bf16 %v2818, %v2817
    %v2824 = vpack.c.bf16 %v2820, %v2819
    %v2825 = vunpack.c.l.bf16 %v2821
    %v2826 = vunpack.c.h.bf16 %v2821
    %v2827 = vunpack.c.l.bf16 %v2822
    %v2828 = vunpack.c.h.bf16 %v2822
    %v2829 = vunpack.c.l.bf16 %v2823
    %v2830 = vunpack.c.h.bf16 %v2823
    %v2831 = vunpack.c.l.bf16 %v2824
    %v2832 = vunpack.c.h.bf16 %v2824
    %v2833 = vsub.f32 %v2813, %v2825
    %v2834 = vsub.f32 %v2814, %v2826
    %v2835 = vsub.f32 %v2815, %v2827
    %v2836 = vsub.f32 %v2816, %v2828
    %v2837 = vsub.f32 %v2817, %v2829
    %v2838 = vsub.f32 %v2818, %v2830
    %v2839 = vsub.f32 %v2819, %v2831
    %v2840 = vsub.f32 %v2820, %v2832
    %v2841 = vpack.c.bf16 %v2834, %v2833
    %v2842 = vpack.c.bf16 %v2836, %v2835
    %v2843 = vpack.c.bf16 %v2838, %v2837
    %v2844 = vpack.c.bf16 %v2840, %v2839
    %v2846 = vsel %vm330, %v2841, 0
    %v2849 = vsel %vm330, %v2842, 0
    %v2852 = vsel %vm330, %v2843, 0
    %v2855 = vsel %vm330, %v2844, 0
    %2857 = vmatprep.subr.bf16.mxu0 0
    %2858 = vmatpush1.bf16.msra.mxu0 %v2736
    %2859 = vmatprep.subr.bf16.mxu0 0
    %2860 = vmatpush1.bf16.msra.mxu0 %v2737
    %2861 = vmatprep.subr.bf16.mxu0 0
    %2862 = vmatpush1.bf16.msra.mxu0 %v2738
    %2863 = vmatprep.subr.bf16.mxu0 0
    %2864 = vmatpush1.bf16.msra.mxu0 %v2739
    %2865 = vmatprep.subr.bf16.mxu0 0
    %2866 = vmatpush1.bf16.msra.mxu0 0
    %2867 = vmatprep.subr.bf16.mxu0 0
    %2868 = vmatpush1.bf16.msra.mxu0 0
    %2869 = vmatprep.subr.bf16.mxu0 0
    %2870 = vmatpush1.bf16.msra.mxu0 0
    %2871 = vmatprep.subr.bf16.mxu0 0
    %2872 = vmatpush1.bf16.msra.mxu0 0
    %2873 = vmatprep.subr.bf16.mxu0 0
    %2874 = vmatpush1.bf16.msra.mxu0 0
    %2875 = vmatprep.subr.bf16.mxu0 0
    %2876 = vmatpush1.bf16.msra.mxu0 0
    %2877 = vmatprep.subr.bf16.mxu0 0
    %2878 = vmatpush1.bf16.msra.mxu0 0
    %2879 = vmatprep.subr.bf16.mxu0 0
    %2880 = vmatpush1.bf16.msra.mxu0 0
    %2881 = vmatprep.subr.bf16.mxu0 0
    %2882 = vmatpush1.bf16.msra.mxu0 0
    %2883 = vmatprep.subr.bf16.mxu0 0
    %2884 = vmatpush1.bf16.msra.mxu0 0
    %2885 = vmatprep.subr.bf16.mxu0 0
    %2886 = vmatpush1.bf16.msra.mxu0 0
    %2887 = vmatprep.subr.bf16.mxu0 0
    %2888 = vmatpush1.bf16.msra.mxu0 0
    %2889 = vmatprep.mubr.bf16.mxu0 0
    %2890 = vmatmul.mubr.bf16.gmra.mrb[0].mxu0 %v2846
    %v2891 = vpop.f32.mrb[0].mxu0
    %v2892 = vadd.f32 0.0, %v2891
    %v2893 = vpop.f32.mrb[0].mxu0
    %v2894 = vpop.f32.mrb[0].mxu0
    %v2895 = vadd.f32 0.0, %v2894
    %v2896 = vpop.f32.mrb[0].mxu0
    %2897 = vmatprep.mubr.bf16.mxu0 0
    %2898 = vmatmul.mubr.bf16.gmra.mrb[0].mxu0 %v2849
    %v2899 = vpop.f32.mrb[0].mxu0
    %v2900 = vadd.f32 0.0, %v2899
    %v2901 = vpop.f32.mrb[0].mxu0
    %v2902 = vpop.f32.mrb[0].mxu0
    %v2903 = vadd.f32 0.0, %v2902
    %v2904 = vpop.f32.mrb[0].mxu0
    %2905 = vmatprep.mubr.bf16.mxu0 0
    %2906 = vmatmul.mubr.bf16.gmra.mrb[0].mxu0 %v2852
    %v2907 = vpop.f32.mrb[0].mxu0
    %v2908 = vadd.f32 0.0, %v2907
    %v2909 = vpop.f32.mrb[0].mxu0
    %v2910 = vpop.f32.mrb[0].mxu0
    %v2911 = vadd.f32 0.0, %v2910
    %v2912 = vpop.f32.mrb[0].mxu0
    %2913 = vmatprep.mubr.bf16.mxu0 0
    %2914 = vmatmul.mubr.bf16.gmra.mrb[0].mxu0 %v2855
    %v2915 = vpop.f32.mrb[0].mxu0
    %v2916 = vadd.f32 0.0, %v2915
    %v2917 = vpop.f32.mrb[0].mxu0
    %v2918 = vpop.f32.mrb[0].mxu0
    %v2919 = vadd.f32 0.0, %v2918
    %v2920 = vpop.f32.mrb[0].mxu0
    %2921 = vdwg.mxu0
    %v2923 = vsel %vm330, %v2821, 0
    %v2926 = vsel %vm330, %v2822, 0
    %v2929 = vsel %vm330, %v2823, 0
    %v2932 = vsel %vm330, %v2824, 0
    %2934 = vmatprep.subr.bf16.mxu0 0
    %2935 = vmatpush1.bf16.msra.mxu0 %v2736
    %2936 = vmatprep.subr.bf16.mxu0 0
    %2937 = vmatpush1.bf16.msra.mxu0 %v2737
    %2938 = vmatprep.subr.bf16.mxu0 0
    %2939 = vmatpush1.bf16.msra.mxu0 %v2738
    %2940 = vmatprep.subr.bf16.mxu0 0
    %2941 = vmatpush1.bf16.msra.mxu0 %v2739
    %2942 = vmatprep.subr.bf16.mxu0 0
    %2943 = vmatpush1.bf16.msra.mxu0 0
    %2944 = vmatprep.subr.bf16.mxu0 0
    %2945 = vmatpush1.bf16.msra.mxu0 0
    %2946 = vmatprep.subr.bf16.mxu0 0
    %2947 = vmatpush1.bf16.msra.mxu0 0
    %2948 = vmatprep.subr.bf16.mxu0 0
    %2949 = vmatpush1.bf16.msra.mxu0 0
    %2950 = vmatprep.subr.bf16.mxu0 0
    %2951 = vmatpush1.bf16.msra.mxu0 0
    %2952 = vmatprep.subr.bf16.mxu0 0
    %2953 = vmatpush1.bf16.msra.mxu0 0
    %2954 = vmatprep.subr.bf16.mxu0 0
    %2955 = vmatpush1.bf16.msra.mxu0 0
    %2956 = vmatprep.subr.bf16.mxu0 0
    %2957 = vmatpush1.bf16.msra.mxu0 0
    %2958 = vmatprep.subr.bf16.mxu0 0
    %2959 = vmatpush1.bf16.msra.mxu0 0
    %2960 = vmatprep.subr.bf16.mxu0 0
    %2961 = vmatpush1.bf16.msra.mxu0 0
    %2962 = vmatprep.subr.bf16.mxu0 0
    %2963 = vmatpush1.bf16.msra.mxu0 0
    %2964 = vmatprep.subr.bf16.mxu0 0
    %2965 = vmatpush1.bf16.msra.mxu0 0
    %2966 = vmatprep.mubr.bf16.mxu0 0
    %2967 = vmatmul.mubr.bf16.gmra.mrb[0].mxu0 %v2923
    %v2968 = vpop.f32.mrb[0].mxu0
    %v2969 = vadd.f32 %v2892, %v2968
    %v2970 = vpop.f32.mrb[0].mxu0
    %v2971 = vpop.f32.mrb[0].mxu0
    %v2972 = vadd.f32 %v2895, %v2971
    %v2973 = vpop.f32.mrb[0].mxu0
    %2974 = vmatprep.mubr.bf16.mxu0 0
    %2975 = vmatmul.mubr.bf16.gmra.mrb[0].mxu0 %v2926
    %v2976 = vpop.f32.mrb[0].mxu0
    %v2977 = vadd.f32 %v2900, %v2976
    %v2978 = vpop.f32.mrb[0].mxu0
    %v2979 = vpop.f32.mrb[0].mxu0
    %v2980 = vadd.f32 %v2903, %v2979
    %v2981 = vpop.f32.mrb[0].mxu0
    %2982 = vmatprep.mubr.bf16.mxu0 0
    %2983 = vmatmul.mubr.bf16.gmra.mrb[0].mxu0 %v2929
    %v2984 = vpop.f32.mrb[0].mxu0
    %v2985 = vadd.f32 %v2908, %v2984
    %v2986 = vpop.f32.mrb[0].mxu0
    %v2987 = vpop.f32.mrb[0].mxu0
    %v2988 = vadd.f32 %v2911, %v2987
    %v2989 = vpop.f32.mrb[0].mxu0
    %2990 = vmatprep.mubr.bf16.mxu0 0
    %2991 = vmatmul.mubr.bf16.gmra.mrb[0].mxu0 %v2932
    %v2992 = vpop.f32.mrb[0].mxu0
    %v2993 = vadd.f32 %v2916, %v2992
    %v2994 = vpop.f32.mrb[0].mxu0
    %v2995 = vpop.f32.mrb[0].mxu0
    %v2996 = vadd.f32 %v2919, %v2995
    %v2997 = vpop.f32.mrb[0].mxu0
    %2998 = vdwg.mxu0
    %v2999 = vmax.f32 %v2969, 0.0
    %v3000 = vmax.f32 %v2972, 0.0
    %v3001 = vmax.f32 %v2977, 0.0
    %v3002 = vmax.f32 %v2980, 0.0
    %v3003 = vmax.f32 %v2985, 0.0
    %v3004 = vmax.f32 %v2988, 0.0
    %v3005 = vmax.f32 %v2993, 0.0
    %v3006 = vmax.f32 %v2996, 0.0
    %v3007 = vmin.f32 %v2999, 4.0
    %v3008 = vmin.f32 %v3000, 4.0
    %v3009 = vmin.f32 %v3001, 4.0
    %v3010 = vmin.f32 %v3002, 4.0
    %v3011 = vmin.f32 %v3003, 4.0
    %v3012 = vmin.f32 %v3004, 4.0
    %v3013 = vmin.f32 %v3005, 4.0
    %v3014 = vmin.f32 %v3006, 4.0
    %v3015 = vadd.f32 %v3007, 0.5
    %v3016 = vadd.f32 %v3008, 0.5
    %v3017 = vadd.f32 %v3009, 0.5
    %v3018 = vadd.f32 %v3010, 0.5
    %v3019 = vadd.f32 %v3011, 0.5
    %v3020 = vadd.f32 %v3012, 0.5
    %v3021 = vadd.f32 %v3013, 0.5
    %v3022 = vadd.f32 %v3014, 0.5
    %v3023 = vfloor.f32 %v3015
    %v3024 = vfloor.f32 %v3016
    %v3025 = vfloor.f32 %v3017
    %v3026 = vfloor.f32 %v3018
    %v3027 = vfloor.f32 %v3019
    %v3028 = vfloor.f32 %v3020
    %v3029 = vfloor.f32 %v3021
    %v3030 = vfloor.f32 %v3022
    %v3031 = vmul.f32 %v3023, %v137
    %v3032 = vmul.f32 %v3024, %v137
    %v3033 = vmul.f32 %v3025, %v137
    %v3034 = vmul.f32 %v3026, %v137
    %v3035 = vmul.f32 %v3027, %v137
    %v3036 = vmul.f32 %v3028, %v137
    %v3037 = vmul.f32 %v3029, %v137
    %v3038 = vmul.f32 %v3030, %v137
    %v3039 = vpack.c.bf16 %v3032, %v3031
    %v3040 = vpack.c.bf16 %v3034, %v3033
    %v3041 = vpack.c.bf16 %v3036, %v3035
    %v3042 = vpack.c.bf16 %v3038, %v3037
    %3043 = vmatprep.subr.bf16.mxu0 0
    %3044 = vmatpush1.bf16.msra.mxu0 %v3039
    %3045 = vmatprep.subr.bf16.mxu0 0
    %3046 = vmatpush1.bf16.msra.mxu0 %v3040
    %3047 = vmatprep.subr.bf16.mxu0 0
    %3048 = vmatpush1.bf16.msra.mxu0 %v3041
    %3049 = vmatprep.subr.bf16.mxu0 0
    %3050 = vmatpush1.bf16.msra.mxu0 %v3042
    %3051 = vmatprep.subr.bf16.mxu0 0
    %3052 = vmatpush1.bf16.msra.mxu0 0
    %3053 = vmatprep.subr.bf16.mxu0 0
    %3054 = vmatpush1.bf16.msra.mxu0 0
    %3055 = vmatprep.subr.bf16.mxu0 0
    %3056 = vmatpush1.bf16.msra.mxu0 0
    %3057 = vmatprep.subr.bf16.mxu0 0
    %3058 = vmatpush1.bf16.msra.mxu0 0
    %3059 = vmatprep.subr.bf16.mxu0 0
    %3060 = vmatpush1.bf16.msra.mxu0 0
    %3061 = vmatprep.subr.bf16.mxu0 0
    %3062 = vmatpush1.bf16.msra.mxu0 0
    %3063 = vmatprep.subr.bf16.mxu0 0
    %3064 = vmatpush1.bf16.msra.mxu0 0
    %3065 = vmatprep.subr.bf16.mxu0 0
    %3066 = vmatpush1.bf16.msra.mxu0 0
    %3067 = vmatprep.subr.bf16.mxu0 0
    %3068 = vmatpush1.bf16.msra.mxu0 0
    %3069 = vmatprep.subr.bf16.mxu0 0
    %3070 = vmatpush1.bf16.msra.mxu0 0
    %3071 = vmatprep.subr.bf16.mxu0 0
    %3072 = vmatpush1.bf16.msra.mxu0 0
    %3073 = vmatprep.subr.bf16.mxu0 0
    %3074 = vmatpush1.bf16.msra.mxu0 0
    %3075 = vmatprep.mubr.bf16.mxu0 0
    %3076 = vmatmul.mubr.bf16.gmra.mrb[0].mxu0 %v984
    %v3077 = vpop.f32.mrb[0].mxu0
    %v3078 = vadd.f32 %v926, %v3077
    %v3079 = vpop.f32.mrb[0].mxu0
    %v3080 = vpop.f32.mrb[0].mxu0
    %v3081 = vadd.f32 %v931, %v3080
    %v3082 = vpop.f32.mrb[0].mxu0
    %3083 = vmatprep.mubr.bf16.mxu0 0
    %3084 = vmatmul.mubr.bf16.gmra.mrb[0].mxu0 %v987
    %v3085 = vpop.f32.mrb[0].mxu0
    %v3086 = vadd.f32 %v936, %v3085
    %v3087 = vpop.f32.mrb[0].mxu0
    %v3088 = vpop.f32.mrb[0].mxu0
    %v3089 = vadd.f32 %v941, %v3088
    %v3090 = vpop.f32.mrb[0].mxu0
    %3091 = vmatprep.mubr.bf16.mxu0 0
    %3092 = vmatmul.mubr.bf16.gmra.mrb[0].mxu0 %v990
    %v3093 = vpop.f32.mrb[0].mxu0
    %v3094 = vadd.f32 %v946, %v3093
    %v3095 = vpop.f32.mrb[0].mxu0
    %v3096 = vpop.f32.mrb[0].mxu0
    %v3097 = vadd.f32 %v951, %v3096
    %v3098 = vpop.f32.mrb[0].mxu0
    %3099 = vmatprep.mubr.bf16.mxu0 0
    %3100 = vmatmul.mubr.bf16.gmra.mrb[0].mxu0 %v993
    %v3101 = vpop.f32.mrb[0].mxu0
    %v3102 = vadd.f32 %v956, %v3101
    %v3103 = vpop.f32.mrb[0].mxu0
    %v3104 = vpop.f32.mrb[0].mxu0
    %v3105 = vadd.f32 %v961, %v3104
    %v3106 = vpop.f32.mrb[0].mxu0
    %3107 = vdwg.mxu0
    %s3108 = scalar_lea.vmem [#allocation2], 192
    %3109 = vst [vmem:[%s3108] sm:$0xff] %v3078
    %3110 = vst [vmem:[%s3108 + $0x8] sm:$0xff] %v3081
    %3111 = vst [vmem:[%s3108 + $0x10] sm:$0xff] %v3086
    %3112 = vst [vmem:[%s3108 + $0x18] sm:$0xff] %v3089
    %3113 = vst [vmem:[%s3108 + $0x20] sm:$0xff] %v3094
    %3114 = vst [vmem:[%s3108 + $0x28] sm:$0xff] %v3097
    %3115 = vst [vmem:[%s3108 + $0x30] sm:$0xff] %v3102
    %3116 = vst [vmem:[%s3108 + $0x38] sm:$0xff] %v3105
    // Predicated region
    $region26: #{tpu_custom_call.1} parent=1 // pred_check
      _
    $region27: #{tpu_custom_call.1} parent=1 // pred_check_branch
      %3118 = sbr.rel (0) target = $region29
    $region28: #{tpu_custom_call.1} parent=1 // pred_region
      %s3120 = ssub.s32 4096, 4096
      %3121 = vsyncadd [#allocation3], %s3120
      %s3122 = sshll.u32 [#allocation2], 4
      %s3123 = int_to_ptr.vmem [resolvable:$true] %s3122
      %3128 = dma.vmem_to_hbm [thread:$0]  %s3123, 4096, %s6, [#allocation3], 128, 128, 8
    $region29: #{tpu_custom_call.1} parent=1 // pred_fallthru
      _
    // Predicated region
    $region30: #{tpu_custom_call.1} parent=1 // pred_check
      _
    $region31: #{tpu_custom_call.1} parent=1 // pred_check_branch
      %3130 = sbr.rel (0) target = $region33
    $region32: #{tpu_custom_call.1} parent=1 // pred_region
      %3131 = dma.done [#allocation3], 4096
    $region33: #{tpu_custom_call.1} parent=1 // pred_fallthru
      _
    %3132 = vsyncpa [#allocation3], 1

</llo_original>
